<compile_context>
chip_gen: v5e
topology: v5e:2x2
jax: 0.10.0
libtpu: 0.0.40
codegen_flags: <defaults>
</compile_context>

<pallas_src>
import functools

import jax
import jax.numpy as jnp
from jax.experimental import pallas as pl
from jax.experimental.pallas import tpu as pltpu

# ---------------- model config (small, forward-consistent shapes) ----------------
BATCH = 2
SEQ = 8
HIDDEN = 128
NUM_HEADS = 4
HEAD_DIM = HIDDEN // NUM_HEADS
NUM_LAYERS = 2
INTERMEDIATE = 256
VOCAB = 64
MAX_POS = 16
NUM_LABELS = 8
OUT_PAD = 128                      # lane-dense padded logits width
LN_EPS = 1e-12
VMEM_LIMIT = 8 * 1024 * 1024       # honest limit (footprint ~2-3 MiB), << 64 MiB


def _layer_norm(x, gamma, beta):
    mu = jnp.mean(x, axis=-1, keepdims=True)
    var = jnp.mean((x - mu) ** 2, axis=-1, keepdims=True)
    return (x - mu) * jax.lax.rsqrt(var + LN_EPS) * gamma + beta


# --------------------------- shared in-kernel encoder body ---------------------------

def _encoder_body(emb_ref, bias_ref, eg_ref, eb_ref,
                  wqkv_ref, bqkv_ref, wo_ref, bo_ref, g1_ref, b1_ref,
                  wi_ref, bi_ref, wo2_ref, bo2_ref, g2_ref, b2_ref,
                  *, S, H, NH, DH, L):
    """Embedding LN + L transformer layers.  Returns (hidden_states[1], last)."""
    b = emb_ref.shape[0]
    x3 = _layer_norm(emb_ref[...], eg_ref[...], eb_ref[...])          # (b,S,H) f32

    # additive attention bias: hoisted / broadcast ONCE for all layers and heads
    bias_full = jnp.broadcast_to(
        jnp.concatenate([bias_ref[...]] * NH, axis=0), (NH * b, S, S))

    first = None
    for li in range(L):                                     # L=2, statically unrolled
        x2d = x3.reshape(b * S, H)

        # ---- self attention: all heads batched into one einsum pair ----
        qkv = jnp.dot(x2d.astype(jnp.bfloat16), wqkv_ref[li],
                      preferred_element_type=jnp.float32) + bqkv_ref[li]
        q3 = qkv[:, :H].reshape(b, S, H)                    # 1/sqrt(DH) folded in
        k3 = qkv[:, H:2 * H].reshape(b, S, H)
        v3 = qkv[:, 2 * H:].reshape(b, S, H)
        # fold heads into the leading (batch) axis of a single batched einsum
        qh = jnp.concatenate([q3[:, :, h * DH:(h + 1) * DH] for h in range(NH)],
                             axis=0).astype(jnp.bfloat16)   # (NH*b, S, DH)
        kh = jnp.concatenate([k3[:, :, h * DH:(h + 1) * DH] for h in range(NH)],
                             axis=0).astype(jnp.bfloat16)
        vh = jnp.concatenate([v3[:, :, h * DH:(h + 1) * DH] for h in range(NH)],
                             axis=0).astype(jnp.bfloat16)
        s = jnp.einsum('bqd,bkd->bqk', qh, kh,
                       preferred_element_type=jnp.float32) + bias_full
        s = s - jnp.max(s, axis=-1, keepdims=True)          # one softmax pass
        p = jnp.exp(s)
        p = p * pl.reciprocal(jnp.sum(p, axis=-1, keepdims=True), approx=True)
        ctxh = jnp.einsum('bqk,bkd->bqd', p.astype(jnp.bfloat16), vh,
                          preferred_element_type=jnp.float32)          # (NH*b,S,DH)
        # single lane-dense register concat (no VMEM ctx scratch / masked stores)
        ctx = jnp.concatenate([ctxh[h * b:(h + 1) * b] for h in range(NH)],
                              axis=-1).reshape(b * S, H)
        attn = jnp.dot(ctx.astype(jnp.bfloat16), wo_ref[li],
                       preferred_element_type=jnp.float32) + bo_ref[li]
        h1 = _layer_norm(x2d + attn, g1_ref[li], b1_ref[li])

        # ---- feed forward ----
        ff = jnp.dot(h1.astype(jnp.bfloat16), wi_ref[li],
                     preferred_element_type=jnp.float32) + bi_ref[li]
        # TODO(synk): HF BERT uses exact erf GELU; tanh approximation used here.
        ff = jax.nn.gelu(ff, approximate=True)
        ff = jnp.dot(ff.astype(jnp.bfloat16), wo2_ref[li],
                     preferred_element_type=jnp.float32) + bo2_ref[li]
        x3 = _layer_norm(h1 + ff, g2_ref[li], b2_ref[li]).reshape(b, S, H)
        if li == 0:
            first = x3                                      # hidden_states[1]
    return first, x3


def _pool(first, last, pw_ref, pb_ref, pooling):
    if pooling == 'cls':
        return last[:, 0, :]
    if pooling == 'pooler':
        cls_tok = last[:, 0, :].astype(jnp.bfloat16)
        return jnp.tanh(jnp.dot(cls_tok, pw_ref[...],
                                preferred_element_type=jnp.float32) + pb_ref[...])
    if pooling == 'last-avg':
        # matches torch.avg_pool1d over the full sequence (unmasked mean)
        return jnp.mean(last, axis=1)
    # 'first-last-avg'
    return 0.5 * (jnp.mean(first, axis=1) + jnp.mean(last, axis=1))


# --------------------------- kernels ---------------------------

def _cl_model_kernel(emb_ref, bias_ref, eg_ref, eb_ref,
                     wqkv_ref, bqkv_ref, wo_ref, bo_ref, g1_ref, b1_ref,
                     wi_ref, bi_ref, wo2_ref, bo2_ref, g2_ref, b2_ref,
                     pw_ref, pb_ref, pooled_ref,
                     *, S, H, NH, DH, L, pooling):
    first, last = _encoder_body(
        emb_ref, bias_ref, eg_ref, eb_ref,
        wqkv_ref, bqkv_ref, wo_ref, bo_ref, g1_ref, b1_ref,
        wi_ref, bi_ref, wo2_ref, bo2_ref, g2_ref, b2_ref,
        S=S, H=H, NH=NH, DH=DH, L=L)
    pooled_ref[...] = _pool(first, last, pw_ref, pb_ref, pooling)


def _cl_classify_kernel(emb_ref, bias_ref, eg_ref, eb_ref,
                        wqkv_ref, bqkv_ref, wo_ref, bo_ref, g1_ref, b1_ref,
                        wi_ref, bi_ref, wo2_ref, bo2_ref, g2_ref, b2_ref,
                        pw_ref, pb_ref, dw_ref, db_ref, ow_ref, ob_ref,
                        logits_ref,
                        *, S, H, NH, DH, L, pooling, pairs):
    # block rows: [source pairs..., target pairs...] for this grid step
    first, last = _encoder_body(
        emb_ref, bias_ref, eg_ref, eb_ref,
        wqkv_ref, bqkv_ref, wo_ref, bo_ref, g1_ref, b1_ref,
        wi_ref, bi_ref, wo2_ref, bo2_ref, g2_ref, b2_ref,
        S=S, H=H, NH=NH, DH=DH, L=L)
    pooled = _pool(first, last, pw_ref, pb_ref, pooling)     # (2*pairs, H)
    src = pooled[:pairs]
    tgt = pooled[pairs:]
    # TODO(synk): dropout omitted (inference/eval semantics -> identity).
    feats = jnp.concatenate([src, tgt, jnp.abs(src - tgt)], axis=-1)   # (pairs, 3H)
    hid = jnp.tanh(jnp.dot(feats.astype(jnp.bfloat16), dw_ref[...],
                           preferred_element_type=jnp.float32) + db_ref[...])
    logits = jnp.dot(hid.astype(jnp.bfloat16), ow_ref[...],
                     preferred_element_type=jnp.float32) + ob_ref[...]  # (pairs, OUT_PAD)
    logits_ref[...] = logits[:, None, :]


# --------------------------- pallas_call wrappers ---------------------------

def _encoder_args(params):
    st = params['layers']
    return (params['emb_ln_g'], params['emb_ln_b'],
            st['wqkv'], st['bqkv'], st['wo'], st['bo'], st['ln1_g'], st['ln1_b'],
            st['wi'], st['bi'], st['wo2'], st['bo2'], st['ln2_g'], st['ln2_b'],
            params['pooler_w'], params['pooler_b'])


def cl_model_forward(params, input_ids, attention_mask, pooling='cls'):
    """CLModel.forward: encoder + pooling. Returns (B, HIDDEN) pooled embeddings."""
    if pooling not in ('cls', 'pooler', 'last-avg', 'first-last-avg'):
        raise ValueError(f"unknown pooling: {pooling}")
    B2, S = input_ids.shape

    # embedding gather stays in plain JAX (glue); LN happens inside the kernel.
    emb = (params['word_emb'][input_ids]
           + params['pos_emb'][:S][None, :, :]).astype(jnp.float32)
    attn_bias = ((1.0 - attention_mask.astype(jnp.float32)) * (-1e9)
                 ).reshape(B2, 1, S)

    vmem = pl.BlockSpec(memory_space=pltpu.MemorySpace.VMEM)
    kernel = functools.partial(_cl_model_kernel, S=S, H=HIDDEN, NH=NUM_HEADS,
                               DH=HEAD_DIM, L=NUM_LAYERS, pooling=pooling)
    return pl.pallas_call(
        kernel,
        out_shape=jax.ShapeDtypeStruct((B2, HIDDEN), jnp.float32),
        in_specs=[vmem] * 18,
        out_specs=vmem,
        compiler_params=pltpu.CompilerParams(vmem_limit_bytes=VMEM_LIMIT),
    )(emb, attn_bias, *_encoder_args(params))


def cl_for_classification_forward(params, source, target, labels=None, pooling='cls'):
    """CLForClassification.forward -> (loss, logits)."""
    src_ids = jnp.squeeze(source['input_ids'], axis=1)
    src_mask = jnp.squeeze(source['attention_mask'], axis=1)
    tgt_ids = jnp.squeeze(target['input_ids'], axis=1)
    tgt_mask = jnp.squeeze(target['attention_mask'], axis=1)
    B, S = src_ids.shape
    H, I, L = HIDDEN, INTERMEDIATE, NUM_LAYERS

    # Split pairs over a small "parallel" grid axis: sharded across the 2 v7x
    # TensorCores; a short serial loop on single-TC v5e/v6e.
    nprog = 2 if B % 2 == 0 else 1
    pairs_per = B // nprog
    blk = 2 * pairs_per

    def block_order(s, t):
        # each grid block gets its source rows followed by its target rows
        s = s.reshape((nprog, pairs_per) + s.shape[1:])
        t = t.reshape((nprog, pairs_per) + t.shape[1:])
        return jnp.concatenate([s, t], axis=1).reshape((2 * B,) + s.shape[2:])

    ids = block_order(src_ids, tgt_ids)                                   # (2B, S)
    mask = block_order(src_mask, tgt_mask)
    emb = (params['word_emb'][ids] + params['pos_emb'][:S][None]).astype(jnp.float32)
    attn_bias = ((1.0 - mask.astype(jnp.float32)) * (-1e9)).reshape(2 * B, 1, S)

    def full(shape):   # whole-array (broadcast) block, fetched once
        zeros = (0,) * len(shape)
        return pl.BlockSpec(shape, lambda j, _z=zeros: _z)

    in_specs = [
        pl.BlockSpec((blk, S, H), lambda j: (j, 0, 0)),     # embeddings (batch-split)
        pl.BlockSpec((blk, 1, S), lambda j: (j, 0, 0)),     # additive attention bias
        full((1, H)), full((1, H)),                         # embedding LN gamma/beta
        full((L, H, 3 * H)), full((L, 1, 3 * H)),           # wqkv / bqkv (bf16 / f32)
        full((L, H, H)), full((L, 1, H)),                   # wo / bo
        full((L, 1, H)), full((L, 1, H)),                   # ln1 gamma/beta
        full((L, H, I)), full((L, 1, I)),                   # wi / bi
        full((L, I, H)), full((L, 1, H)),                   # wo2 / bo2
        full((L, 1, H)), full((L, 1, H)),                   # ln2 gamma/beta
        full((H, H)), full((1, H)),                         # pooler
        full((3 * H, 3 * H)), full((1, 3 * H)),             # cls dense
        full((3 * H, OUT_PAD)), full((1, OUT_PAD)),         # cls out (lane-padded)
    ]

    args = (emb, attn_bias, *_encoder_args(params),
            params['cls_dense_w'], params['cls_dense_b'],
            params['cls_out_w'], params['cls_out_b'])

    flops = int(L * (2 * 2 * B * S * H * (3 * H + H + 2 * I)
                     + 4 * 2 * B * NUM_HEADS * S * S * HEAD_DIM)
                + 2 * B * 3 * H * (3 * H + OUT_PAD))
    transcendentals = int(L * (2 * B * NUM_HEADS * S * S + 2 * B * S * I) + B * 3 * H)
    bytes_accessed = int(sum(int(a.size) * a.dtype.itemsize for a in args)
                         + B * OUT_PAD * 4)

    kernel = functools.partial(_cl_classify_kernel, S=S, H=H, NH=NUM_HEADS,
                               DH=HEAD_DIM, L=L, pooling=pooling, pairs=pairs_per)
    logits_pad = pl.pallas_call(
        kernel,
        out_shape=jax.ShapeDtypeStruct((B, 1, OUT_PAD), jnp.float32),
        grid_spec=pltpu.PrefetchScalarGridSpec(
            num_scalar_prefetch=0,
            grid=(nprog,),
            in_specs=in_specs,
            out_specs=pl.BlockSpec((pairs_per, 1, OUT_PAD), lambda j: (j, 0, 0))),
        compiler_params=pltpu.CompilerParams(
            dimension_semantics=("parallel",),
            vmem_limit_bytes=VMEM_LIMIT),
        cost_estimate=pl.CostEstimate(flops=flops,
                                      transcendentals=transcendentals,
                                      bytes_accessed=bytes_accessed),
    )(*args)

    logits = logits_pad[:, 0, :NUM_LABELS]                  # drop lane padding

    loss = None
    if labels is not None:                                  # CrossEntropyLoss (glue)
        logp = jax.nn.log_softmax(logits, axis=-1)
        loss = -jnp.mean(jnp.take_along_axis(logp, labels[:, None], axis=-1))
    return loss, logits


# --------------------------- parameter init & preparation ---------------------------

def init_params(key):
    def normal(k, shape):
        return jax.random.normal(k, shape, jnp.float32) * 0.02

    keys = jax.random.split(key, 5 + 4 * NUM_LAYERS)
    params = {
        'word_emb': normal(keys[0], (VOCAB, HIDDEN)),
        'pos_emb': normal(keys[1], (MAX_POS, HIDDEN)),
        'emb_ln_g': jnp.ones((1, HIDDEN), jnp.float32),
        'emb_ln_b': jnp.zeros((1, HIDDEN), jnp.float32),
        'pooler_w': normal(keys[2], (HIDDEN, HIDDEN)),
        'pooler_b': jnp.zeros((1, HIDDEN), jnp.float32),
        'cls_dense_w': normal(keys[3], (3 * HIDDEN, 3 * HIDDEN)),
        'cls_dense_b': jnp.zeros((1, 3 * HIDDEN), jnp.float32),
        'cls_out_w': normal(keys[4], (3 * HIDDEN, NUM_LABELS)),
        'cls_out_b': jnp.zeros((1, NUM_LABELS), jnp.float32),
        'layers': [],
    }
    for li in range(NUM_LAYERS):
        ks = keys[5 + 4 * li: 5 + 4 * (li + 1)]
        params['layers'].append({
            'wqkv': normal(ks[0], (HIDDEN, 3 * HIDDEN)),
            'bqkv': jnp.zeros((1, 3 * HIDDEN), jnp.float32),
            'wo': normal(ks[1], (HIDDEN, HIDDEN)),
            'bo': jnp.zeros((1, HIDDEN), jnp.float32),
            'ln1_g': jnp.ones((1, HIDDEN), jnp.float32),
            'ln1_b': jnp.zeros((1, HIDDEN), jnp.float32),
            'wi': normal(ks[2], (HIDDEN, INTERMEDIATE)),
            'bi': jnp.zeros((1, INTERMEDIATE), jnp.float32),
            'wo2': normal(ks[3], (INTERMEDIATE, HIDDEN)),
            'bo2': jnp.zeros((1, HIDDEN), jnp.float32),
            'ln2_g': jnp.ones((1, HIDDEN), jnp.float32),
            'ln2_b': jnp.zeros((1, HIDDEN), jnp.float32),
        })
    return params


def prepare_params(raw):
    """Stack per-layer weights on a leading L axis, fold the attention scale into
    the q-columns of wqkv, cast matmul weights to bf16 (once) and zero-pad the
    output projection to a lane-dense 128-wide slab."""
    def stack(name):
        return jnp.stack([lp[name] for lp in raw['layers']], axis=0)

    scale = 1.0 / (HEAD_DIM ** 0.5)
    wqkv = stack('wqkv').at[:, :, :HIDDEN].multiply(scale)
    bqkv = stack('bqkv').at[:, :, :HIDDEN].multiply(scale)
    layers = {
        'wqkv': wqkv.astype(jnp.bfloat16),
        'bqkv': bqkv,
        'wo': stack('wo').astype(jnp.bfloat16),
        'bo': stack('bo'),
        'ln1_g': stack('ln1_g'), 'ln1_b': stack('ln1_b'),
        'wi': stack('wi').astype(jnp.bfloat16),
        'bi': stack('bi'),
        'wo2': stack('wo2').astype(jnp.bfloat16),
        'bo2': stack('bo2'),
        'ln2_g': stack('ln2_g'), 'ln2_b': stack('ln2_b'),
    }
    out_w = jnp.zeros((3 * HIDDEN, OUT_PAD), jnp.float32
                      ).at[:, :NUM_LABELS].set(raw['cls_out_w'])
    out_b = jnp.zeros((1, OUT_PAD), jnp.float32
                      ).at[:, :NUM_LABELS].set(raw['cls_out_b'])
    return {
        'word_emb': raw['word_emb'],
        'pos_emb': raw['pos_emb'],
        'emb_ln_g': raw['emb_ln_g'], 'emb_ln_b': raw['emb_ln_b'],
        'pooler_w': raw['pooler_w'].astype(jnp.bfloat16),
        'pooler_b': raw['pooler_b'],
        'cls_dense_w': raw['cls_dense_w'].astype(jnp.bfloat16),
        'cls_dense_b': raw['cls_dense_b'],
        'cls_out_w': out_w.astype(jnp.bfloat16),
        'cls_out_b': out_b,
        'layers': layers,
    }


# --------------------------- demo / smoke test ---------------------------

if __name__ == "__main__":
    key = jax.random.PRNGKey(0)
    pkey, skey, tkey, lkey = jax.random.split(key, 4)
    params = prepare_params(init_params(pkey))

    B, S = BATCH, SEQ
    source = {
        'input_ids': jax.random.randint(skey, (B, 1, S), 0, VOCAB),
        'attention_mask': jnp.ones((B, 1, S), jnp.float32).at[1, 0, 6:].set(0.0),
    }
    target = {
        'input_ids': jax.random.randint(tkey, (B, 1, S), 0, VOCAB),
        'attention_mask': jnp.ones((B, 1, S), jnp.float32).at[0, 0, 5:].set(0.0),
    }
    labels = jax.random.randint(lkey, (B,), 0, NUM_LABELS)

    fwd = jax.jit(cl_for_classification_forward, static_argnames=('pooling',))
    loss, logits = fwd(params, source, target, labels, pooling='cls')
    jax.block_until_ready(logits)
    assert logits.shape == (B, NUM_LABELS)
    assert bool(jnp.all(jnp.isfinite(logits)))
    assert bool(jnp.isfinite(loss))

    # exercise the remaining pooling modes of the underlying CLModel
    ids = jnp.squeeze(source['input_ids'], axis=1)
    mask = jnp.squeeze(source['attention_mask'], axis=1)
    for pooling in ('pooler', 'last-avg', 'first-last-avg'):
        out = cl_model_forward(params, ids, mask, pooling)
        jax.block_until_ready(out)
        assert out.shape == (B, HIDDEN)
        assert bool(jnp.all(jnp.isfinite(out)))

    print("KERNEL_OK")
</pallas_src>

<mosaic_0001>
module attributes {stable_mosaic.version = 11 : i64} {
  func.func @_cl_classify_kernel(%arg0: i32, %arg1: memref<2x8x128xf32, #tpu.memory_space<vmem>>, %arg2: memref<2x1x8xf32, #tpu.memory_space<vmem>>, %arg3: memref<1x128xf32, #tpu.memory_space<vmem>>, %arg4: memref<1x128xf32, #tpu.memory_space<vmem>>, %arg5: memref<2x128x384xbf16, #tpu.memory_space<vmem>>, %arg6: memref<2x1x384xf32, #tpu.memory_space<vmem>>, %arg7: memref<2x128x128xbf16, #tpu.memory_space<vmem>>, %arg8: memref<2x1x128xf32, #tpu.memory_space<vmem>>, %arg9: memref<2x1x128xf32, #tpu.memory_space<vmem>>, %arg10: memref<2x1x128xf32, #tpu.memory_space<vmem>>, %arg11: memref<2x128x256xbf16, #tpu.memory_space<vmem>>, %arg12: memref<2x1x256xf32, #tpu.memory_space<vmem>>, %arg13: memref<2x256x128xbf16, #tpu.memory_space<vmem>>, %arg14: memref<2x1x128xf32, #tpu.memory_space<vmem>>, %arg15: memref<2x1x128xf32, #tpu.memory_space<vmem>>, %arg16: memref<2x1x128xf32, #tpu.memory_space<vmem>>, %arg17: memref<128x128xbf16, #tpu.memory_space<vmem>>, %arg18: memref<1x128xf32, #tpu.memory_space<vmem>>, %arg19: memref<384x384xbf16, #tpu.memory_space<vmem>>, %arg20: memref<1x384xf32, #tpu.memory_space<vmem>>, %arg21: memref<384x128xbf16, #tpu.memory_space<vmem>>, %arg22: memref<1x128xf32, #tpu.memory_space<vmem>>, %arg23: memref<1x1x128xf32, #tpu.memory_space<vmem>>) attributes {dimension_semantics = [#tpu.dimension_semantics<parallel>], iteration_bounds = array<i64: 2>, scalar_prefetch = 0 : i64, scratch_operands = 0 : i64, tpu.core_type = #tpu.core_type<tc>, window_params = [{transform_indices = @transform_0, window_bounds = array<i64: 2, 8, 128>}, {transform_indices = @transform_1, window_bounds = array<i64: 2, 1, 8>}, {pipeline_mode = #tpu.pipeline_mode<synchronous>, transform_indices = @transform_2, window_bounds = array<i64: 1, 128>}, {pipeline_mode = #tpu.pipeline_mode<synchronous>, transform_indices = @transform_3, window_bounds = array<i64: 1, 128>}, {pipeline_mode = #tpu.pipeline_mode<synchronous>, transform_indices = @transform_4, window_bounds = array<i64: 2, 128, 384>}, {pipeline_mode = #tpu.pipeline_mode<synchronous>, transform_indices = @transform_5, window_bounds = array<i64: 2, 1, 384>}, {pipeline_mode = #tpu.pipeline_mode<synchronous>, transform_indices = @transform_6, window_bounds = array<i64: 2, 128, 128>}, {pipeline_mode = #tpu.pipeline_mode<synchronous>, transform_indices = @transform_7, window_bounds = array<i64: 2, 1, 128>}, {pipeline_mode = #tpu.pipeline_mode<synchronous>, transform_indices = @transform_8, window_bounds = array<i64: 2, 1, 128>}, {pipeline_mode = #tpu.pipeline_mode<synchronous>, transform_indices = @transform_9, window_bounds = array<i64: 2, 1, 128>}, {pipeline_mode = #tpu.pipeline_mode<synchronous>, transform_indices = @transform_10, window_bounds = array<i64: 2, 128, 256>}, {pipeline_mode = #tpu.pipeline_mode<synchronous>, transform_indices = @transform_11, window_bounds = array<i64: 2, 1, 256>}, {pipeline_mode = #tpu.pipeline_mode<synchronous>, transform_indices = @transform_12, window_bounds = array<i64: 2, 256, 128>}, {pipeline_mode = #tpu.pipeline_mode<synchronous>, transform_indices = @transform_13, window_bounds = array<i64: 2, 1, 128>}, {pipeline_mode = #tpu.pipeline_mode<synchronous>, transform_indices = @transform_14, window_bounds = array<i64: 2, 1, 128>}, {pipeline_mode = #tpu.pipeline_mode<synchronous>, transform_indices = @transform_15, window_bounds = array<i64: 2, 1, 128>}, {pipeline_mode = #tpu.pipeline_mode<synchronous>, transform_indices = @transform_16, window_bounds = array<i64: 128, 128>}, {pipeline_mode = #tpu.pipeline_mode<synchronous>, transform_indices = @transform_17, window_bounds = array<i64: 1, 128>}, {pipeline_mode = #tpu.pipeline_mode<synchronous>, transform_indices = @transform_18, window_bounds = array<i64: 384, 384>}, {pipeline_mode = #tpu.pipeline_mode<synchronous>, transform_indices = @transform_19, window_bounds = array<i64: 1, 384>}, {pipeline_mode = #tpu.pipeline_mode<synchronous>, transform_indices = @transform_20, window_bounds = array<i64: 384, 128>}, {pipeline_mode = #tpu.pipeline_mode<synchronous>, transform_indices = @transform_21, window_bounds = array<i64: 1, 128>}, {transform_indices = @transform_22, window_bounds = array<i64: 1, 1, 128>}]} {
    %c0 = arith.constant 0 : index
    %c0_0 = arith.constant 0 : index
    %c0_1 = arith.constant 0 : index
    %0 = vector.load %arg1[%c0, %c0_0, %c0_1] : memref<2x8x128xf32, #tpu.memory_space<vmem>>, vector<2x8x128xf32>
    %c0_2 = arith.constant 0 : index
    %c0_3 = arith.constant 0 : index
    %1 = vector.load %arg3[%c0_2, %c0_3] : memref<1x128xf32, #tpu.memory_space<vmem>>, vector<1x128xf32>
    %c0_4 = arith.constant 0 : index
    %c0_5 = arith.constant 0 : index
    %2 = vector.load %arg4[%c0_4, %c0_5] : memref<1x128xf32, #tpu.memory_space<vmem>>, vector<1x128xf32>
    %cst = arith.constant dense<0.000000e+00> : vector<2x8xf32>
    %3 = vector.multi_reduction <add>, %0, %cst [2] : vector<2x8x128xf32> to vector<2x8xf32>
    %4 = vector.shape_cast %3 : vector<2x8xf32> to vector<2x8x1xf32>
    %cst_6 = arith.constant 1.280000e+02 : f32
    %5 = vector.broadcast %cst_6 : f32 to vector<2x8x1xf32>
    %6 = arith.divf %4, %5 : vector<2x8x1xf32>
    %7 = vector.broadcast %6 : vector<2x8x1xf32> to vector<2x8x128xf32>
    %8 = arith.subf %0, %7 : vector<2x8x128xf32>
    %9 = arith.mulf %8, %8 : vector<2x8x128xf32>
    %cst_7 = arith.constant dense<0.000000e+00> : vector<2x8xf32>
    %10 = vector.multi_reduction <add>, %9, %cst_7 [2] : vector<2x8x128xf32> to vector<2x8xf32>
    %11 = vector.shape_cast %10 : vector<2x8xf32> to vector<2x8x1xf32>
    %cst_8 = arith.constant 1.280000e+02 : f32
    %12 = vector.broadcast %cst_8 : f32 to vector<2x8x1xf32>
    %13 = arith.divf %11, %12 : vector<2x8x1xf32>
    %14 = vector.broadcast %6 : vector<2x8x1xf32> to vector<2x8x128xf32>
    %15 = arith.subf %0, %14 : vector<2x8x128xf32>
    %cst_9 = arith.constant 9.99999996E-13 : f32
    %16 = vector.broadcast %cst_9 : f32 to vector<2x8x1xf32>
    %17 = arith.addf %13, %16 : vector<2x8x1xf32>
    %18 = math.rsqrt %17 : vector<2x8x1xf32>
    %19 = vector.broadcast %18 : vector<2x8x1xf32> to vector<2x8x128xf32>
    %20 = arith.mulf %15, %19 : vector<2x8x128xf32>
    %21 = vector.shape_cast %1 : vector<1x128xf32> to vector<1x1x128xf32>
    %22 = vector.broadcast %21 : vector<1x1x128xf32> to vector<2x8x128xf32>
    %23 = arith.mulf %20, %22 : vector<2x8x128xf32>
    %24 = vector.shape_cast %2 : vector<1x128xf32> to vector<1x1x128xf32>
    %25 = vector.broadcast %24 : vector<1x1x128xf32> to vector<2x8x128xf32>
    %26 = arith.addf %23, %25 : vector<2x8x128xf32>
    %c0_10 = arith.constant 0 : index
    %c0_11 = arith.constant 0 : index
    %c0_12 = arith.constant 0 : index
    %27 = vector.load %arg2[%c0_10, %c0_11, %c0_12] : memref<2x1x8xf32, #tpu.memory_space<vmem>>, vector<2x1x8xf32>
    %28 = tpu.concatenate %27, %27, %27, %27 in 0 : vector<2x1x8xf32>, vector<2x1x8xf32>, vector<2x1x8xf32>, vector<2x1x8xf32> -> vector<8x1x8xf32>
    %29 = vector.shape_cast %28 : vector<8x1x8xf32> to vector<8x1x8xf32>
    %30 = vector.broadcast %29 : vector<8x1x8xf32> to vector<8x8x8xf32>
    %31 = vector.shape_cast %26 : vector<2x8x128xf32> to vector<16x128xf32>
    %32 = arith.truncf %31 : vector<16x128xf32> to vector<16x128xbf16>
    %c0_13 = arith.constant 0 : index
    %c0_14 = arith.constant 0 : index
    %c0_15 = arith.constant 0 : index
    %33 = vector.load %arg5[%c0_13, %c0_14, %c0_15] : memref<2x128x384xbf16, #tpu.memory_space<vmem>>, vector<1x128x384xbf16>
    %34 = vector.shape_cast %33 : vector<1x128x384xbf16> to vector<128x384xbf16>
    %cst_16 = arith.constant dense<0.000000e+00> : vector<16x384xf32>
    %35 = tpu.matmul %32, %34, %cst_16 {dimension_numbers = #tpu.dot_dimension_numbers<[1], [0], [0], [1], [0, 0, 1, 1], [], []>} : vector<16x128xbf16>, vector<128x384xbf16>, vector<16x384xf32> -> vector<16x384xf32>
    %c0_17 = arith.constant 0 : index
    %c0_18 = arith.constant 0 : index
    %c0_19 = arith.constant 0 : index
    %36 = vector.load %arg6[%c0_17, %c0_18, %c0_19] : memref<2x1x384xf32, #tpu.memory_space<vmem>>, vector<1x1x384xf32>
    %37 = vector.shape_cast %36 : vector<1x1x384xf32> to vector<1x384xf32>
    %38 = vector.broadcast %37 : vector<1x384xf32> to vector<16x384xf32>
    %39 = arith.addf %35, %38 : vector<16x384xf32>
    %40 = vector.extract_strided_slice %39 {offsets = [0, 0], sizes = [16, 128], strides = [1, 1]} : vector<16x384xf32> to vector<16x128xf32>
    %41 = vector.shape_cast %40 : vector<16x128xf32> to vector<2x8x128xf32>
    %42 = vector.extract_strided_slice %39 {offsets = [0, 128], sizes = [16, 128], strides = [1, 1]} : vector<16x384xf32> to vector<16x128xf32>
    %43 = vector.shape_cast %42 : vector<16x128xf32> to vector<2x8x128xf32>
    %44 = vector.extract_strided_slice %39 {offsets = [0, 256], sizes = [16, 128], strides = [1, 1]} : vector<16x384xf32> to vector<16x128xf32>
    %45 = vector.shape_cast %44 : vector<16x128xf32> to vector<2x8x128xf32>
    %46 = vector.extract_strided_slice %41 {offsets = [0, 0, 0], sizes = [2, 8, 32], strides = [1, 1, 1]} : vector<2x8x128xf32> to vector<2x8x32xf32>
    %47 = vector.extract_strided_slice %41 {offsets = [0, 0, 32], sizes = [2, 8, 32], strides = [1, 1, 1]} : vector<2x8x128xf32> to vector<2x8x32xf32>
    %48 = vector.extract_strided_slice %41 {offsets = [0, 0, 64], sizes = [2, 8, 32], strides = [1, 1, 1]} : vector<2x8x128xf32> to vector<2x8x32xf32>
    %49 = vector.extract_strided_slice %41 {offsets = [0, 0, 96], sizes = [2, 8, 32], strides = [1, 1, 1]} : vector<2x8x128xf32> to vector<2x8x32xf32>
    %50 = tpu.concatenate %46, %47, %48, %49 in 0 : vector<2x8x32xf32>, vector<2x8x32xf32>, vector<2x8x32xf32>, vector<2x8x32xf32> -> vector<8x8x32xf32>
    %51 = arith.truncf %50 : vector<8x8x32xf32> to vector<8x8x32xbf16>
    %52 = vector.extract_strided_slice %43 {offsets = [0, 0, 0], sizes = [2, 8, 32], strides = [1, 1, 1]} : vector<2x8x128xf32> to vector<2x8x32xf32>
    %53 = vector.extract_strided_slice %43 {offsets = [0, 0, 32], sizes = [2, 8, 32], strides = [1, 1, 1]} : vector<2x8x128xf32> to vector<2x8x32xf32>
    %54 = vector.extract_strided_slice %43 {offsets = [0, 0, 64], sizes = [2, 8, 32], strides = [1, 1, 1]} : vector<2x8x128xf32> to vector<2x8x32xf32>
    %55 = vector.extract_strided_slice %43 {offsets = [0, 0, 96], sizes = [2, 8, 32], strides = [1, 1, 1]} : vector<2x8x128xf32> to vector<2x8x32xf32>
    %56 = tpu.concatenate %52, %53, %54, %55 in 0 : vector<2x8x32xf32>, vector<2x8x32xf32>, vector<2x8x32xf32>, vector<2x8x32xf32> -> vector<8x8x32xf32>
    %57 = arith.truncf %56 : vector<8x8x32xf32> to vector<8x8x32xbf16>
    %58 = vector.extract_strided_slice %45 {offsets = [0, 0, 0], sizes = [2, 8, 32], strides = [1, 1, 1]} : vector<2x8x128xf32> to vector<2x8x32xf32>
    %59 = vector.extract_strided_slice %45 {offsets = [0, 0, 32], sizes = [2, 8, 32], strides = [1, 1, 1]} : vector<2x8x128xf32> to vector<2x8x32xf32>
    %60 = vector.extract_strided_slice %45 {offsets = [0, 0, 64], sizes = [2, 8, 32], strides = [1, 1, 1]} : vector<2x8x128xf32> to vector<2x8x32xf32>
    %61 = vector.extract_strided_slice %45 {offsets = [0, 0, 96], sizes = [2, 8, 32], strides = [1, 1, 1]} : vector<2x8x128xf32> to vector<2x8x32xf32>
    %62 = tpu.concatenate %58, %59, %60, %61 in 0 : vector<2x8x32xf32>, vector<2x8x32xf32>, vector<2x8x32xf32>, vector<2x8x32xf32> -> vector<8x8x32xf32>
    %63 = arith.truncf %62 : vector<8x8x32xf32> to vector<8x8x32xbf16>
    "tpu.trace_start"() <{level = 10 : i32, message = "bqd,bkd->bqk"}> : () -> ()
    %cst_20 = arith.constant dense<0.000000e+00> : vector<8x8x8xf32>
    %64 = tpu.matmul %51, %57, %cst_20 {dimension_numbers = #tpu.dot_dimension_numbers<[2], [2], [1], [1], [0, 0, 0, 1, 1, 1], [0], [0]>} : vector<8x8x32xbf16>, vector<8x8x32xbf16>, vector<8x8x8xf32> -> vector<8x8x8xf32>
    "tpu.trace_stop"() : () -> ()
    %65 = arith.addf %64, %30 : vector<8x8x8xf32>
    %cst_21 = arith.constant dense<0xFF800000> : vector<8x8xf32>
    %66 = vector.multi_reduction <maximumf>, %65, %cst_21 [2] : vector<8x8x8xf32> to vector<8x8xf32>
    %67 = vector.shape_cast %66 : vector<8x8xf32> to vector<8x8x1xf32>
    %68 = vector.broadcast %67 : vector<8x8x1xf32> to vector<8x8x8xf32>
    %69 = arith.subf %65, %68 : vector<8x8x8xf32>
    %70 = math.exp %69 : vector<8x8x8xf32>
    %cst_22 = arith.constant dense<0.000000e+00> : vector<8x8xf32>
    %71 = vector.multi_reduction <add>, %70, %cst_22 [2] : vector<8x8x8xf32> to vector<8x8xf32>
    %72 = vector.shape_cast %71 : vector<8x8xf32> to vector<8x8x1xf32>
    %73 = tpu.reciprocal %72 {approx = true} : vector<8x8x1xf32> -> vector<8x8x1xf32>
    %74 = vector.broadcast %73 : vector<8x8x1xf32> to vector<8x8x8xf32>
    %75 = arith.mulf %70, %74 : vector<8x8x8xf32>
    %76 = arith.truncf %75 : vector<8x8x8xf32> to vector<8x8x8xbf16>
    "tpu.trace_start"() <{level = 10 : i32, message = "bqk,bkd->bqd"}> : () -> ()
    %cst_23 = arith.constant dense<0.000000e+00> : vector<8x8x32xf32>
    %77 = tpu.matmul %76, %63, %cst_23 {dimension_numbers = #tpu.dot_dimension_numbers<[2], [1], [1], [2], [0, 0, 0, 1, 1, 2], [0], [0]>} : vector<8x8x8xbf16>, vector<8x8x32xbf16>, vector<8x8x32xf32> -> vector<8x8x32xf32>
    "tpu.trace_stop"() : () -> ()
    %78 = vector.extract_strided_slice %77 {offsets = [0, 0, 0], sizes = [2, 8, 32], strides = [1, 1, 1]} : vector<8x8x32xf32> to vector<2x8x32xf32>
    %79 = vector.extract_strided_slice %77 {offsets = [2, 0, 0], sizes = [2, 8, 32], strides = [1, 1, 1]} : vector<8x8x32xf32> to vector<2x8x32xf32>
    %80 = vector.extract_strided_slice %77 {offsets = [4, 0, 0], sizes = [2, 8, 32], strides = [1, 1, 1]} : vector<8x8x32xf32> to vector<2x8x32xf32>
    %81 = vector.extract_strided_slice %77 {offsets = [6, 0, 0], sizes = [2, 8, 32], strides = [1, 1, 1]} : vector<8x8x32xf32> to vector<2x8x32xf32>
    %82 = tpu.concatenate %78, %79, %80, %81 in 2 : vector<2x8x32xf32>, vector<2x8x32xf32>, vector<2x8x32xf32>, vector<2x8x32xf32> -> vector<2x8x128xf32>
    %83 = vector.shape_cast %82 : vector<2x8x128xf32> to vector<16x128xf32>
    %84 = arith.truncf %83 : vector<16x128xf32> to vector<16x128xbf16>
    %c0_24 = arith.constant 0 : index
    %c0_25 = arith.constant 0 : index
    %c0_26 = arith.constant 0 : index
    %85 = vector.load %arg7[%c0_24, %c0_25, %c0_26] : memref<2x128x128xbf16, #tpu.memory_space<vmem>>, vector<1x128x128xbf16>
    %86 = vector.shape_cast %85 : vector<1x128x128xbf16> to vector<128x128xbf16>
    %cst_27 = arith.constant dense<0.000000e+00> : vector<16x128xf32>
    %87 = tpu.matmul %84, %86, %cst_27 {dimension_numbers = #tpu.dot_dimension_numbers<[1], [0], [0], [1], [0, 0, 1, 1], [], []>} : vector<16x128xbf16>, vector<128x128xbf16>, vector<16x128xf32> -> vector<16x128xf32>
    %c0_28 = arith.constant 0 : index
    %c0_29 = arith.constant 0 : index
    %c0_30 = arith.constant 0 : index
    %88 = vector.load %arg8[%c0_28, %c0_29, %c0_30] : memref<2x1x128xf32, #tpu.memory_space<vmem>>, vector<1x1x128xf32>
    %89 = vector.shape_cast %88 : vector<1x1x128xf32> to vector<1x128xf32>
    %90 = vector.broadcast %89 : vector<1x128xf32> to vector<16x128xf32>
    %91 = arith.addf %87, %90 : vector<16x128xf32>
    %92 = arith.addf %31, %91 : vector<16x128xf32>
    %c0_31 = arith.constant 0 : index
    %c0_32 = arith.constant 0 : index
    %c0_33 = arith.constant 0 : index
    %93 = vector.load %arg9[%c0_31, %c0_32, %c0_33] : memref<2x1x128xf32, #tpu.memory_space<vmem>>, vector<1x1x128xf32>
    %94 = vector.shape_cast %93 : vector<1x1x128xf32> to vector<1x128xf32>
    %c0_34 = arith.constant 0 : index
    %c0_35 = arith.constant 0 : index
    %c0_36 = arith.constant 0 : index
    %95 = vector.load %arg10[%c0_34, %c0_35, %c0_36] : memref<2x1x128xf32, #tpu.memory_space<vmem>>, vector<1x1x128xf32>
    %96 = vector.shape_cast %95 : vector<1x1x128xf32> to vector<1x128xf32>
    %cst_37 = arith.constant dense<0.000000e+00> : vector<16xf32>
    %97 = vector.multi_reduction <add>, %92, %cst_37 [1] : vector<16x128xf32> to vector<16xf32>
    %98 = vector.shape_cast %97 : vector<16xf32> to vector<16x1xf32>
    %cst_38 = arith.constant 1.280000e+02 : f32
    %99 = vector.broadcast %cst_38 : f32 to vector<16x1xf32>
    %100 = arith.divf %98, %99 : vector<16x1xf32>
    %101 = vector.broadcast %100 : vector<16x1xf32> to vector<16x128xf32>
    %102 = arith.subf %92, %101 : vector<16x128xf32>
    %103 = arith.mulf %102, %102 : vector<16x128xf32>
    %cst_39 = arith.constant dense<0.000000e+00> : vector<16xf32>
    %104 = vector.multi_reduction <add>, %103, %cst_39 [1] : vector<16x128xf32> to vector<16xf32>
    %105 = vector.shape_cast %104 : vector<16xf32> to vector<16x1xf32>
    %cst_40 = arith.constant 1.280000e+02 : f32
    %106 = vector.broadcast %cst_40 : f32 to vector<16x1xf32>
    %107 = arith.divf %105, %106 : vector<16x1xf32>
    %108 = vector.broadcast %100 : vector<16x1xf32> to vector<16x128xf32>
    %109 = arith.subf %92, %108 : vector<16x128xf32>
    %cst_41 = arith.constant 9.99999996E-13 : f32
    %110 = vector.broadcast %cst_41 : f32 to vector<16x1xf32>
    %111 = arith.addf %107, %110 : vector<16x1xf32>
    %112 = math.rsqrt %111 : vector<16x1xf32>
    %113 = vector.broadcast %112 : vector<16x1xf32> to vector<16x128xf32>
    %114 = arith.mulf %109, %113 : vector<16x128xf32>
    %115 = vector.broadcast %94 : vector<1x128xf32> to vector<16x128xf32>
    %116 = arith.mulf %114, %115 : vector<16x128xf32>
    %117 = vector.broadcast %96 : vector<1x128xf32> to vector<16x128xf32>
    %118 = arith.addf %116, %117 : vector<16x128xf32>
    %119 = arith.truncf %118 : vector<16x128xf32> to vector<16x128xbf16>
    %c0_42 = arith.constant 0 : index
    %c0_43 = arith.constant 0 : index
    %c0_44 = arith.constant 0 : index
    %120 = vector.load %arg11[%c0_42, %c0_43, %c0_44] : memref<2x128x256xbf16, #tpu.memory_space<vmem>>, vector<1x128x256xbf16>
    %121 = vector.shape_cast %120 : vector<1x128x256xbf16> to vector<128x256xbf16>
    %cst_45 = arith.constant dense<0.000000e+00> : vector<16x256xf32>
    %122 = tpu.matmul %119, %121, %cst_45 {dimension_numbers = #tpu.dot_dimension_numbers<[1], [0], [0], [1], [0, 0, 1, 1], [], []>} : vector<16x128xbf16>, vector<128x256xbf16>, vector<16x256xf32> -> vector<16x256xf32>
    %c0_46 = arith.constant 0 : index
    %c0_47 = arith.constant 0 : index
    %c0_48 = arith.constant 0 : index
    %123 = vector.load %arg12[%c0_46, %c0_47, %c0_48] : memref<2x1x256xf32, #tpu.memory_space<vmem>>, vector<1x1x256xf32>
    %124 = vector.shape_cast %123 : vector<1x1x256xf32> to vector<1x256xf32>
    %125 = vector.broadcast %124 : vector<1x256xf32> to vector<16x256xf32>
    %126 = arith.addf %122, %125 : vector<16x256xf32>
    %127 = arith.mulf %126, %126 : vector<16x256xf32>
    %128 = arith.mulf %126, %127 : vector<16x256xf32>
    %cst_49 = arith.constant 4.471500e-02 : f32
    %129 = vector.broadcast %cst_49 : f32 to vector<16x256xf32>
    %130 = arith.mulf %129, %128 : vector<16x256xf32>
    %131 = arith.addf %126, %130 : vector<16x256xf32>
    %cst_50 = arith.constant 0.797884583 : f32
    %132 = vector.broadcast %cst_50 : f32 to vector<16x256xf32>
    %133 = arith.mulf %132, %131 : vector<16x256xf32>
    %134 = math.tanh %133 : vector<16x256xf32>
    %cst_51 = arith.constant 1.000000e+00 : f32
    %135 = vector.broadcast %cst_51 : f32 to vector<16x256xf32>
    %136 = arith.addf %135, %134 : vector<16x256xf32>
    %cst_52 = arith.constant 5.000000e-01 : f32
    %137 = vector.broadcast %cst_52 : f32 to vector<16x256xf32>
    %138 = arith.mulf %137, %136 : vector<16x256xf32>
    %139 = arith.mulf %126, %138 : vector<16x256xf32>
    %140 = arith.truncf %139 : vector<16x256xf32> to vector<16x256xbf16>
    %c0_53 = arith.constant 0 : index
    %c0_54 = arith.constant 0 : index
    %c0_55 = arith.constant 0 : index
    %141 = vector.load %arg13[%c0_53, %c0_54, %c0_55] : memref<2x256x128xbf16, #tpu.memory_space<vmem>>, vector<1x256x128xbf16>
    %142 = vector.shape_cast %141 : vector<1x256x128xbf16> to vector<256x128xbf16>
    %cst_56 = arith.constant dense<0.000000e+00> : vector<16x128xf32>
    %143 = tpu.matmul %140, %142, %cst_56 {dimension_numbers = #tpu.dot_dimension_numbers<[1], [0], [0], [1], [0, 0, 1, 1], [], []>} : vector<16x256xbf16>, vector<256x128xbf16>, vector<16x128xf32> -> vector<16x128xf32>
    %c0_57 = arith.constant 0 : index
    %c0_58 = arith.constant 0 : index
    %c0_59 = arith.constant 0 : index
    %144 = vector.load %arg14[%c0_57, %c0_58, %c0_59] : memref<2x1x128xf32, #tpu.memory_space<vmem>>, vector<1x1x128xf32>
    %145 = vector.shape_cast %144 : vector<1x1x128xf32> to vector<1x128xf32>
    %146 = vector.broadcast %145 : vector<1x128xf32> to vector<16x128xf32>
    %147 = arith.addf %143, %146 : vector<16x128xf32>
    %148 = arith.addf %118, %147 : vector<16x128xf32>
    %c0_60 = arith.constant 0 : index
    %c0_61 = arith.constant 0 : index
    %c0_62 = arith.constant 0 : index
    %149 = vector.load %arg15[%c0_60, %c0_61, %c0_62] : memref<2x1x128xf32, #tpu.memory_space<vmem>>, vector<1x1x128xf32>
    %150 = vector.shape_cast %149 : vector<1x1x128xf32> to vector<1x128xf32>
    %c0_63 = arith.constant 0 : index
    %c0_64 = arith.constant 0 : index
    %c0_65 = arith.constant 0 : index
    %151 = vector.load %arg16[%c0_63, %c0_64, %c0_65] : memref<2x1x128xf32, #tpu.memory_space<vmem>>, vector<1x1x128xf32>
    %152 = vector.shape_cast %151 : vector<1x1x128xf32> to vector<1x128xf32>
    %cst_66 = arith.constant dense<0.000000e+00> : vector<16xf32>
    %153 = vector.multi_reduction <add>, %148, %cst_66 [1] : vector<16x128xf32> to vector<16xf32>
    %154 = vector.shape_cast %153 : vector<16xf32> to vector<16x1xf32>
    %cst_67 = arith.constant 1.280000e+02 : f32
    %155 = vector.broadcast %cst_67 : f32 to vector<16x1xf32>
    %156 = arith.divf %154, %155 : vector<16x1xf32>
    %157 = vector.broadcast %156 : vector<16x1xf32> to vector<16x128xf32>
    %158 = arith.subf %148, %157 : vector<16x128xf32>
    %159 = arith.mulf %158, %158 : vector<16x128xf32>
    %cst_68 = arith.constant dense<0.000000e+00> : vector<16xf32>
    %160 = vector.multi_reduction <add>, %159, %cst_68 [1] : vector<16x128xf32> to vector<16xf32>
    %161 = vector.shape_cast %160 : vector<16xf32> to vector<16x1xf32>
    %cst_69 = arith.constant 1.280000e+02 : f32
    %162 = vector.broadcast %cst_69 : f32 to vector<16x1xf32>
    %163 = arith.divf %161, %162 : vector<16x1xf32>
    %164 = vector.broadcast %156 : vector<16x1xf32> to vector<16x128xf32>
    %165 = arith.subf %148, %164 : vector<16x128xf32>
    %cst_70 = arith.constant 9.99999996E-13 : f32
    %166 = vector.broadcast %cst_70 : f32 to vector<16x1xf32>
    %167 = arith.addf %163, %166 : vector<16x1xf32>
    %168 = math.rsqrt %167 : vector<16x1xf32>
    %169 = vector.broadcast %168 : vector<16x1xf32> to vector<16x128xf32>
    %170 = arith.mulf %165, %169 : vector<16x128xf32>
    %171 = vector.broadcast %150 : vector<1x128xf32> to vector<16x128xf32>
    %172 = arith.mulf %170, %171 : vector<16x128xf32>
    %173 = vector.broadcast %152 : vector<1x128xf32> to vector<16x128xf32>
    %174 = arith.addf %172, %173 : vector<16x128xf32>
    %175 = vector.shape_cast %174 : vector<16x128xf32> to vector<2x8x128xf32>
    %176 = vector.shape_cast %175 : vector<2x8x128xf32> to vector<16x128xf32>
    %177 = arith.truncf %176 : vector<16x128xf32> to vector<16x128xbf16>
    %c1 = arith.constant 1 : index
    %c0_71 = arith.constant 0 : index
    %c0_72 = arith.constant 0 : index
    %178 = vector.load %arg5[%c1, %c0_71, %c0_72] : memref<2x128x384xbf16, #tpu.memory_space<vmem>>, vector<1x128x384xbf16>
    %179 = vector.shape_cast %178 : vector<1x128x384xbf16> to vector<128x384xbf16>
    %cst_73 = arith.constant dense<0.000000e+00> : vector<16x384xf32>
    %180 = tpu.matmul %177, %179, %cst_73 {dimension_numbers = #tpu.dot_dimension_numbers<[1], [0], [0], [1], [0, 0, 1, 1], [], []>} : vector<16x128xbf16>, vector<128x384xbf16>, vector<16x384xf32> -> vector<16x384xf32>
    %c1_74 = arith.constant 1 : index
    %c0_75 = arith.constant 0 : index
    %c0_76 = arith.constant 0 : index
    %181 = vector.load %arg6[%c1_74, %c0_75, %c0_76] : memref<2x1x384xf32, #tpu.memory_space<vmem>>, vector<1x1x384xf32>
    %182 = vector.shape_cast %181 : vector<1x1x384xf32> to vector<1x384xf32>
    %183 = vector.broadcast %182 : vector<1x384xf32> to vector<16x384xf32>
    %184 = arith.addf %180, %183 : vector<16x384xf32>
    %185 = vector.extract_strided_slice %184 {offsets = [0, 0], sizes = [16, 128], strides = [1, 1]} : vector<16x384xf32> to vector<16x128xf32>
    %186 = vector.shape_cast %185 : vector<16x128xf32> to vector<2x8x128xf32>
    %187 = vector.extract_strided_slice %184 {offsets = [0, 128], sizes = [16, 128], strides = [1, 1]} : vector<16x384xf32> to vector<16x128xf32>
    %188 = vector.shape_cast %187 : vector<16x128xf32> to vector<2x8x128xf32>
    %189 = vector.extract_strided_slice %184 {offsets = [0, 256], sizes = [16, 128], strides = [1, 1]} : vector<16x384xf32> to vector<16x128xf32>
    %190 = vector.shape_cast %189 : vector<16x128xf32> to vector<2x8x128xf32>
    %191 = vector.extract_strided_slice %186 {offsets = [0, 0, 0], sizes = [2, 8, 32], strides = [1, 1, 1]} : vector<2x8x128xf32> to vector<2x8x32xf32>
    %192 = vector.extract_strided_slice %186 {offsets = [0, 0, 32], sizes = [2, 8, 32], strides = [1, 1, 1]} : vector<2x8x128xf32> to vector<2x8x32xf32>
    %193 = vector.extract_strided_slice %186 {offsets = [0, 0, 64], sizes = [2, 8, 32], strides = [1, 1, 1]} : vector<2x8x128xf32> to vector<2x8x32xf32>
    %194 = vector.extract_strided_slice %186 {offsets = [0, 0, 96], sizes = [2, 8, 32], strides = [1, 1, 1]} : vector<2x8x128xf32> to vector<2x8x32xf32>
    %195 = tpu.concatenate %191, %192, %193, %194 in 0 : vector<2x8x32xf32>, vector<2x8x32xf32>, vector<2x8x32xf32>, vector<2x8x32xf32> -> vector<8x8x32xf32>
    %196 = arith.truncf %195 : vector<8x8x32xf32> to vector<8x8x32xbf16>
    %197 = vector.extract_strided_slice %188 {offsets = [0, 0, 0], sizes = [2, 8, 32], strides = [1, 1, 1]} : vector<2x8x128xf32> to vector<2x8x32xf32>
    %198 = vector.extract_strided_slice %188 {offsets = [0, 0, 32], sizes = [2, 8, 32], strides = [1, 1, 1]} : vector<2x8x128xf32> to vector<2x8x32xf32>
    %199 = vector.extract_strided_slice %188 {offsets = [0, 0, 64], sizes = [2, 8, 32], strides = [1, 1, 1]} : vector<2x8x128xf32> to vector<2x8x32xf32>
    %200 = vector.extract_strided_slice %188 {offsets = [0, 0, 96], sizes = [2, 8, 32], strides = [1, 1, 1]} : vector<2x8x128xf32> to vector<2x8x32xf32>
    %201 = tpu.concatenate %197, %198, %199, %200 in 0 : vector<2x8x32xf32>, vector<2x8x32xf32>, vector<2x8x32xf32>, vector<2x8x32xf32> -> vector<8x8x32xf32>
    %202 = arith.truncf %201 : vector<8x8x32xf32> to vector<8x8x32xbf16>
    %203 = vector.extract_strided_slice %190 {offsets = [0, 0, 0], sizes = [2, 8, 32], strides = [1, 1, 1]} : vector<2x8x128xf32> to vector<2x8x32xf32>
    %204 = vector.extract_strided_slice %190 {offsets = [0, 0, 32], sizes = [2, 8, 32], strides = [1, 1, 1]} : vector<2x8x128xf32> to vector<2x8x32xf32>
    %205 = vector.extract_strided_slice %190 {offsets = [0, 0, 64], sizes = [2, 8, 32], strides = [1, 1, 1]} : vector<2x8x128xf32> to vector<2x8x32xf32>
    %206 = vector.extract_strided_slice %190 {offsets = [0, 0, 96], sizes = [2, 8, 32], strides = [1, 1, 1]} : vector<2x8x128xf32> to vector<2x8x32xf32>
    %207 = tpu.concatenate %203, %204, %205, %206 in 0 : vector<2x8x32xf32>, vector<2x8x32xf32>, vector<2x8x32xf32>, vector<2x8x32xf32> -> vector<8x8x32xf32>
    %208 = arith.truncf %207 : vector<8x8x32xf32> to vector<8x8x32xbf16>
    "tpu.trace_start"() <{level = 10 : i32, message = "bqd,bkd->bqk"}> : () -> ()
    %cst_77 = arith.constant dense<0.000000e+00> : vector<8x8x8xf32>
    %209 = tpu.matmul %196, %202, %cst_77 {dimension_numbers = #tpu.dot_dimension_numbers<[2], [2], [1], [1], [0, 0, 0, 1, 1, 1], [0], [0]>} : vector<8x8x32xbf16>, vector<8x8x32xbf16>, vector<8x8x8xf32> -> vector<8x8x8xf32>
    "tpu.trace_stop"() : () -> ()
    %210 = arith.addf %209, %30 : vector<8x8x8xf32>
    %cst_78 = arith.constant dense<0xFF800000> : vector<8x8xf32>
    %211 = vector.multi_reduction <maximumf>, %210, %cst_78 [2] : vector<8x8x8xf32> to vector<8x8xf32>
    %212 = vector.shape_cast %211 : vector<8x8xf32> to vector<8x8x1xf32>
    %213 = vector.broadcast %212 : vector<8x8x1xf32> to vector<8x8x8xf32>
    %214 = arith.subf %210, %213 : vector<8x8x8xf32>
    %215 = math.exp %214 : vector<8x8x8xf32>
    %cst_79 = arith.constant dense<0.000000e+00> : vector<8x8xf32>
    %216 = vector.multi_reduction <add>, %215, %cst_79 [2] : vector<8x8x8xf32> to vector<8x8xf32>
    %217 = vector.shape_cast %216 : vector<8x8xf32> to vector<8x8x1xf32>
    %218 = tpu.reciprocal %217 {approx = true} : vector<8x8x1xf32> -> vector<8x8x1xf32>
    %219 = vector.broadcast %218 : vector<8x8x1xf32> to vector<8x8x8xf32>
    %220 = arith.mulf %215, %219 : vector<8x8x8xf32>
    %221 = arith.truncf %220 : vector<8x8x8xf32> to vector<8x8x8xbf16>
    "tpu.trace_start"() <{level = 10 : i32, message = "bqk,bkd->bqd"}> : () -> ()
    %cst_80 = arith.constant dense<0.000000e+00> : vector<8x8x32xf32>
    %222 = tpu.matmul %221, %208, %cst_80 {dimension_numbers = #tpu.dot_dimension_numbers<[2], [1], [1], [2], [0, 0, 0, 1, 1, 2], [0], [0]>} : vector<8x8x8xbf16>, vector<8x8x32xbf16>, vector<8x8x32xf32> -> vector<8x8x32xf32>
    "tpu.trace_stop"() : () -> ()
    %223 = vector.extract_strided_slice %222 {offsets = [0, 0, 0], sizes = [2, 8, 32], strides = [1, 1, 1]} : vector<8x8x32xf32> to vector<2x8x32xf32>
    %224 = vector.extract_strided_slice %222 {offsets = [2, 0, 0], sizes = [2, 8, 32], strides = [1, 1, 1]} : vector<8x8x32xf32> to vector<2x8x32xf32>
    %225 = vector.extract_strided_slice %222 {offsets = [4, 0, 0], sizes = [2, 8, 32], strides = [1, 1, 1]} : vector<8x8x32xf32> to vector<2x8x32xf32>
    %226 = vector.extract_strided_slice %222 {offsets = [6, 0, 0], sizes = [2, 8, 32], strides = [1, 1, 1]} : vector<8x8x32xf32> to vector<2x8x32xf32>
    %227 = tpu.concatenate %223, %224, %225, %226 in 2 : vector<2x8x32xf32>, vector<2x8x32xf32>, vector<2x8x32xf32>, vector<2x8x32xf32> -> vector<2x8x128xf32>
    %228 = vector.shape_cast %227 : vector<2x8x128xf32> to vector<16x128xf32>
    %229 = arith.truncf %228 : vector<16x128xf32> to vector<16x128xbf16>
    %c1_81 = arith.constant 1 : index
    %c0_82 = arith.constant 0 : index
    %c0_83 = arith.constant 0 : index
    %230 = vector.load %arg7[%c1_81, %c0_82, %c0_83] : memref<2x128x128xbf16, #tpu.memory_space<vmem>>, vector<1x128x128xbf16>
    %231 = vector.shape_cast %230 : vector<1x128x128xbf16> to vector<128x128xbf16>
    %cst_84 = arith.constant dense<0.000000e+00> : vector<16x128xf32>
    %232 = tpu.matmul %229, %231, %cst_84 {dimension_numbers = #tpu.dot_dimension_numbers<[1], [0], [0], [1], [0, 0, 1, 1], [], []>} : vector<16x128xbf16>, vector<128x128xbf16>, vector<16x128xf32> -> vector<16x128xf32>
    %c1_85 = arith.constant 1 : index
    %c0_86 = arith.constant 0 : index
    %c0_87 = arith.constant 0 : index
    %233 = vector.load %arg8[%c1_85, %c0_86, %c0_87] : memref<2x1x128xf32, #tpu.memory_space<vmem>>, vector<1x1x128xf32>
    %234 = vector.shape_cast %233 : vector<1x1x128xf32> to vector<1x128xf32>
    %235 = vector.broadcast %234 : vector<1x128xf32> to vector<16x128xf32>
    %236 = arith.addf %232, %235 : vector<16x128xf32>
    %237 = arith.addf %176, %236 : vector<16x128xf32>
    %c1_88 = arith.constant 1 : index
    %c0_89 = arith.constant 0 : index
    %c0_90 = arith.constant 0 : index
    %238 = vector.load %arg9[%c1_88, %c0_89, %c0_90] : memref<2x1x128xf32, #tpu.memory_space<vmem>>, vector<1x1x128xf32>
    %239 = vector.shape_cast %238 : vector<1x1x128xf32> to vector<1x128xf32>
    %c1_91 = arith.constant 1 : index
    %c0_92 = arith.constant 0 : index
    %c0_93 = arith.constant 0 : index
    %240 = vector.load %arg10[%c1_91, %c0_92, %c0_93] : memref<2x1x128xf32, #tpu.memory_space<vmem>>, vector<1x1x128xf32>
    %241 = vector.shape_cast %240 : vector<1x1x128xf32> to vector<1x128xf32>
    %cst_94 = arith.constant dense<0.000000e+00> : vector<16xf32>
    %242 = vector.multi_reduction <add>, %237, %cst_94 [1] : vector<16x128xf32> to vector<16xf32>
    %243 = vector.shape_cast %242 : vector<16xf32> to vector<16x1xf32>
    %cst_95 = arith.constant 1.280000e+02 : f32
    %244 = vector.broadcast %cst_95 : f32 to vector<16x1xf32>
    %245 = arith.divf %243, %244 : vector<16x1xf32>
    %246 = vector.broadcast %245 : vector<16x1xf32> to vector<16x128xf32>
    %247 = arith.subf %237, %246 : vector<16x128xf32>
    %248 = arith.mulf %247, %247 : vector<16x128xf32>
    %cst_96 = arith.constant dense<0.000000e+00> : vector<16xf32>
    %249 = vector.multi_reduction <add>, %248, %cst_96 [1] : vector<16x128xf32> to vector<16xf32>
    %250 = vector.shape_cast %249 : vector<16xf32> to vector<16x1xf32>
    %cst_97 = arith.constant 1.280000e+02 : f32
    %251 = vector.broadcast %cst_97 : f32 to vector<16x1xf32>
    %252 = arith.divf %250, %251 : vector<16x1xf32>
    %253 = vector.broadcast %245 : vector<16x1xf32> to vector<16x128xf32>
    %254 = arith.subf %237, %253 : vector<16x128xf32>
    %cst_98 = arith.constant 9.99999996E-13 : f32
    %255 = vector.broadcast %cst_98 : f32 to vector<16x1xf32>
    %256 = arith.addf %252, %255 : vector<16x1xf32>
    %257 = math.rsqrt %256 : vector<16x1xf32>
    %258 = vector.broadcast %257 : vector<16x1xf32> to vector<16x128xf32>
    %259 = arith.mulf %254, %258 : vector<16x128xf32>
    %260 = vector.broadcast %239 : vector<1x128xf32> to vector<16x128xf32>
    %261 = arith.mulf %259, %260 : vector<16x128xf32>
    %262 = vector.broadcast %241 : vector<1x128xf32> to vector<16x128xf32>
    %263 = arith.addf %261, %262 : vector<16x128xf32>
    %264 = arith.truncf %263 : vector<16x128xf32> to vector<16x128xbf16>
    %c1_99 = arith.constant 1 : index
    %c0_100 = arith.constant 0 : index
    %c0_101 = arith.constant 0 : index
    %265 = vector.load %arg11[%c1_99, %c0_100, %c0_101] : memref<2x128x256xbf16, #tpu.memory_space<vmem>>, vector<1x128x256xbf16>
    %266 = vector.shape_cast %265 : vector<1x128x256xbf16> to vector<128x256xbf16>
    %cst_102 = arith.constant dense<0.000000e+00> : vector<16x256xf32>
    %267 = tpu.matmul %264, %266, %cst_102 {dimension_numbers = #tpu.dot_dimension_numbers<[1], [0], [0], [1], [0, 0, 1, 1], [], []>} : vector<16x128xbf16>, vector<128x256xbf16>, vector<16x256xf32> -> vector<16x256xf32>
    %c1_103 = arith.constant 1 : index
    %c0_104 = arith.constant 0 : index
    %c0_105 = arith.constant 0 : index
    %268 = vector.load %arg12[%c1_103, %c0_104, %c0_105] : memref<2x1x256xf32, #tpu.memory_space<vmem>>, vector<1x1x256xf32>
    %269 = vector.shape_cast %268 : vector<1x1x256xf32> to vector<1x256xf32>
    %270 = vector.broadcast %269 : vector<1x256xf32> to vector<16x256xf32>
    %271 = arith.addf %267, %270 : vector<16x256xf32>
    %272 = arith.mulf %271, %271 : vector<16x256xf32>
    %273 = arith.mulf %271, %272 : vector<16x256xf32>
    %cst_106 = arith.constant 4.471500e-02 : f32
    %274 = vector.broadcast %cst_106 : f32 to vector<16x256xf32>
    %275 = arith.mulf %274, %273 : vector<16x256xf32>
    %276 = arith.addf %271, %275 : vector<16x256xf32>
    %cst_107 = arith.constant 0.797884583 : f32
    %277 = vector.broadcast %cst_107 : f32 to vector<16x256xf32>
    %278 = arith.mulf %277, %276 : vector<16x256xf32>
    %279 = math.tanh %278 : vector<16x256xf32>
    %cst_108 = arith.constant 1.000000e+00 : f32
    %280 = vector.broadcast %cst_108 : f32 to vector<16x256xf32>
    %281 = arith.addf %280, %279 : vector<16x256xf32>
    %cst_109 = arith.constant 5.000000e-01 : f32
    %282 = vector.broadcast %cst_109 : f32 to vector<16x256xf32>
    %283 = arith.mulf %282, %281 : vector<16x256xf32>
    %284 = arith.mulf %271, %283 : vector<16x256xf32>
    %285 = arith.truncf %284 : vector<16x256xf32> to vector<16x256xbf16>
    %c1_110 = arith.constant 1 : index
    %c0_111 = arith.constant 0 : index
    %c0_112 = arith.constant 0 : index
    %286 = vector.load %arg13[%c1_110, %c0_111, %c0_112] : memref<2x256x128xbf16, #tpu.memory_space<vmem>>, vector<1x256x128xbf16>
    %287 = vector.shape_cast %286 : vector<1x256x128xbf16> to vector<256x128xbf16>
    %cst_113 = arith.constant dense<0.000000e+00> : vector<16x128xf32>
    %288 = tpu.matmul %285, %287, %cst_113 {dimension_numbers = #tpu.dot_dimension_numbers<[1], [0], [0], [1], [0, 0, 1, 1], [], []>} : vector<16x256xbf16>, vector<256x128xbf16>, vector<16x128xf32> -> vector<16x128xf32>
    %c1_114 = arith.constant 1 : index
    %c0_115 = arith.constant 0 : index
    %c0_116 = arith.constant 0 : index
    %289 = vector.load %arg14[%c1_114, %c0_115, %c0_116] : memref<2x1x128xf32, #tpu.memory_space<vmem>>, vector<1x1x128xf32>
    %290 = vector.shape_cast %289 : vector<1x1x128xf32> to vector<1x128xf32>
    %291 = vector.broadcast %290 : vector<1x128xf32> to vector<16x128xf32>
    %292 = arith.addf %288, %291 : vector<16x128xf32>
    %293 = arith.addf %263, %292 : vector<16x128xf32>
    %c1_117 = arith.constant 1 : index
    %c0_118 = arith.constant 0 : index
    %c0_119 = arith.constant 0 : index
    %294 = vector.load %arg15[%c1_117, %c0_118, %c0_119] : memref<2x1x128xf32, #tpu.memory_space<vmem>>, vector<1x1x128xf32>
    %295 = vector.shape_cast %294 : vector<1x1x128xf32> to vector<1x128xf32>
    %c1_120 = arith.constant 1 : index
    %c0_121 = arith.constant 0 : index
    %c0_122 = arith.constant 0 : index
    %296 = vector.load %arg16[%c1_120, %c0_121, %c0_122] : memref<2x1x128xf32, #tpu.memory_space<vmem>>, vector<1x1x128xf32>
    %297 = vector.shape_cast %296 : vector<1x1x128xf32> to vector<1x128xf32>
    %cst_123 = arith.constant dense<0.000000e+00> : vector<16xf32>
    %298 = vector.multi_reduction <add>, %293, %cst_123 [1] : vector<16x128xf32> to vector<16xf32>
    %299 = vector.shape_cast %298 : vector<16xf32> to vector<16x1xf32>
    %cst_124 = arith.constant 1.280000e+02 : f32
    %300 = vector.broadcast %cst_124 : f32 to vector<16x1xf32>
    %301 = arith.divf %299, %300 : vector<16x1xf32>
    %302 = vector.broadcast %301 : vector<16x1xf32> to vector<16x128xf32>
    %303 = arith.subf %293, %302 : vector<16x128xf32>
    %304 = arith.mulf %303, %303 : vector<16x128xf32>
    %cst_125 = arith.constant dense<0.000000e+00> : vector<16xf32>
    %305 = vector.multi_reduction <add>, %304, %cst_125 [1] : vector<16x128xf32> to vector<16xf32>
    %306 = vector.shape_cast %305 : vector<16xf32> to vector<16x1xf32>
    %cst_126 = arith.constant 1.280000e+02 : f32
    %307 = vector.broadcast %cst_126 : f32 to vector<16x1xf32>
    %308 = arith.divf %306, %307 : vector<16x1xf32>
    %309 = vector.broadcast %301 : vector<16x1xf32> to vector<16x128xf32>
    %310 = arith.subf %293, %309 : vector<16x128xf32>
    %cst_127 = arith.constant 9.99999996E-13 : f32
    %311 = vector.broadcast %cst_127 : f32 to vector<16x1xf32>
    %312 = arith.addf %308, %311 : vector<16x1xf32>
    %313 = math.rsqrt %312 : vector<16x1xf32>
    %314 = vector.broadcast %313 : vector<16x1xf32> to vector<16x128xf32>
    %315 = arith.mulf %310, %314 : vector<16x128xf32>
    %316 = vector.broadcast %295 : vector<1x128xf32> to vector<16x128xf32>
    %317 = arith.mulf %315, %316 : vector<16x128xf32>
    %318 = vector.broadcast %297 : vector<1x128xf32> to vector<16x128xf32>
    %319 = arith.addf %317, %318 : vector<16x128xf32>
    %320 = vector.shape_cast %319 : vector<16x128xf32> to vector<2x8x128xf32>
    %321 = vector.extract_strided_slice %320 {offsets = [0, 0, 0], sizes = [2, 1, 128], strides = [1, 1, 1]} : vector<2x8x128xf32> to vector<2x1x128xf32>
    %322 = vector.shape_cast %321 : vector<2x1x128xf32> to vector<2x128xf32>
    %323 = vector.extract_strided_slice %322 {offsets = [0, 0], sizes = [1, 128], strides = [1, 1]} : vector<2x128xf32> to vector<1x128xf32>
    %324 = vector.extract_strided_slice %322 {offsets = [1, 0], sizes = [1, 128], strides = [1, 1]} : vector<2x128xf32> to vector<1x128xf32>
    %325 = arith.subf %323, %324 : vector<1x128xf32>
    %326 = math.absf %325 : vector<1x128xf32>
    %327 = tpu.concatenate %323, %324, %326 in 1 : vector<1x128xf32>, vector<1x128xf32>, vector<1x128xf32> -> vector<1x384xf32>
    %328 = arith.truncf %327 : vector<1x384xf32> to vector<1x384xbf16>
    %c0_128 = arith.constant 0 : index
    %c0_129 = arith.constant 0 : index
    %329 = vector.load %arg19[%c0_128, %c0_129] : memref<384x384xbf16, #tpu.memory_space<vmem>>, vector<384x384xbf16>
    %cst_130 = arith.constant dense<0.000000e+00> : vector<1x384xf32>
    %330 = tpu.matmul %328, %329, %cst_130 {dimension_numbers = #tpu.dot_dimension_numbers<[1], [0], [0], [1], [0, 0, 1, 1], [], []>} : vector<1x384xbf16>, vector<384x384xbf16>, vector<1x384xf32> -> vector<1x384xf32>
    %c0_131 = arith.constant 0 : index
    %c0_132 = arith.constant 0 : index
    %331 = vector.load %arg20[%c0_131, %c0_132] : memref<1x384xf32, #tpu.memory_space<vmem>>, vector<1x384xf32>
    %332 = arith.addf %330, %331 : vector<1x384xf32>
    %333 = math.tanh %332 : vector<1x384xf32>
    %334 = arith.truncf %333 : vector<1x384xf32> to vector<1x384xbf16>
    %c0_133 = arith.constant 0 : index
    %c0_134 = arith.constant 0 : index
    %335 = vector.load %arg21[%c0_133, %c0_134] : memref<384x128xbf16, #tpu.memory_space<vmem>>, vector<384x128xbf16>
    %cst_135 = arith.constant dense<0.000000e+00> : vector<1x128xf32>
    %336 = tpu.matmul %334, %335, %cst_135 {dimension_numbers = #tpu.dot_dimension_numbers<[1], [0], [0], [1], [0, 0, 1, 1], [], []>} : vector<1x384xbf16>, vector<384x128xbf16>, vector<1x128xf32> -> vector<1x128xf32>
    %c0_136 = arith.constant 0 : index
    %c0_137 = arith.constant 0 : index
    %337 = vector.load %arg22[%c0_136, %c0_137] : memref<1x128xf32, #tpu.memory_space<vmem>>, vector<1x128xf32>
    %338 = arith.addf %336, %337 : vector<1x128xf32>
    %339 = vector.shape_cast %338 : vector<1x128xf32> to vector<1x1x128xf32>
    %c0_138 = arith.constant 0 : index
    %c0_139 = arith.constant 0 : index
    %c0_140 = arith.constant 0 : index
    %340 = vector.load %arg23[%c0_138, %c0_139, %c0_140] : memref<1x1x128xf32, #tpu.memory_space<vmem>>, vector<1x1x128xf32>
    tpu.vector_store %arg23[%c0_138, %c0_139, %c0_140], %339 {strides = array<i32>} : memref<1x1x128xf32, #tpu.memory_space<vmem>>, vector<1x1x128xf32>,
    return
  }
  func.func @transform_0(%arg0: i32) -> (i32, i32, i32) {
    %c0_i32 = arith.constant 0 : i32
    %c0_i32_0 = arith.constant 0 : i32
    %c0_i32_1 = arith.constant 0 : i32
    return %arg0, %c0_i32, %c0_i32_0 : i32, i32, i32
  }
  func.func @transform_1(%arg0: i32) -> (i32, i32, i32) {
    %c0_i32 = arith.constant 0 : i32
    %c0_i32_0 = arith.constant 0 : i32
    %c0_i32_1 = arith.constant 0 : i32
    return %arg0, %c0_i32, %c0_i32_0 : i32, i32, i32
  }
  func.func @transform_2(%arg0: i32) -> (i32, i32) {
    %c0_i32 = arith.constant 0 : i32
    %c0_i32_0 = arith.constant 0 : i32
    %c0_i32_1 = arith.constant 0 : i32
    return %c0_i32, %c0_i32_0 : i32, i32
  }
  func.func @transform_3(%arg0: i32) -> (i32, i32) {
    %c0_i32 = arith.constant 0 : i32
    %c0_i32_0 = arith.constant 0 : i32
    %c0_i32_1 = arith.constant 0 : i32
    return %c0_i32, %c0_i32_0 : i32, i32
  }
  func.func @transform_4(%arg0: i32) -> (i32, i32, i32) {
    %c0_i32 = arith.constant 0 : i32
    %c0_i32_0 = arith.constant 0 : i32
    %c0_i32_1 = arith.constant 0 : i32
    %c0_i32_2 = arith.constant 0 : i32
    return %c0_i32, %c0_i32_0, %c0_i32_1 : i32, i32, i32
  }
  func.func @transform_5(%arg0: i32) -> (i32, i32, i32) {
    %c0_i32 = arith.constant 0 : i32
    %c0_i32_0 = arith.constant 0 : i32
    %c0_i32_1 = arith.constant 0 : i32
    %c0_i32_2 = arith.constant 0 : i32
    return %c0_i32, %c0_i32_0, %c0_i32_1 : i32, i32, i32
  }
  func.func @transform_6(%arg0: i32) -> (i32, i32, i32) {
    %c0_i32 = arith.constant 0 : i32
    %c0_i32_0 = arith.constant 0 : i32
    %c0_i32_1 = arith.constant 0 : i32
    %c0_i32_2 = arith.constant 0 : i32
    return %c0_i32, %c0_i32_0, %c0_i32_1 : i32, i32, i32
  }
  func.func @transform_7(%arg0: i32) -> (i32, i32, i32) {
    %c0_i32 = arith.constant 0 : i32
    %c0_i32_0 = arith.constant 0 : i32
    %c0_i32_1 = arith.constant 0 : i32
    %c0_i32_2 = arith.constant 0 : i32
    return %c0_i32, %c0_i32_0, %c0_i32_1 : i32, i32, i32
  }
  func.func @transform_8(%arg0: i32) -> (i32, i32, i32) {
    %c0_i32 = arith.constant 0 : i32
    %c0_i32_0 = arith.constant 0 : i32
    %c0_i32_1 = arith.constant 0 : i32
    %c0_i32_2 = arith.constant 0 : i32
    return %c0_i32, %c0_i32_0, %c0_i32_1 : i32, i32, i32
  }
  func.func @transform_9(%arg0: i32) -> (i32, i32, i32) {
    %c0_i32 = arith.constant 0 : i32
    %c0_i32_0 = arith.constant 0 : i32
    %c0_i32_1 = arith.constant 0 : i32
    %c0_i32_2 = arith.constant 0 : i32
    return %c0_i32, %c0_i32_0, %c0_i32_1 : i32, i32, i32
  }
  func.func @transform_10(%arg0: i32) -> (i32, i32, i32) {
    %c0_i32 = arith.constant 0 : i32
    %c0_i32_0 = arith.constant 0 : i32
    %c0_i32_1 = arith.constant 0 : i32
    %c0_i32_2 = arith.constant 0 : i32
    return %c0_i32, %c0_i32_0, %c0_i32_1 : i32, i32, i32
  }
  func.func @transform_11(%arg0: i32) -> (i32, i32, i32) {
    %c0_i32 = arith.constant 0 : i32
    %c0_i32_0 = arith.constant 0 : i32
    %c0_i32_1 = arith.constant 0 : i32
    %c0_i32_2 = arith.constant 0 : i32
    return %c0_i32, %c0_i32_0, %c0_i32_1 : i32, i32, i32
  }
  func.func @transform_12(%arg0: i32) -> (i32, i32, i32) {
    %c0_i32 = arith.constant 0 : i32
    %c0_i32_0 = arith.constant 0 : i32
    %c0_i32_1 = arith.constant 0 : i32
    %c0_i32_2 = arith.constant 0 : i32
    return %c0_i32, %c0_i32_0, %c0_i32_1 : i32, i32, i32
  }
  func.func @transform_13(%arg0: i32) -> (i32, i32, i32) {
    %c0_i32 = arith.constant 0 : i32
    %c0_i32_0 = arith.constant 0 : i32
    %c0_i32_1 = arith.constant 0 : i32
    %c0_i32_2 = arith.constant 0 : i32
    return %c0_i32, %c0_i32_0, %c0_i32_1 : i32, i32, i32
  }
  func.func @transform_14(%arg0: i32) -> (i32, i32, i32) {
    %c0_i32 = arith.constant 0 : i32
    %c0_i32_0 = arith.constant 0 : i32
    %c0_i32_1 = arith.constant 0 : i32
    %c0_i32_2 = arith.constant 0 : i32
    return %c0_i32, %c0_i32_0, %c0_i32_1 : i32, i32, i32
  }
  func.func @transform_15(%arg0: i32) -> (i32, i32, i32) {
    %c0_i32 = arith.constant 0 : i32
    %c0_i32_0 = arith.constant 0 : i32
    %c0_i32_1 = arith.constant 0 : i32
    %c0_i32_2 = arith.constant 0 : i32
    return %c0_i32, %c0_i32_0, %c0_i32_1 : i32, i32, i32
  }
  func.func @transform_16(%arg0: i32) -> (i32, i32) {
    %c0_i32 = arith.constant 0 : i32
    %c0_i32_0 = arith.constant 0 : i32
    %c0_i32_1 = arith.constant 0 : i32
    return %c0_i32, %c0_i32_0 : i32, i32
  }
  func.func @transform_17(%arg0: i32) -> (i32, i32) {
    %c0_i32 = arith.constant 0 : i32
    %c0_i32_0 = arith.constant 0 : i32
    %c0_i32_1 = arith.constant 0 : i32
    return %c0_i32, %c0_i32_0 : i32, i32
  }
  func.func @transform_18(%arg0: i32) -> (i32, i32) {
    %c0_i32 = arith.constant 0 : i32
    %c0_i32_0 = arith.constant 0 : i32
    %c0_i32_1 = arith.constant 0 : i32
    return %c0_i32, %c0_i32_0 : i32, i32
  }
  func.func @transform_19(%arg0: i32) -> (i32, i32) {
    %c0_i32 = arith.constant 0 : i32
    %c0_i32_0 = arith.constant 0 : i32
    %c0_i32_1 = arith.constant 0 : i32
    return %c0_i32, %c0_i32_0 : i32, i32
  }
  func.func @transform_20(%arg0: i32) -> (i32, i32) {
    %c0_i32 = arith.constant 0 : i32
    %c0_i32_0 = arith.constant 0 : i32
    %c0_i32_1 = arith.constant 0 : i32
    return %c0_i32, %c0_i32_0 : i32, i32
  }
  func.func @transform_21(%arg0: i32) -> (i32, i32) {
    %c0_i32 = arith.constant 0 : i32
    %c0_i32_0 = arith.constant 0 : i32
    %c0_i32_1 = arith.constant 0 : i32
    return %c0_i32, %c0_i32_0 : i32, i32
  }
  func.func @transform_22(%arg0: i32) -> (i32, i32, i32) {
    %c0_i32 = arith.constant 0 : i32
    %c0_i32_0 = arith.constant 0 : i32
    %c0_i32_1 = arith.constant 0 : i32
    return %arg0, %c0_i32, %c0_i32_0 : i32, i32, i32
  }
}

</mosaic_0001>

<llo_original>
// kernel: cl_for_classification_forward.1
$region0: #{cl_for_classification_forward.1}
  #allocation0 [shape = 'u32[]', space=smem, size = 0x4, offset = 0x4, fixed_abs, tag = 'smem constant byte address 0x4 - core index']
  #allocation1 [shape = 'u32[72,128]{1,0:T(1,128)}', space=vmem, size = 0x9000, scoped, tag = 'internal scratch']
  %s0 = inlined_call_operand.vmem [shape: f32[4,8,128], index: 0, kind: input, shape index: {}]
  %s1 = inlined_call_operand.vmem [shape: f32[4,1,8], index: 1, kind: input, shape index: {}]
  %s2 = inlined_call_operand.vmem [shape: f32[1,128], index: 2, kind: input, shape index: {}]
  %s3 = inlined_call_operand.vmem [shape: f32[1,128], index: 3, kind: input, shape index: {}]
  %s4 = inlined_call_operand.vmem [shape: bf16[2,128,384], index: 4, kind: input, shape index: {}]
  %s5 = inlined_call_operand.vmem [shape: f32[2,1,384], index: 5, kind: input, shape index: {}]
  %s6 = inlined_call_operand.hbm [shape: bf16[2,128,128], index: 6, kind: input, shape index: {}]
  %s7 = inlined_call_operand.vmem [shape: f32[2,1,128], index: 7, kind: input, shape index: {}]
  %s8 = inlined_call_operand.vmem [shape: f32[2,1,128], index: 8, kind: input, shape index: {}]
  %s9 = inlined_call_operand.vmem [shape: f32[2,1,128], index: 9, kind: input, shape index: {}]
  %s10 = inlined_call_operand.hbm [shape: bf16[2,128,256], index: 10, kind: input, shape index: {}]
  %s11 = inlined_call_operand.vmem [shape: f32[2,1,256], index: 11, kind: input, shape index: {}]
  %s12 = inlined_call_operand.hbm [shape: bf16[2,256,128], index: 12, kind: input, shape index: {}]
  %s13 = inlined_call_operand.vmem [shape: f32[2,1,128], index: 13, kind: input, shape index: {}]
  %s14 = inlined_call_operand.vmem [shape: f32[2,1,128], index: 14, kind: input, shape index: {}]
  %s15 = inlined_call_operand.hbm [shape: f32[2,1,128], index: 15, kind: input, shape index: {}]
  %s16 = inlined_call_operand.hbm [shape: bf16[128,128], index: 16, kind: input, shape index: {}]
  %s17 = inlined_call_operand.hbm [shape: f32[1,128], index: 17, kind: input, shape index: {}]
  %s18 = inlined_call_operand.hbm [shape: bf16[384,384], index: 18, kind: input, shape index: {}]
  %s19 = inlined_call_operand.vmem [shape: f32[1,384], index: 19, kind: input, shape index: {}]
  %s20 = inlined_call_operand.hbm [shape: bf16[384,128], index: 20, kind: input, shape index: {}]
  %s21 = inlined_call_operand.vmem [shape: f32[1,128], index: 21, kind: input, shape index: {}]
  %s22 = inlined_call_operand.vmem [shape: f32[2,1,128], index: 22, kind: output, shape index: {}]
  %s23 = sld [smem:[#allocation0]]
  $region153: #{cl_for_classification_forward.1} parent=0
    _
  %s25 = ssub.s32 1, %s23
  %s26 = scalar_select 0, %s25, %s23
  $region1: #{cl_for_classification_forward.1} parent=0
    #allocation2 [shape = 'u8[65536]{0}', space=vmem, size = 0x10000, scoped, tag = 'input window, operand 6, single buffered']
    #allocation3 [shape = 's32[2]{0}', space=sflag, size = 0x8, scoped, tag = 'scoped memory for cl_for_classification_forward.1']
    #allocation4 [shape = 'u8[131072]{0}', space=vmem, size = 0x20000, scoped, tag = 'input window, operand 10, single buffered']
    #allocation5 [shape = 's32[1]{0}', space=sflag, size = 0x4, scoped, tag = 'scoped memory for cl_for_classification_forward.1']
    #allocation6 [shape = 'u8[131072]{0}', space=vmem, size = 0x20000, scoped, tag = 'input window, operand 12, single buffered']
    #allocation7 [shape = 'u8[1024]{0}', space=vmem, size = 0x400, scoped, tag = 'input window, operand 15, single buffered']
    #allocation8 [shape = 's32[1]{0}', space=sflag, size = 0x4, scoped, tag = 'scoped memory for cl_for_classification_forward.1']
    #allocation9 [shape = 'u8[32768]{0}', space=vmem, size = 0x8000, scoped, tag = 'input window, operand 16, single buffered']
    #allocation10 [shape = 'u8[512]{0}', space=vmem, size = 0x400, scoped, tag = 'input window, operand 17, single buffered']
    #allocation11 [shape = 's32[1]{0}', space=sflag, size = 0x4, scoped, tag = 'scoped memory for cl_for_classification_forward.1']
    #allocation12 [shape = 'u8[294912]{0}', space=vmem, size = 0x48000, scoped, tag = 'input window, operand 18, single buffered']
    #allocation13 [shape = 'u8[98304]{0}', space=vmem, size = 0x18000, scoped, tag = 'input window, operand 20, single buffered']
    #allocation14 [shape = 's32[1]{0}', space=sflag, size = 0x4, scoped, tag = 'scoped memory for cl_for_classification_forward.1']
    %27 = vsyncpa [#allocation3], 0
    %28 = vsyncpa [#allocation5], 0
    %29 = vsyncpa [#allocation8], 0
    %30 = vsyncpa [#allocation11], 0
    %31 = vsyncpa [#allocation14], 0
    loop: start=0, step=1, limit=4
    $region2: #{cl_for_classification_forward.1} parent=1 // loop_pre_header
      _
    $region3: #{cl_for_classification_forward.1} parent=1 // loop_header
      %s33 = sphi 0, %s37
      %p34 = scmp.ge.s32.totalorder %s33, 4
      %s43 = sphi 0, %s45
      %s46 = sphi 0, %s43
      %s47 = sphi 0, %s46
      %s63 = sphi 0, %s47
      %s69 = sphi 0, %s71
      %s72 = sphi 0, %s69
      %s73 = sphi 0, %s72
      %s89 = sphi 0, %s73
      %s93 = sphi 0, %s93
      %s95 = sphi 0, %s93
      %s96 = sphi 0, %s95
      %s110 = sphi 0, %s96
      %s114 = sphi 0, %s114
      %s116 = sphi 0, %s114
      %s117 = sphi 0, %s116
      %s131 = sphi 0, %s117
      %s135 = sphi 0, %s135
      %s137 = sphi 0, %s135
      %s138 = sphi 0, %s137
      %s152 = sphi 0, %s138
      %s156 = sphi 0, %s156
      %s158 = sphi 0, %s156
      %s159 = sphi 0, %s158
      %s173 = sphi 0, %s159
      %s177 = sphi 0, %s177
      %s179 = sphi 0, %s177
      %s180 = sphi 0, %s179
      %s194 = sphi 0, %s180
      %s198 = sphi 0, %s198
      %s200 = sphi 0, %s198
      %s201 = sphi 0, %s200
      %s215 = sphi 0, %s201
      %s219 = sphi 0, %s219
      %s221 = sphi 0, %s219
      %s222 = sphi 0, %s221
      %s236 = sphi 0, %s222
      %s240 = sphi 0, %s240
      %s242 = sphi 0, %s240
      %s243 = sphi 0, %s242
      %s257 = sphi 0, %s243
      %s261 = sphi 0, %s261
      %s263 = sphi 0, %s261
      %s264 = sphi 0, %s263
      %s278 = sphi 0, %s264
      %s282 = sphi 0, %s282
      %s284 = sphi 0, %s282
      %s285 = sphi 0, %s284
      %s299 = sphi 0, %s285
      %s303 = sphi 0, %s303
      %s305 = sphi 0, %s303
      %s306 = sphi 0, %s305
      %s320 = sphi 0, %s306
      %s324 = sphi 0, %s324
      %s326 = sphi 0, %s324
      %s327 = sphi 0, %s326
      %s341 = sphi 0, %s327
      %s345 = sphi 0, %s345
      %s347 = sphi 0, %s345
      %s348 = sphi 0, %s347
      %s362 = sphi 0, %s348
      %s366 = sphi 0, %s366
      %s368 = sphi 0, %s366
      %s369 = sphi 0, %s368
      %s383 = sphi 0, %s369
      %s387 = sphi 0, %s387
      %s389 = sphi 0, %s387
      %s390 = sphi 0, %s389
      %s404 = sphi 0, %s390
      %s408 = sphi 0, %s408
      %s410 = sphi 0, %s408
      %s411 = sphi 0, %s410
      %s425 = sphi 0, %s411
      %s429 = sphi 0, %s429
      %s431 = sphi 0, %s429
      %s432 = sphi 0, %s431
      %s446 = sphi 0, %s432
      %s450 = sphi 0, %s450
      %s452 = sphi 0, %s450
      %s453 = sphi 0, %s452
      %s467 = sphi 0, %s453
      %s471 = sphi 0, %s471
      %s473 = sphi 0, %s471
      %s474 = sphi 0, %s473
      %s488 = sphi 0, %s474
      %s492 = sphi 0, %s492
      %s494 = sphi 0, %s492
      %s495 = sphi 0, %s494
      %s509 = sphi 0, %s495
      %s515 = sphi 0, %s517
      %s518 = sphi 0, %s515
      %s519 = sphi 0, %s518
      %s535 = sphi 0, %s519
    $region4: #{cl_for_classification_forward.1} parent=1 // loop_header_branch
      %36 = sbr.rel (%p34) target = $region8
    $region5: #{cl_for_classification_forward.1} parent=1 // loop_body
      %s38 = ssub.s32 %s33, 1
      %s39 = ssub.s32 %s33, 2
      %s40 = sadd.s32 %s33, 1
      %s41 = ssub.s32 %s33, %s40
      %p42 = scmp.eq.s32.totalorder %s41, 0
      %s44 = sadd.s32 %s43, 1
      %s45 = scalar_select %p42, %s43, %s44
      %p48 = pneg %p42
      %p49 = scmp.eq.s32.totalorder %s33, 1
      %p50 = por %p48, %p49
      %p51 = scmp.ne.s32.totalorder %s43, %s46
      %p52 = scmp.eq.s32.totalorder %s33, 0
      %p53 = por %p51, %p52
      %p54 = scmp.ne.s32.totalorder %s43, %s46
      %p55 = scmp.eq.s32.totalorder %s38, 1
      %p56 = por %p54, %p55
      %p57 = scmp.ne.s32.totalorder %s46, %s47
      %p58 = scmp.eq.s32.totalorder %s38, 0
      %p59 = por %p57, %p58
      %p60 = scmp.ne.s32.totalorder %s46, %s47
      %p61 = scmp.eq.s32.totalorder %s39, 1
      %p62 = por %p60, %p61
      %p64 = scmp.ne.s32.totalorder %s47, %s63
      %p65 = scmp.eq.s32.totalorder %s39, 0
      %p66 = por %p64, %p65
      %s67 = ssub.s32 %s33, %s40
      %p68 = scmp.eq.s32.totalorder %s67, 0
      %s70 = sadd.s32 %s69, 1
      %s71 = scalar_select %p68, %s69, %s70
      %p74 = pneg %p68
      %p75 = scmp.eq.s32.totalorder %s33, 1
      %p76 = por %p74, %p75
      %p77 = scmp.ne.s32.totalorder %s69, %s72
      %p78 = scmp.eq.s32.totalorder %s33, 0
      %p79 = por %p77, %p78
      %p80 = scmp.ne.s32.totalorder %s69, %s72
      %p81 = scmp.eq.s32.totalorder %s38, 1
      %p82 = por %p80, %p81
      %p83 = scmp.ne.s32.totalorder %s72, %s73
      %p84 = scmp.eq.s32.totalorder %s38, 0
      %p85 = por %p83, %p84
      %p86 = scmp.ne.s32.totalorder %s72, %s73
      %p87 = scmp.eq.s32.totalorder %s39, 1
      %p88 = por %p86, %p87
      %p90 = scmp.ne.s32.totalorder %s73, %s89
      %p91 = scmp.eq.s32.totalorder %s39, 0
      %p92 = por %p90, %p91
      %s94 = sadd.s32 %s93, 1
      %p97 = scmp.eq.s32.totalorder %s33, 1
      %p98 = scmp.ne.s32.totalorder %s93, %s95
      %p99 = scmp.eq.s32.totalorder %s33, 0
      %p100 = por %p98, %p99
      %p101 = scmp.ne.s32.totalorder %s93, %s95
      %p102 = scmp.eq.s32.totalorder %s38, 1
      %p103 = por %p101, %p102
      %p104 = scmp.ne.s32.totalorder %s95, %s96
      %p105 = scmp.eq.s32.totalorder %s38, 0
      %p106 = por %p104, %p105
      %p107 = scmp.ne.s32.totalorder %s95, %s96
      %p108 = scmp.eq.s32.totalorder %s39, 1
      %p109 = por %p107, %p108
      %p111 = scmp.ne.s32.totalorder %s96, %s110
      %p112 = scmp.eq.s32.totalorder %s39, 0
      %p113 = por %p111, %p112
      %s115 = sadd.s32 %s114, 1
      %p118 = scmp.eq.s32.totalorder %s33, 1
      %p119 = scmp.ne.s32.totalorder %s114, %s116
      %p120 = scmp.eq.s32.totalorder %s33, 0
      %p121 = por %p119, %p120
      %p122 = scmp.ne.s32.totalorder %s114, %s116
      %p123 = scmp.eq.s32.totalorder %s38, 1
      %p124 = por %p122, %p123
      %p125 = scmp.ne.s32.totalorder %s116, %s117
      %p126 = scmp.eq.s32.totalorder %s38, 0
      %p127 = por %p125, %p126
      %p128 = scmp.ne.s32.totalorder %s116, %s117
      %p129 = scmp.eq.s32.totalorder %s39, 1
      %p130 = por %p128, %p129
      %p132 = scmp.ne.s32.totalorder %s117, %s131
      %p133 = scmp.eq.s32.totalorder %s39, 0
      %p134 = por %p132, %p133
      %s136 = sadd.s32 %s135, 1
      %p139 = scmp.eq.s32.totalorder %s33, 1
      %p140 = scmp.ne.s32.totalorder %s135, %s137
      %p141 = scmp.eq.s32.totalorder %s33, 0
      %p142 = por %p140, %p141
      %p143 = scmp.ne.s32.totalorder %s135, %s137
      %p144 = scmp.eq.s32.totalorder %s38, 1
      %p145 = por %p143, %p144
      %p146 = scmp.ne.s32.totalorder %s137, %s138
      %p147 = scmp.eq.s32.totalorder %s38, 0
      %p148 = por %p146, %p147
      %p149 = scmp.ne.s32.totalorder %s137, %s138
      %p150 = scmp.eq.s32.totalorder %s39, 1
      %p151 = por %p149, %p150
      %p153 = scmp.ne.s32.totalorder %s138, %s152
      %p154 = scmp.eq.s32.totalorder %s39, 0
      %p155 = por %p153, %p154
      %s157 = sadd.s32 %s156, 1
      %p160 = scmp.eq.s32.totalorder %s33, 1
      %p161 = scmp.ne.s32.totalorder %s156, %s158
      %p162 = scmp.eq.s32.totalorder %s33, 0
      %p163 = por %p161, %p162
      %p164 = scmp.ne.s32.totalorder %s156, %s158
      %p165 = scmp.eq.s32.totalorder %s38, 1
      %p166 = por %p164, %p165
      %p167 = scmp.ne.s32.totalorder %s158, %s159
      %p168 = scmp.eq.s32.totalorder %s38, 0
      %p169 = por %p167, %p168
      %p170 = scmp.ne.s32.totalorder %s158, %s159
      %p171 = scmp.eq.s32.totalorder %s39, 1
      %p172 = por %p170, %p171
      %p174 = scmp.ne.s32.totalorder %s159, %s173
      %p175 = scmp.eq.s32.totalorder %s39, 0
      %p176 = por %p174, %p175
      %s178 = sadd.s32 %s177, 1
      %p181 = scmp.eq.s32.totalorder %s33, 1
      %p182 = scmp.ne.s32.totalorder %s177, %s179
      %p183 = scmp.eq.s32.totalorder %s33, 0
      %p184 = por %p182, %p183
      %p185 = scmp.ne.s32.totalorder %s177, %s179
      %p186 = scmp.eq.s32.totalorder %s38, 1
      %p187 = por %p185, %p186
      %p188 = scmp.ne.s32.totalorder %s179, %s180
      %p189 = scmp.eq.s32.totalorder %s38, 0
      %p190 = por %p188, %p189
      %p191 = scmp.ne.s32.totalorder %s179, %s180
      %p192 = scmp.eq.s32.totalorder %s39, 1
      %p193 = por %p191, %p192
      %p195 = scmp.ne.s32.totalorder %s180, %s194
      %p196 = scmp.eq.s32.totalorder %s39, 0
      %p197 = por %p195, %p196
      %s199 = sadd.s32 %s198, 1
      %p202 = scmp.eq.s32.totalorder %s33, 1
      %p203 = scmp.ne.s32.totalorder %s198, %s200
      %p204 = scmp.eq.s32.totalorder %s33, 0
      %p205 = por %p203, %p204
      %p206 = scmp.ne.s32.totalorder %s198, %s200
      %p207 = scmp.eq.s32.totalorder %s38, 1
      %p208 = por %p206, %p207
      %p209 = scmp.ne.s32.totalorder %s200, %s201
      %p210 = scmp.eq.s32.totalorder %s38, 0
      %p211 = por %p209, %p210
      %p212 = scmp.ne.s32.totalorder %s200, %s201
      %p213 = scmp.eq.s32.totalorder %s39, 1
      %p214 = por %p212, %p213
      %p216 = scmp.ne.s32.totalorder %s201, %s215
      %p217 = scmp.eq.s32.totalorder %s39, 0
      %p218 = por %p216, %p217
      %s220 = sadd.s32 %s219, 1
      %p223 = scmp.eq.s32.totalorder %s33, 1
      %p224 = scmp.ne.s32.totalorder %s219, %s221
      %p225 = scmp.eq.s32.totalorder %s33, 0
      %p226 = por %p224, %p225
      %p227 = scmp.ne.s32.totalorder %s219, %s221
      %p228 = scmp.eq.s32.totalorder %s38, 1
      %p229 = por %p227, %p228
      %p230 = scmp.ne.s32.totalorder %s221, %s222
      %p231 = scmp.eq.s32.totalorder %s38, 0
      %p232 = por %p230, %p231
      %p233 = scmp.ne.s32.totalorder %s221, %s222
      %p234 = scmp.eq.s32.totalorder %s39, 1
      %p235 = por %p233, %p234
      %p237 = scmp.ne.s32.totalorder %s222, %s236
      %p238 = scmp.eq.s32.totalorder %s39, 0
      %p239 = por %p237, %p238
      %s241 = sadd.s32 %s240, 1
      %p244 = scmp.eq.s32.totalorder %s33, 1
      %p245 = scmp.ne.s32.totalorder %s240, %s242
      %p246 = scmp.eq.s32.totalorder %s33, 0
      %p247 = por %p245, %p246
      %p248 = scmp.ne.s32.totalorder %s240, %s242
      %p249 = scmp.eq.s32.totalorder %s38, 1
      %p250 = por %p248, %p249
      %p251 = scmp.ne.s32.totalorder %s242, %s243
      %p252 = scmp.eq.s32.totalorder %s38, 0
      %p253 = por %p251, %p252
      %p254 = scmp.ne.s32.totalorder %s242, %s243
      %p255 = scmp.eq.s32.totalorder %s39, 1
      %p256 = por %p254, %p255
      %p258 = scmp.ne.s32.totalorder %s243, %s257
      %p259 = scmp.eq.s32.totalorder %s39, 0
      %p260 = por %p258, %p259
      %s262 = sadd.s32 %s261, 1
      %p265 = scmp.eq.s32.totalorder %s33, 1
      %p266 = scmp.ne.s32.totalorder %s261, %s263
      %p267 = scmp.eq.s32.totalorder %s33, 0
      %p268 = por %p266, %p267
      %p269 = scmp.ne.s32.totalorder %s261, %s263
      %p270 = scmp.eq.s32.totalorder %s38, 1
      %p271 = por %p269, %p270
      %p272 = scmp.ne.s32.totalorder %s263, %s264
      %p273 = scmp.eq.s32.totalorder %s38, 0
      %p274 = por %p272, %p273
      %p275 = scmp.ne.s32.totalorder %s263, %s264
      %p276 = scmp.eq.s32.totalorder %s39, 1
      %p277 = por %p275, %p276
      %p279 = scmp.ne.s32.totalorder %s264, %s278
      %p280 = scmp.eq.s32.totalorder %s39, 0
      %p281 = por %p279, %p280
      %s283 = sadd.s32 %s282, 1
      %p286 = scmp.eq.s32.totalorder %s33, 1
      %p287 = scmp.ne.s32.totalorder %s282, %s284
      %p288 = scmp.eq.s32.totalorder %s33, 0
      %p289 = por %p287, %p288
      %p290 = scmp.ne.s32.totalorder %s282, %s284
      %p291 = scmp.eq.s32.totalorder %s38, 1
      %p292 = por %p290, %p291
      %p293 = scmp.ne.s32.totalorder %s284, %s285
      %p294 = scmp.eq.s32.totalorder %s38, 0
      %p295 = por %p293, %p294
      %p296 = scmp.ne.s32.totalorder %s284, %s285
      %p297 = scmp.eq.s32.totalorder %s39, 1
      %p298 = por %p296, %p297
      %p300 = scmp.ne.s32.totalorder %s285, %s299
      %p301 = scmp.eq.s32.totalorder %s39, 0
      %p302 = por %p300, %p301
      %s304 = sadd.s32 %s303, 1
      %p307 = scmp.eq.s32.totalorder %s33, 1
      %p308 = scmp.ne.s32.totalorder %s303, %s305
      %p309 = scmp.eq.s32.totalorder %s33, 0
      %p310 = por %p308, %p309
      %p311 = scmp.ne.s32.totalorder %s303, %s305
      %p312 = scmp.eq.s32.totalorder %s38, 1
      %p313 = por %p311, %p312
      %p314 = scmp.ne.s32.totalorder %s305, %s306
      %p315 = scmp.eq.s32.totalorder %s38, 0
      %p316 = por %p314, %p315
      %p317 = scmp.ne.s32.totalorder %s305, %s306
      %p318 = scmp.eq.s32.totalorder %s39, 1
      %p319 = por %p317, %p318
      %p321 = scmp.ne.s32.totalorder %s306, %s320
      %p322 = scmp.eq.s32.totalorder %s39, 0
      %p323 = por %p321, %p322
      %s325 = sadd.s32 %s324, 1
      %p328 = scmp.eq.s32.totalorder %s33, 1
      %p329 = scmp.ne.s32.totalorder %s324, %s326
      %p330 = scmp.eq.s32.totalorder %s33, 0
      %p331 = por %p329, %p330
      %p332 = scmp.ne.s32.totalorder %s324, %s326
      %p333 = scmp.eq.s32.totalorder %s38, 1
      %p334 = por %p332, %p333
      %p335 = scmp.ne.s32.totalorder %s326, %s327
      %p336 = scmp.eq.s32.totalorder %s38, 0
      %p337 = por %p335, %p336
      %p338 = scmp.ne.s32.totalorder %s326, %s327
      %p339 = scmp.eq.s32.totalorder %s39, 1
      %p340 = por %p338, %p339
      %p342 = scmp.ne.s32.totalorder %s327, %s341
      %p343 = scmp.eq.s32.totalorder %s39, 0
      %p344 = por %p342, %p343
      %s346 = sadd.s32 %s345, 1
      %p349 = scmp.eq.s32.totalorder %s33, 1
      %p350 = scmp.ne.s32.totalorder %s345, %s347
      %p351 = scmp.eq.s32.totalorder %s33, 0
      %p352 = por %p350, %p351
      %p353 = scmp.ne.s32.totalorder %s345, %s347
      %p354 = scmp.eq.s32.totalorder %s38, 1
      %p355 = por %p353, %p354
      %p356 = scmp.ne.s32.totalorder %s347, %s348
      %p357 = scmp.eq.s32.totalorder %s38, 0
      %p358 = por %p356, %p357
      %p359 = scmp.ne.s32.totalorder %s347, %s348
      %p360 = scmp.eq.s32.totalorder %s39, 1
      %p361 = por %p359, %p360
      %p363 = scmp.ne.s32.totalorder %s348, %s362
      %p364 = scmp.eq.s32.totalorder %s39, 0
      %p365 = por %p363, %p364
      %s367 = sadd.s32 %s366, 1
      %p370 = scmp.eq.s32.totalorder %s33, 1
      %p371 = scmp.ne.s32.totalorder %s366, %s368
      %p372 = scmp.eq.s32.totalorder %s33, 0
      %p373 = por %p371, %p372
      %p374 = scmp.ne.s32.totalorder %s366, %s368
      %p375 = scmp.eq.s32.totalorder %s38, 1
      %p376 = por %p374, %p375
      %p377 = scmp.ne.s32.totalorder %s368, %s369
      %p378 = scmp.eq.s32.totalorder %s38, 0
      %p379 = por %p377, %p378
      %p380 = scmp.ne.s32.totalorder %s368, %s369
      %p381 = scmp.eq.s32.totalorder %s39, 1
      %p382 = por %p380, %p381
      %p384 = scmp.ne.s32.totalorder %s369, %s383
      %p385 = scmp.eq.s32.totalorder %s39, 0
      %p386 = por %p384, %p385
      %s388 = sadd.s32 %s387, 1
      %p391 = scmp.eq.s32.totalorder %s33, 1
      %p392 = scmp.ne.s32.totalorder %s387, %s389
      %p393 = scmp.eq.s32.totalorder %s33, 0
      %p394 = por %p392, %p393
      %p395 = scmp.ne.s32.totalorder %s387, %s389
      %p396 = scmp.eq.s32.totalorder %s38, 1
      %p397 = por %p395, %p396
      %p398 = scmp.ne.s32.totalorder %s389, %s390
      %p399 = scmp.eq.s32.totalorder %s38, 0
      %p400 = por %p398, %p399
      %p401 = scmp.ne.s32.totalorder %s389, %s390
      %p402 = scmp.eq.s32.totalorder %s39, 1
      %p403 = por %p401, %p402
      %p405 = scmp.ne.s32.totalorder %s390, %s404
      %p406 = scmp.eq.s32.totalorder %s39, 0
      %p407 = por %p405, %p406
      %s409 = sadd.s32 %s408, 1
      %p412 = scmp.eq.s32.totalorder %s33, 1
      %p413 = scmp.ne.s32.totalorder %s408, %s410
      %p414 = scmp.eq.s32.totalorder %s33, 0
      %p415 = por %p413, %p414
      %p416 = scmp.ne.s32.totalorder %s408, %s410
      %p417 = scmp.eq.s32.totalorder %s38, 1
      %p418 = por %p416, %p417
      %p419 = scmp.ne.s32.totalorder %s410, %s411
      %p420 = scmp.eq.s32.totalorder %s38, 0
      %p421 = por %p419, %p420
      %p422 = scmp.ne.s32.totalorder %s410, %s411
      %p423 = scmp.eq.s32.totalorder %s39, 1
      %p424 = por %p422, %p423
      %p426 = scmp.ne.s32.totalorder %s411, %s425
      %p427 = scmp.eq.s32.totalorder %s39, 0
      %p428 = por %p426, %p427
      %s430 = sadd.s32 %s429, 1
      %p433 = scmp.eq.s32.totalorder %s33, 1
      %p434 = scmp.ne.s32.totalorder %s429, %s431
      %p435 = scmp.eq.s32.totalorder %s33, 0
      %p436 = por %p434, %p435
      %p437 = scmp.ne.s32.totalorder %s429, %s431
      %p438 = scmp.eq.s32.totalorder %s38, 1
      %p439 = por %p437, %p438
      %p440 = scmp.ne.s32.totalorder %s431, %s432
      %p441 = scmp.eq.s32.totalorder %s38, 0
      %p442 = por %p440, %p441
      %p443 = scmp.ne.s32.totalorder %s431, %s432
      %p444 = scmp.eq.s32.totalorder %s39, 1
      %p445 = por %p443, %p444
      %p447 = scmp.ne.s32.totalorder %s432, %s446
      %p448 = scmp.eq.s32.totalorder %s39, 0
      %p449 = por %p447, %p448
      %s451 = sadd.s32 %s450, 1
      %p454 = scmp.eq.s32.totalorder %s33, 1
      %p455 = scmp.ne.s32.totalorder %s450, %s452
      %p456 = scmp.eq.s32.totalorder %s33, 0
      %p457 = por %p455, %p456
      %p458 = scmp.ne.s32.totalorder %s450, %s452
      %p459 = scmp.eq.s32.totalorder %s38, 1
      %p460 = por %p458, %p459
      %p461 = scmp.ne.s32.totalorder %s452, %s453
      %p462 = scmp.eq.s32.totalorder %s38, 0
      %p463 = por %p461, %p462
      %p464 = scmp.ne.s32.totalorder %s452, %s453
      %p465 = scmp.eq.s32.totalorder %s39, 1
      %p466 = por %p464, %p465
      %p468 = scmp.ne.s32.totalorder %s453, %s467
      %p469 = scmp.eq.s32.totalorder %s39, 0
      %p470 = por %p468, %p469
      %s472 = sadd.s32 %s471, 1
      %p475 = scmp.eq.s32.totalorder %s33, 1
      %p476 = scmp.ne.s32.totalorder %s471, %s473
      %p477 = scmp.eq.s32.totalorder %s33, 0
      %p478 = por %p476, %p477
      %p479 = scmp.ne.s32.totalorder %s471, %s473
      %p480 = scmp.eq.s32.totalorder %s38, 1
      %p481 = por %p479, %p480
      %p482 = scmp.ne.s32.totalorder %s473, %s474
      %p483 = scmp.eq.s32.totalorder %s38, 0
      %p484 = por %p482, %p483
      %p485 = scmp.ne.s32.totalorder %s473, %s474
      %p486 = scmp.eq.s32.totalorder %s39, 1
      %p487 = por %p485, %p486
      %p489 = scmp.ne.s32.totalorder %s474, %s488
      %p490 = scmp.eq.s32.totalorder %s39, 0
      %p491 = por %p489, %p490
      %s493 = sadd.s32 %s492, 1
      %p496 = scmp.eq.s32.totalorder %s33, 1
      %p497 = scmp.ne.s32.totalorder %s492, %s494
      %p498 = scmp.eq.s32.totalorder %s33, 0
      %p499 = por %p497, %p498
      %p500 = scmp.ne.s32.totalorder %s492, %s494
      %p501 = scmp.eq.s32.totalorder %s38, 1
      %p502 = por %p500, %p501
      %p503 = scmp.ne.s32.totalorder %s494, %s495
      %p504 = scmp.eq.s32.totalorder %s38, 0
      %p505 = por %p503, %p504
      %p506 = scmp.ne.s32.totalorder %s494, %s495
      %p507 = scmp.eq.s32.totalorder %s39, 1
      %p508 = por %p506, %p507
      %p510 = scmp.ne.s32.totalorder %s495, %s509
      %p511 = scmp.eq.s32.totalorder %s39, 0
      %p512 = por %p510, %p511
      %s513 = ssub.s32 %s33, %s40
      %p514 = scmp.eq.s32.totalorder %s513, 0
      %s516 = sadd.s32 %s515, 1
      %s517 = scalar_select %p514, %s515, %s516
      %p520 = pneg %p514
      %p521 = scmp.eq.s32.totalorder %s33, 1
      %p522 = por %p520, %p521
      %p523 = scmp.ne.s32.totalorder %s515, %s518
      %p524 = scmp.eq.s32.totalorder %s33, 0
      %p525 = por %p523, %p524
      %p526 = scmp.ne.s32.totalorder %s515, %s518
      %p527 = scmp.eq.s32.totalorder %s38, 1
      %p528 = por %p526, %p527
      %p529 = scmp.ne.s32.totalorder %s518, %s519
      %p530 = scmp.eq.s32.totalorder %s38, 0
      %p531 = por %p529, %p530
      %p532 = scmp.ne.s32.totalorder %s518, %s519
      %p533 = scmp.eq.s32.totalorder %s39, 1
      %p534 = por %p532, %p533
      %p536 = scmp.ne.s32.totalorder %s519, %s535
      %p537 = scmp.eq.s32.totalorder %s39, 0
      %p538 = por %p536, %p537
      %p539 = scmp.le.s32.totalorder 1, %s33
      %p540 = scmp.lt.s32.totalorder %s33, 3
      %p541 = pnand %p539, %p540
      %p542 = pneg %p541
      // Predicated region
      $region9: #{cl_for_classification_forward.1} parent=5 // pred_check
        _
      $region10: #{cl_for_classification_forward.1} parent=5 // pred_check_branch
        %544 = sbr.rel (%p541) target = $region12
      $region11: #{cl_for_classification_forward.1} parent=5 // pred_region
        %s545 = ssub.s32 %s33, 1
        // Predicated region
        $region13: #{cl_for_classification_forward.1} parent=11 // pred_check
          %p546 = pneg %p106
        $region14: #{cl_for_classification_forward.1} parent=11 // pred_check_branch
          %548 = sbr.rel (%p546) target = $region16
        $region15: #{cl_for_classification_forward.1} parent=11 // pred_region
          _
        $region16: #{cl_for_classification_forward.1} parent=11 // pred_fallthru
          _
        // Predicated region
        $region17: #{cl_for_classification_forward.1} parent=11 // pred_check
          %p549 = pneg %p127
        $region18: #{cl_for_classification_forward.1} parent=11 // pred_check_branch
          %551 = sbr.rel (%p549) target = $region20
        $region19: #{cl_for_classification_forward.1} parent=11 // pred_region
          _
        $region20: #{cl_for_classification_forward.1} parent=11 // pred_fallthru
          _
        // Predicated region
        $region21: #{cl_for_classification_forward.1} parent=11 // pred_check
          %p552 = pneg %p148
        $region22: #{cl_for_classification_forward.1} parent=11 // pred_check_branch
          %554 = sbr.rel (%p552) target = $region24
        $region23: #{cl_for_classification_forward.1} parent=11 // pred_region
          _
        $region24: #{cl_for_classification_forward.1} parent=11 // pred_fallthru
          _
        // Predicated region
        $region25: #{cl_for_classification_forward.1} parent=11 // pred_check
          %p555 = pneg %p169
        $region26: #{cl_for_classification_forward.1} parent=11 // pred_check_branch
          %557 = sbr.rel (%p555) target = $region28
        $region27: #{cl_for_classification_forward.1} parent=11 // pred_region
          _
        $region28: #{cl_for_classification_forward.1} parent=11 // pred_fallthru
          _
        // Predicated region
        $region29: #{cl_for_classification_forward.1} parent=11 // pred_check
          %p558 = pneg %p190
        $region30: #{cl_for_classification_forward.1} parent=11 // pred_check_branch
          %560 = sbr.rel (%p558) target = $region32
        $region31: #{cl_for_classification_forward.1} parent=11 // pred_region
          %562 = vsyncadd [#allocation3], 0
          %s563 = sshll.u32 %s6, 4
          %s564 = int_to_ptr.hbm [resolvable:$true] %s563
          %s565 = sshll.u32 [#allocation2], 4
          %s566 = int_to_ptr.vmem [resolvable:$true] %s565
          %571 = dma.hbm_to_vmem [thread:$0]  %s564, 2048, %s566, [#allocation3], 64, 64, 4
        $region32: #{cl_for_classification_forward.1} parent=11 // pred_fallthru
          _
        // Predicated region
        $region33: #{cl_for_classification_forward.1} parent=11 // pred_check
          %p572 = pneg %p211
        $region34: #{cl_for_classification_forward.1} parent=11 // pred_check_branch
          %574 = sbr.rel (%p572) target = $region36
        $region35: #{cl_for_classification_forward.1} parent=11 // pred_region
          _
        $region36: #{cl_for_classification_forward.1} parent=11 // pred_fallthru
          _
        // Predicated region
        $region37: #{cl_for_classification_forward.1} parent=11 // pred_check
          %p575 = pneg %p232
        $region38: #{cl_for_classification_forward.1} parent=11 // pred_check_branch
          %577 = sbr.rel (%p575) target = $region40
        $region39: #{cl_for_classification_forward.1} parent=11 // pred_region
          _
        $region40: #{cl_for_classification_forward.1} parent=11 // pred_fallthru
          _
        // Predicated region
        $region41: #{cl_for_classification_forward.1} parent=11 // pred_check
          %p578 = pneg %p253
        $region42: #{cl_for_classification_forward.1} parent=11 // pred_check_branch
          %580 = sbr.rel (%p578) target = $region44
        $region43: #{cl_for_classification_forward.1} parent=11 // pred_region
          _
        $region44: #{cl_for_classification_forward.1} parent=11 // pred_fallthru
          _
        // Predicated region
        $region45: #{cl_for_classification_forward.1} parent=11 // pred_check
          %p581 = pneg %p274
        $region46: #{cl_for_classification_forward.1} parent=11 // pred_check_branch
          %583 = sbr.rel (%p581) target = $region48
        $region47: #{cl_for_classification_forward.1} parent=11 // pred_region
          %585 = vsyncadd [#allocation5], 0
          %s586 = sshll.u32 %s10, 4
          %s587 = int_to_ptr.hbm [resolvable:$true] %s586
          %s588 = sshll.u32 [#allocation4], 4
          %s589 = int_to_ptr.vmem [resolvable:$true] %s588
          %594 = dma.hbm_to_vmem [thread:$0]  %s587, 4096, %s589, [#allocation5], 128, 128, 8
        $region48: #{cl_for_classification_forward.1} parent=11 // pred_fallthru
          _
        // Predicated region
        $region49: #{cl_for_classification_forward.1} parent=11 // pred_check
          %p595 = pneg %p295
        $region50: #{cl_for_classification_forward.1} parent=11 // pred_check_branch
          %597 = sbr.rel (%p595) target = $region52
        $region51: #{cl_for_classification_forward.1} parent=11 // pred_region
          _
        $region52: #{cl_for_classification_forward.1} parent=11 // pred_fallthru
          _
        // Predicated region
        $region53: #{cl_for_classification_forward.1} parent=11 // pred_check
          %p598 = pneg %p316
        $region54: #{cl_for_classification_forward.1} parent=11 // pred_check_branch
          %600 = sbr.rel (%p598) target = $region56
        $region55: #{cl_for_classification_forward.1} parent=11 // pred_region
          %602 = vsyncadd [#allocation5], 0
          %s603 = sshll.u32 %s12, 4
          %s604 = int_to_ptr.hbm [resolvable:$true] %s603
          %s605 = sshll.u32 [#allocation6], 4
          %s606 = int_to_ptr.vmem [resolvable:$true] %s605
          %611 = dma.hbm_to_vmem [thread:$0]  %s604, 4096, %s606, [#allocation5], 64, 64, 4
        $region56: #{cl_for_classification_forward.1} parent=11 // pred_fallthru
          _
        // Predicated region
        $region57: #{cl_for_classification_forward.1} parent=11 // pred_check
          %p612 = pneg %p337
        $region58: #{cl_for_classification_forward.1} parent=11 // pred_check_branch
          %614 = sbr.rel (%p612) target = $region60
        $region59: #{cl_for_classification_forward.1} parent=11 // pred_region
          _
        $region60: #{cl_for_classification_forward.1} parent=11 // pred_fallthru
          _
        // Predicated region
        $region61: #{cl_for_classification_forward.1} parent=11 // pred_check
          %p615 = pneg %p358
        $region62: #{cl_for_classification_forward.1} parent=11 // pred_check_branch
          %617 = sbr.rel (%p615) target = $region64
        $region63: #{cl_for_classification_forward.1} parent=11 // pred_region
          _
        $region64: #{cl_for_classification_forward.1} parent=11 // pred_fallthru
          _
        // Predicated region
        $region65: #{cl_for_classification_forward.1} parent=11 // pred_check
          %p618 = pneg %p379
        $region66: #{cl_for_classification_forward.1} parent=11 // pred_check_branch
          %620 = sbr.rel (%p618) target = $region68
        $region67: #{cl_for_classification_forward.1} parent=11 // pred_region
          %622 = vsyncadd [#allocation8], 0
          %s623 = sshll.u32 %s15, 4
          %s624 = int_to_ptr.hbm [resolvable:$true] %s623
          %s625 = sshll.u32 [#allocation7], 4
          %s626 = int_to_ptr.vmem [resolvable:$true] %s625
          %631 = dma.hbm_to_vmem [thread:$0]  %s624, 32, %s626, [#allocation8], 16, 16, 1
        $region68: #{cl_for_classification_forward.1} parent=11 // pred_fallthru
          _
        // Predicated region
        $region69: #{cl_for_classification_forward.1} parent=11 // pred_check
          %p632 = pneg %p400
        $region70: #{cl_for_classification_forward.1} parent=11 // pred_check_branch
          %634 = sbr.rel (%p632) target = $region72
        $region71: #{cl_for_classification_forward.1} parent=11 // pred_region
          %636 = vsyncadd [#allocation8], 0
          %s637 = sshll.u32 %s16, 4
          %s638 = int_to_ptr.hbm [resolvable:$true] %s637
          %s639 = sshll.u32 [#allocation9], 4
          %s640 = int_to_ptr.vmem [resolvable:$true] %s639
          %645 = dma.hbm_to_vmem [thread:$0]  %s638, 1024, %s640, [#allocation8], 64, 64, 4
        $region72: #{cl_for_classification_forward.1} parent=11 // pred_fallthru
          _
        // Predicated region
        $region73: #{cl_for_classification_forward.1} parent=11 // pred_check
          %p646 = pneg %p421
        $region74: #{cl_for_classification_forward.1} parent=11 // pred_check_branch
          %648 = sbr.rel (%p646) target = $region76
        $region75: #{cl_for_classification_forward.1} parent=11 // pred_region
          %650 = vsyncadd [#allocation11], 0
          %s652 = sshll.u32 %s17, 4
          %s653 = int_to_ptr.hbm [resolvable:$true] %s652
          %s654 = sshll.u32 [#allocation10], 4
          %s655 = int_to_ptr.vmem [resolvable:$true] %s654
          %657 = dma.hbm_to_vmem [thread:$0]  %s653, 16, %s655, [#allocation11]
        $region76: #{cl_for_classification_forward.1} parent=11 // pred_fallthru
          _
        // Predicated region
        $region77: #{cl_for_classification_forward.1} parent=11 // pred_check
          %p658 = pneg %p442
        $region78: #{cl_for_classification_forward.1} parent=11 // pred_check_branch
          %660 = sbr.rel (%p658) target = $region80
        $region79: #{cl_for_classification_forward.1} parent=11 // pred_region
          %662 = vsyncadd [#allocation11], 0
          %s663 = sshll.u32 %s18, 4
          %s664 = int_to_ptr.hbm [resolvable:$true] %s663
          %s665 = sshll.u32 [#allocation12], 4
          %s666 = int_to_ptr.vmem [resolvable:$true] %s665
          %671 = dma.hbm_to_vmem [thread:$0]  %s664, 9216, %s666, [#allocation11], 192, 192, 12
        $region80: #{cl_for_classification_forward.1} parent=11 // pred_fallthru
          _
        // Predicated region
        $region81: #{cl_for_classification_forward.1} parent=11 // pred_check
          %p672 = pneg %p463
        $region82: #{cl_for_classification_forward.1} parent=11 // pred_check_branch
          %674 = sbr.rel (%p672) target = $region84
        $region83: #{cl_for_classification_forward.1} parent=11 // pred_region
          _
        $region84: #{cl_for_classification_forward.1} parent=11 // pred_fallthru
          _
        // Predicated region
        $region85: #{cl_for_classification_forward.1} parent=11 // pred_check
          %p675 = pneg %p484
        $region86: #{cl_for_classification_forward.1} parent=11 // pred_check_branch
          %677 = sbr.rel (%p675) target = $region88
        $region87: #{cl_for_classification_forward.1} parent=11 // pred_region
          %679 = vsyncadd [#allocation14], 0
          %s680 = sshll.u32 %s20, 4
          %s681 = int_to_ptr.hbm [resolvable:$true] %s680
          %s682 = sshll.u32 [#allocation13], 4
          %s683 = int_to_ptr.vmem [resolvable:$true] %s682
          %688 = dma.hbm_to_vmem [thread:$0]  %s681, 3072, %s683, [#allocation14], 64, 64, 4
        $region88: #{cl_for_classification_forward.1} parent=11 // pred_fallthru
          _
        // Predicated region
        $region89: #{cl_for_classification_forward.1} parent=11 // pred_check
          %p689 = pneg %p505
        $region90: #{cl_for_classification_forward.1} parent=11 // pred_check_branch
          %691 = sbr.rel (%p689) target = $region92
        $region91: #{cl_for_classification_forward.1} parent=11 // pred_region
          _
        $region92: #{cl_for_classification_forward.1} parent=11 // pred_fallthru
          _
      $region12: #{cl_for_classification_forward.1} parent=5 // pred_fallthru
        _
      %p692 = scmp.lt.s32.totalorder %s33, 2
      // Predicated region
      $region93: #{cl_for_classification_forward.1} parent=5 // pred_check
        %p693 = pneg %p692
      $region94: #{cl_for_classification_forward.1} parent=5 // pred_check_branch
        %695 = sbr.rel (%p693) target = $region96
      $region95: #{cl_for_classification_forward.1} parent=5 // pred_region
        // Predicated region
        $region97: #{cl_for_classification_forward.1} parent=95 // pred_check
          %p696 = pneg %p53
        $region98: #{cl_for_classification_forward.1} parent=95 // pred_check_branch
          %698 = sbr.rel (%p696) target = $region100
        $region99: #{cl_for_classification_forward.1} parent=95 // pred_region
          %s699 = smul.u32 2, %s33
          %p700 = scmp.lt.s32.totalorder %s699, 3
          %s701 = scalar_select %p700, %s699, 3
          %s702 = smul.addr %s701, 8
          %s703 = scalar_lea.vmem %s0, %s702
          %s704 = smul.u32 2, %s33
        $region100: #{cl_for_classification_forward.1} parent=95 // pred_fallthru
          _
        // Predicated region
        $region101: #{cl_for_classification_forward.1} parent=95 // pred_check
          %p705 = pneg %p79
        $region102: #{cl_for_classification_forward.1} parent=95 // pred_check_branch
          %707 = sbr.rel (%p705) target = $region104
        $region103: #{cl_for_classification_forward.1} parent=95 // pred_region
          %s708 = smul.u32 2, %s33
          %p709 = scmp.lt.s32.totalorder %s708, 3
          %s710 = scalar_select %p709, %s708, 3
          %s711 = scalar_lea.vmem %s1, %s710
          %s712 = smul.u32 2, %s33
        $region104: #{cl_for_classification_forward.1} parent=95 // pred_fallthru
          _
      $region96: #{cl_for_classification_forward.1} parent=5 // pred_fallthru
        _
      %p713 = scmp.le.s32.totalorder 1, %s33
      %p714 = scmp.lt.s32.totalorder %s33, 3
      %p715 = pnand %p713, %p714
      %p716 = pneg %p715
      // Predicated region
      $region105: #{cl_for_classification_forward.1} parent=5 // pred_check
        _
      $region106: #{cl_for_classification_forward.1} parent=5 // pred_check_branch
        %718 = sbr.rel (%p715) target = $region108
      $region107: #{cl_for_classification_forward.1} parent=5 // pred_region
        %s719 = ssub.s32 %s33, 1
        // Predicated region
        $region109: #{cl_for_classification_forward.1} parent=107 // pred_check
          %p720 = pneg %p190
        $region110: #{cl_for_classification_forward.1} parent=107 // pred_check_branch
          %722 = sbr.rel (%p720) target = $region112
        $region111: #{cl_for_classification_forward.1} parent=107 // pred_region
          %724 = dma.done [#allocation3], 2048
        $region112: #{cl_for_classification_forward.1} parent=107 // pred_fallthru
          _
        // Predicated region
        $region113: #{cl_for_classification_forward.1} parent=107 // pred_check
          %p725 = pneg %p274
        $region114: #{cl_for_classification_forward.1} parent=107 // pred_check_branch
          %727 = sbr.rel (%p725) target = $region116
        $region115: #{cl_for_classification_forward.1} parent=107 // pred_region
          %729 = dma.done [#allocation5], 4096
        $region116: #{cl_for_classification_forward.1} parent=107 // pred_fallthru
          _
        // Predicated region
        $region117: #{cl_for_classification_forward.1} parent=107 // pred_check
          %p730 = pneg %p316
        $region118: #{cl_for_classification_forward.1} parent=107 // pred_check_branch
          %732 = sbr.rel (%p730) target = $region120
        $region119: #{cl_for_classification_forward.1} parent=107 // pred_region
          %734 = dma.done [#allocation5], 4096
        $region120: #{cl_for_classification_forward.1} parent=107 // pred_fallthru
          _
        // Predicated region
        $region121: #{cl_for_classification_forward.1} parent=107 // pred_check
          %p735 = pneg %p379
        $region122: #{cl_for_classification_forward.1} parent=107 // pred_check_branch
          %737 = sbr.rel (%p735) target = $region124
        $region123: #{cl_for_classification_forward.1} parent=107 // pred_region
          %739 = dma.done [#allocation8], 32
        $region124: #{cl_for_classification_forward.1} parent=107 // pred_fallthru
          _
        // Predicated region
        $region125: #{cl_for_classification_forward.1} parent=107 // pred_check
          %p740 = pneg %p400
        $region126: #{cl_for_classification_forward.1} parent=107 // pred_check_branch
          %742 = sbr.rel (%p740) target = $region128
        $region127: #{cl_for_classification_forward.1} parent=107 // pred_region
          %744 = dma.done [#allocation8], 1024
        $region128: #{cl_for_classification_forward.1} parent=107 // pred_fallthru
          _
        // Predicated region
        $region129: #{cl_for_classification_forward.1} parent=107 // pred_check
          %p745 = pneg %p421
        $region130: #{cl_for_classification_forward.1} parent=107 // pred_check_branch
          %747 = sbr.rel (%p745) target = $region132
        $region131: #{cl_for_classification_forward.1} parent=107 // pred_region
          %749 = dma.done [#allocation11], 16
        $region132: #{cl_for_classification_forward.1} parent=107 // pred_fallthru
          _
        // Predicated region
        $region133: #{cl_for_classification_forward.1} parent=107 // pred_check
          %p750 = pneg %p442
        $region134: #{cl_for_classification_forward.1} parent=107 // pred_check_branch
          %752 = sbr.rel (%p750) target = $region136
        $region135: #{cl_for_classification_forward.1} parent=107 // pred_region
          %754 = dma.done [#allocation11], 9216
        $region136: #{cl_for_classification_forward.1} parent=107 // pred_fallthru
          _
        // Predicated region
        $region137: #{cl_for_classification_forward.1} parent=107 // pred_check
          %p755 = pneg %p484
        $region138: #{cl_for_classification_forward.1} parent=107 // pred_check_branch
          %757 = sbr.rel (%p755) target = $region140
        $region139: #{cl_for_classification_forward.1} parent=107 // pred_region
          %759 = dma.done [#allocation14], 3072
        $region140: #{cl_for_classification_forward.1} parent=107 // pred_fallthru
          _
        %s760 = smul.u32 2, %s38
        %p761 = scmp.lt.s32.totalorder %s760, 3
        %s762 = scalar_select %p761, %s760, 3
        %s763 = smul.addr %s762, 8
        %s764 = scalar_lea.vmem %s0, %s763
        %p765 = pneg %p59
        %p766 = pneg %p56
        %s767 = smul.u32 2, %s38
        %p768 = scmp.lt.s32.totalorder %s767, 3
        %s769 = scalar_select %p768, %s767, 3
        %s770 = scalar_lea.vmem %s1, %s769
        %p771 = pneg %p85
        %p772 = pneg %p82
        %p773 = pneg %p106
        %p774 = pneg %p103
        %p775 = pneg %p127
        %p776 = pneg %p124
        %p777 = pneg %p148
        %p778 = pneg %p145
        %p779 = pneg %p169
        %p780 = pneg %p166
        %p781 = pneg %p190
        %p782 = pneg %p187
        %p783 = pneg %p211
        %p784 = pneg %p208
        %p785 = pneg %p232
        %p786 = pneg %p229
        %p787 = pneg %p253
        %p788 = pneg %p250
        %p789 = pneg %p274
        %p790 = pneg %p271
        %p791 = pneg %p295
        %p792 = pneg %p292
        %p793 = pneg %p316
        %p794 = pneg %p313
        %p795 = pneg %p337
        %p796 = pneg %p334
        %p797 = pneg %p358
        %p798 = pneg %p355
        %p799 = pneg %p379
        %p800 = pneg %p376
        %p801 = pneg %p400
        %p802 = pneg %p397
        %p803 = pneg %p421
        %p804 = pneg %p418
        %p805 = pneg %p442
        %p806 = pneg %p439
        %p807 = pneg %p463
        %p808 = pneg %p460
        %p809 = pneg %p484
        %p810 = pneg %p481
        %p811 = pneg %p505
        %p812 = pneg %p502
        %p813 = pneg %p531
        %p814 = pneg %p528
        %p815 = scmp.lt.s32.totalorder %s38, 1
        %s816 = scalar_select %p815, %s38, 1
        %s817 = scalar_lea.vmem %s22, %s816
        %s818 = smul.u32 2, %s38
        %p819 = scmp.lt.s32.totalorder %s818, 3
        %s820 = scalar_select %p819, %s818, 3
        %s821 = smul.addr %s820, 8
        %s822 = scalar_lea.vmem %s0, %s821
        %s823 = smul.u32 2, %s38
        %s824 = smul.u32 2, %s38
        %p825 = scmp.lt.s32.totalorder %s824, 3
        %s826 = scalar_select %p825, %s824, 3
        %s827 = scalar_lea.vmem %s1, %s826
        %s828 = smul.u32 2, %s38
        %p829 = scmp.lt.s32.totalorder %s38, 1
        %s830 = scalar_select %p829, %s38, 1
        %s831 = scalar_lea.vmem %s22, %s830
        %v833 = vld [vmem:[%s822] sm:$0xff]
        %v834 = vld [vmem:[%s822 + $0x8] sm:$0xff]
        %v835 = vld [vmem:[%s2] sm:$0x1]
        %v836 = vld [vmem:[%s3] sm:$0x1]
        %837 = vadd.xlane.f32.xlu0 %v833
        %v838 = vpop.xlane.xlu0 %837
        %839 = vadd.xlane.f32.xlu0 %v834
        %v840 = vpop.xlane.xlu0 %839
        %v841 = vrcp.pop 128.0
        %v842 = vmul.f32 128.0, %v841
        %v843 = vsub.f32 1.0, %v842
        %v844 = vmul.f32 %v841, %v843
        %v845 = vadd.f32 %v841, %v844
        %vm846 = vweird.f32 %v841
        %v847 = vsel %vm846, %v841, %v845
        %v848 = vmul.f32 %v838, %v847
        %v849 = vmul.f32 %v840, %v847
        %v850 = vsub.f32 %v833, %v848
        %v851 = vsub.f32 %v834, %v849
        %v852 = vmul.f32 %v850, %v850
        %v853 = vmul.f32 %v851, %v851
        %854 = vadd.xlane.f32.xlu0 %v852
        %v855 = vpop.xlane.xlu0 %854
        %856 = vadd.xlane.f32.xlu0 %v853
        %v857 = vpop.xlane.xlu0 %856
        %v858 = vmul.f32 %v855, %v847
        %v859 = vmul.f32 %v857, %v847
        %v860 = vadd.f32 %v858, 1e-12
        %v861 = vadd.f32 %v859, 1e-12
        %v862 = vrsqrt.pop %v860
        %v863 = vmul.f32 %v862, %v860
        %v864 = vmul.f32 %v863, %v862
        %v865 = vmul.f32 0.5, %v864
        %v866 = vsub.f32 1.5, %v865
        %v867 = vmul.f32 %v862, %v866
        %vm868 = vweird.f32 %v860
        %vm869 = vweird.f32 %v862
        %vm870 = vmor %vm868, %vm869
        %v871 = vsel %vm870, %v862, %v867
        %v872 = vrsqrt.pop %v861
        %v873 = vmul.f32 %v872, %v861
        %v874 = vmul.f32 %v873, %v872
        %v875 = vmul.f32 0.5, %v874
        %v876 = vsub.f32 1.5, %v875
        %v877 = vmul.f32 %v872, %v876
        %vm878 = vweird.f32 %v861
        %vm879 = vweird.f32 %v872
        %vm880 = vmor %vm878, %vm879
        %v881 = vsel %vm880, %v872, %v877
        %v882 = vmul.f32 %v850, %v871
        %v883 = vmul.f32 %v851, %v881
        %v885 = vperm.slane %v835, 0
        %v887 = vmul.f32 %v882, %v885
        %v888 = vmul.f32 %v883, %v885
        %v890 = vperm.slane %v836, 0
        %v892 = vadd.f32 %v887, %v890
        %v893 = vadd.f32 %v888, %v890
        %v894 = vld [vmem:[%s827] sm:$0x1]
        %v895 = vld [vmem:[%s827 + $0x1] sm:$0x1]
        %v898 = vperm.slane %v894, 0
        %v899 = vperm.slane %v895, 0
        %v902 = vpack.c.bf16 %v893, %v892
        %v903 = vld [vmem:[%s4] sm:$0xff]
        %v904 = vld [vmem:[%s4 + $0x8] sm:$0xf]
        %v905 = vld [vmem:[%s4 + $0xc] sm:$0xff]
        %v906 = vld [vmem:[%s4 + $0x14] sm:$0xf]
        %v907 = vld [vmem:[%s4 + $0x18] sm:$0xff]
        %v908 = vld [vmem:[%s4 + $0x20] sm:$0xf]
        %v909 = vld [vmem:[%s4 + $0x24] sm:$0xff]
        %v910 = vld [vmem:[%s4 + $0x2c] sm:$0xf]
        %v911 = vld [vmem:[%s4 + $0x30] sm:$0xff]
        %v912 = vld [vmem:[%s4 + $0x38] sm:$0xf]
        %v913 = vld [vmem:[%s4 + $0x3c] sm:$0xff]
        %v914 = vld [vmem:[%s4 + $0x44] sm:$0xf]
        %v915 = vld [vmem:[%s4 + $0x48] sm:$0xff]
        %v916 = vld [vmem:[%s4 + $0x50] sm:$0xf]
        %v917 = vld [vmem:[%s4 + $0x54] sm:$0xff]
        %v918 = vld [vmem:[%s4 + $0x5c] sm:$0xf]
        %v919 = vld [vmem:[%s4 + $0x60] sm:$0xff]
        %v920 = vld [vmem:[%s4 + $0x68] sm:$0xf]
        %v921 = vld [vmem:[%s4 + $0x6c] sm:$0xff]
        %v922 = vld [vmem:[%s4 + $0x74] sm:$0xf]
        %v923 = vld [vmem:[%s4 + $0x78] sm:$0xff]
        %v924 = vld [vmem:[%s4 + $0x80] sm:$0xf]
        %v925 = vld [vmem:[%s4 + $0x84] sm:$0xff]
        %v926 = vld [vmem:[%s4 + $0x8c] sm:$0xf]
        %v927 = vld [vmem:[%s4 + $0x90] sm:$0xff]
        %v928 = vld [vmem:[%s4 + $0x98] sm:$0xf]
        %v929 = vld [vmem:[%s4 + $0x9c] sm:$0xff]
        %v930 = vld [vmem:[%s4 + $0xa4] sm:$0xf]
        %v931 = vld [vmem:[%s4 + $0xa8] sm:$0xff]
        %v932 = vld [vmem:[%s4 + $0xb0] sm:$0xf]
        %v933 = vld [vmem:[%s4 + $0xb4] sm:$0xff]
        %v934 = vld [vmem:[%s4 + $0xbc] sm:$0xf]
        %v935 = vld [vmem:[%s5] sm:$0x7]
        %v937 = vperm.slane %v935, 0
        %v938 = vperm.slane %v935, 1
        %v939 = vperm.slane %v935, 2
        %v975 = vunpack.c.l.b16 %v903
        %v976 = vunpack.c.h.b16 %v903
        %v977 = vunpack.c.l.b16 %v904
        %v978 = vunpack.c.l.b16 %v905
        %v979 = vunpack.c.h.b16 %v905
        %v980 = vunpack.c.l.b16 %v906
        %v981 = vunpack.c.l.b16 %v907
        %v982 = vunpack.c.h.b16 %v907
        %v983 = vunpack.c.l.b16 %v908
        %v984 = vunpack.c.l.b16 %v909
        %v985 = vunpack.c.h.b16 %v909
        %v986 = vunpack.c.l.b16 %v910
        %v987 = vunpack.c.l.b16 %v911
        %v988 = vunpack.c.h.b16 %v911
        %v989 = vunpack.c.l.b16 %v912
        %v990 = vunpack.c.l.b16 %v913
        %v991 = vunpack.c.h.b16 %v913
        %v992 = vunpack.c.l.b16 %v914
        %v993 = vunpack.c.l.b16 %v915
        %v994 = vunpack.c.h.b16 %v915
        %v995 = vunpack.c.l.b16 %v916
        %v996 = vunpack.c.l.b16 %v917
        %v997 = vunpack.c.h.b16 %v917
        %v998 = vunpack.c.l.b16 %v918
        %v999 = vunpack.c.l.b16 %v919
        %v1000 = vunpack.c.h.b16 %v919
        %v1001 = vunpack.c.l.b16 %v920
        %v1002 = vunpack.c.l.b16 %v921
        %v1003 = vunpack.c.h.b16 %v921
        %v1004 = vunpack.c.l.b16 %v922
        %v1005 = vunpack.c.l.b16 %v923
        %v1006 = vunpack.c.h.b16 %v923
        %v1007 = vunpack.c.l.b16 %v924
        %v1008 = vunpack.c.l.b16 %v925
        %v1009 = vunpack.c.h.b16 %v925
        %v1010 = vunpack.c.l.b16 %v926
        %v1011 = vunpack.c.l.b16 %v927
        %v1012 = vunpack.c.h.b16 %v927
        %v1013 = vunpack.c.l.b16 %v928
        %v1014 = vunpack.c.l.b16 %v929
        %v1015 = vunpack.c.h.b16 %v929
        %v1016 = vunpack.c.l.b16 %v930
        %v1017 = vunpack.c.l.b16 %v931
        %v1018 = vunpack.c.h.b16 %v931
        %v1019 = vunpack.c.l.b16 %v932
        %v1020 = vunpack.c.l.b16 %v933
        %v1021 = vunpack.c.h.b16 %v933
        %v1022 = vunpack.c.l.b16 %v934
        %v1023 = vpack.c.b16 %v978, %v975
        %v1024 = vpack.c.b16 %v979, %v976
        %v1025 = vpack.c.b16 %v980, %v977
        %v1026 = vpack.c.b16 %v984, %v981
        %v1027 = vpack.c.b16 %v985, %v982
        %v1028 = vpack.c.b16 %v986, %v983
        %v1029 = vpack.c.b16 %v990, %v987
        %v1030 = vpack.c.b16 %v991, %v988
        %v1031 = vpack.c.b16 %v992, %v989
        %v1032 = vpack.c.b16 %v996, %v993
        %v1033 = vpack.c.b16 %v997, %v994
        %v1034 = vpack.c.b16 %v998, %v995
        %v1035 = vpack.c.b16 %v1002, %v999
        %v1036 = vpack.c.b16 %v1003, %v1000
        %v1037 = vpack.c.b16 %v1004, %v1001
        %v1038 = vpack.c.b16 %v1008, %v1005
        %v1039 = vpack.c.b16 %v1009, %v1006
        %v1040 = vpack.c.b16 %v1010, %v1007
        %v1041 = vpack.c.b16 %v1014, %v1011
        %v1042 = vpack.c.b16 %v1015, %v1012
        %v1043 = vpack.c.b16 %v1016, %v1013
        %v1044 = vpack.c.b16 %v1020, %v1017
        %v1045 = vpack.c.b16 %v1021, %v1018
        %v1046 = vpack.c.b16 %v1022, %v1019
        %1071 = vmatpush.bf16.msra.mxu0 %v1044
        %1072 = vmatpush.bf16.msra.mxu0 %v1041
        %1073 = vmatpush.bf16.msra.mxu0 %v1038
        %1074 = vmatpush.bf16.msra.mxu0 %v1035
        %1075 = vmatpush.bf16.msra.mxu0 %v1032
        %1076 = vmatpush.bf16.msra.mxu0 %v1029
        %1077 = vmatpush.bf16.msra.mxu0 %v1026
        %1078 = vmatpush.bf16.msra.mxu0 %v1023
        %1079 = vmatmul.bf16.gmra.mxu0 %v902
        %v1080 = vpop.f32.mrf.mxu0
        %v1081 = vadd.f32 %v937, %v1080
        %v1082 = vpop.f32.mrf.mxu0
        %v1083 = vadd.f32 %v937, %v1082
        %1084 = vdwg.mxu0
        %1085 = vmatpush.bf16.msra.mxu0 %v1045
        %1086 = vmatpush.bf16.msra.mxu0 %v1042
        %1087 = vmatpush.bf16.msra.mxu0 %v1039
        %1088 = vmatpush.bf16.msra.mxu0 %v1036
        %1089 = vmatpush.bf16.msra.mxu0 %v1033
        %1090 = vmatpush.bf16.msra.mxu0 %v1030
        %1091 = vmatpush.bf16.msra.mxu0 %v1027
        %1092 = vmatpush.bf16.msra.mxu0 %v1024
        %1093 = vmatmul.bf16.gmra.mxu0 %v902
        %v1094 = vpop.f32.mrf.mxu0
        %v1095 = vadd.f32 %v938, %v1094
        %v1096 = vpop.f32.mrf.mxu0
        %v1097 = vadd.f32 %v938, %v1096
        %1098 = vdwg.mxu0
        %1099 = vmatpush.bf16.msra.mxu0 %v1046
        %1100 = vmatpush.bf16.msra.mxu0 %v1043
        %1101 = vmatpush.bf16.msra.mxu0 %v1040
        %1102 = vmatpush.bf16.msra.mxu0 %v1037
        %1103 = vmatpush.bf16.msra.mxu0 %v1034
        %1104 = vmatpush.bf16.msra.mxu0 %v1031
        %1105 = vmatpush.bf16.msra.mxu0 %v1028
        %1106 = vmatpush.bf16.msra.mxu0 %v1025
        %1107 = vmatmul.bf16.gmra.mxu0 %v902
        %v1108 = vpop.f32.mrf.mxu0
        %v1109 = vadd.f32 %v939, %v1108
        %v1110 = vpop.f32.mrf.mxu0
        %v1111 = vadd.f32 %v939, %v1110
        %1112 = vdwg.mxu0
        %1115 = vrot.lane.b32.xlu0 %v1081, 96
        %v1116 = vpop.permute.xlu0 %1115
        %1117 = vrot.lane.b32.xlu0 %v1083, 96
        %v1118 = vpop.permute.xlu0 %1117
        %1121 = vrot.lane.b32.xlu0 %v1081, 64
        %v1122 = vpop.permute.xlu0 %1121
        %1123 = vrot.lane.b32.xlu0 %v1083, 64
        %v1124 = vpop.permute.xlu0 %1123
        %1127 = vrot.lane.b32.xlu0 %v1081, 32
        %v1128 = vpop.permute.xlu0 %1127
        %1129 = vrot.lane.b32.xlu0 %v1083, 32
        %v1130 = vpop.permute.xlu0 %1129
        %v1133 = vpack.c.bf16 %v1081, %v1081
        %v1134 = vpack.c.bf16 %v1083, %v1083
        %v1135 = vpack.c.bf16 %v1116, %v1116
        %v1136 = vpack.c.bf16 %v1118, %v1118
        %v1137 = vpack.c.bf16 %v1122, %v1122
        %v1138 = vpack.c.bf16 %v1124, %v1124
        %v1139 = vpack.c.bf16 %v1128, %v1128
        %v1140 = vpack.c.bf16 %v1130, %v1130
        %1143 = vrot.lane.b32.xlu0 %v1095, 96
        %v1144 = vpop.permute.xlu0 %1143
        %1145 = vrot.lane.b32.xlu0 %v1097, 96
        %v1146 = vpop.permute.xlu0 %1145
        %1149 = vrot.lane.b32.xlu0 %v1095, 64
        %v1150 = vpop.permute.xlu0 %1149
        %1151 = vrot.lane.b32.xlu0 %v1097, 64
        %v1152 = vpop.permute.xlu0 %1151
        %1155 = vrot.lane.b32.xlu0 %v1095, 32
        %v1156 = vpop.permute.xlu0 %1155
        %1157 = vrot.lane.b32.xlu0 %v1097, 32
        %v1158 = vpop.permute.xlu0 %1157
        %v1161 = vpack.c.bf16 %v1095, %v1095
        %v1162 = vpack.c.bf16 %v1097, %v1097
        %v1163 = vpack.c.bf16 %v1144, %v1144
        %v1164 = vpack.c.bf16 %v1146, %v1146
        %v1165 = vpack.c.bf16 %v1150, %v1150
        %v1166 = vpack.c.bf16 %v1152, %v1152
        %v1167 = vpack.c.bf16 %v1156, %v1156
        %v1168 = vpack.c.bf16 %v1158, %v1158
        %1171 = vrot.lane.b32.xlu0 %v1109, 96
        %v1172 = vpop.permute.xlu0 %1171
        %1173 = vrot.lane.b32.xlu0 %v1111, 96
        %v1174 = vpop.permute.xlu0 %1173
        %1177 = vrot.lane.b32.xlu0 %v1109, 64
        %v1178 = vpop.permute.xlu0 %1177
        %1179 = vrot.lane.b32.xlu0 %v1111, 64
        %v1180 = vpop.permute.xlu0 %1179
        %1183 = vrot.lane.b32.xlu0 %v1109, 32
        %v1184 = vpop.permute.xlu0 %1183
        %1185 = vrot.lane.b32.xlu0 %v1111, 32
        %v1186 = vpop.permute.xlu0 %1185
        %v1189 = vpack.c.bf16 %v1109, %v1109
        %v1190 = vpack.c.bf16 %v1111, %v1111
        %v1191 = vpack.c.bf16 %v1172, %v1172
        %v1192 = vpack.c.bf16 %v1174, %v1174
        %v1193 = vpack.c.bf16 %v1178, %v1178
        %v1194 = vpack.c.bf16 %v1180, %v1180
        %v1195 = vpack.c.bf16 %v1184, %v1184
        %v1196 = vpack.c.bf16 %v1186, %v1186
        %vm1197 = vcmask 261120
        %v1199 = vsel %vm1197, %v1133, 0
        %v1202 = vsel %vm1197, %v1161, 0
        %1204 = vmatpush.bf16.xpose.msra.mxu0 0
        %1205 = vmatpush.bf16.xpose.msra.mxu0 0
        %1206 = vmatpush.bf16.xpose.msra.mxu0 0
        %1207 = vmatpush.bf16.xpose.msra.mxu0 0
        %1208 = vmatpush.bf16.xpose.msra.mxu0 0
        %1209 = vmatpush.bf16.xpose.msra.mxu0 0
        %1210 = vmatpush.bf16.xpose.msra.mxu0 0
        %1211 = vmatpush.bf16.xpose.msra.mxu0 %v1202
        %1212 = vmatmul.bf16.gmra.mxu0 %v1199
        %v1213 = vpop.f32.mrf.mxu0
        %v1214 = vadd.f32 %v898, %v1213
        %v1215 = vpop.f32.mrf.mxu0
        %1216 = vdwg.mxu0
        %v1218 = vsel %vm1197, %v1134, 0
        %v1221 = vsel %vm1197, %v1162, 0
        %1223 = vmatpush.bf16.xpose.msra.mxu0 0
        %1224 = vmatpush.bf16.xpose.msra.mxu0 0
        %1225 = vmatpush.bf16.xpose.msra.mxu0 0
        %1226 = vmatpush.bf16.xpose.msra.mxu0 0
        %1227 = vmatpush.bf16.xpose.msra.mxu0 0
        %1228 = vmatpush.bf16.xpose.msra.mxu0 0
        %1229 = vmatpush.bf16.xpose.msra.mxu0 0
        %1230 = vmatpush.bf16.xpose.msra.mxu0 %v1221
        %1231 = vmatmul.bf16.gmra.mxu0 %v1218
        %v1232 = vpop.f32.mrf.mxu0
        %v1233 = vadd.f32 %v899, %v1232
        %v1234 = vpop.f32.mrf.mxu0
        %1235 = vdwg.mxu0
        %v1237 = vsel %vm1197, %v1135, 0
        %v1240 = vsel %vm1197, %v1163, 0
        %1242 = vmatpush.bf16.xpose.msra.mxu0 0
        %1243 = vmatpush.bf16.xpose.msra.mxu0 0
        %1244 = vmatpush.bf16.xpose.msra.mxu0 0
        %1245 = vmatpush.bf16.xpose.msra.mxu0 0
        %1246 = vmatpush.bf16.xpose.msra.mxu0 0
        %1247 = vmatpush.bf16.xpose.msra.mxu0 0
        %1248 = vmatpush.bf16.xpose.msra.mxu0 0
        %1249 = vmatpush.bf16.xpose.msra.mxu0 %v1240
        %1250 = vmatmul.bf16.gmra.mxu0 %v1237
        %v1251 = vpop.f32.mrf.mxu0
        %v1252 = vadd.f32 %v898, %v1251
        %v1253 = vpop.f32.mrf.mxu0
        %1254 = vdwg.mxu0
        %v1256 = vsel %vm1197, %v1136, 0
        %v1259 = vsel %vm1197, %v1164, 0
        %1261 = vmatpush.bf16.xpose.msra.mxu0 0
        %1262 = vmatpush.bf16.xpose.msra.mxu0 0
        %1263 = vmatpush.bf16.xpose.msra.mxu0 0
        %1264 = vmatpush.bf16.xpose.msra.mxu0 0
        %1265 = vmatpush.bf16.xpose.msra.mxu0 0
        %1266 = vmatpush.bf16.xpose.msra.mxu0 0
        %1267 = vmatpush.bf16.xpose.msra.mxu0 0
        %1268 = vmatpush.bf16.xpose.msra.mxu0 %v1259
        %1269 = vmatmul.bf16.gmra.mxu0 %v1256
        %v1270 = vpop.f32.mrf.mxu0
        %v1271 = vadd.f32 %v899, %v1270
        %v1272 = vpop.f32.mrf.mxu0
        %1273 = vdwg.mxu0
        %v1275 = vsel %vm1197, %v1137, 0
        %v1278 = vsel %vm1197, %v1165, 0
        %1280 = vmatpush.bf16.xpose.msra.mxu0 0
        %1281 = vmatpush.bf16.xpose.msra.mxu0 0
        %1282 = vmatpush.bf16.xpose.msra.mxu0 0
        %1283 = vmatpush.bf16.xpose.msra.mxu0 0
        %1284 = vmatpush.bf16.xpose.msra.mxu0 0
        %1285 = vmatpush.bf16.xpose.msra.mxu0 0
        %1286 = vmatpush.bf16.xpose.msra.mxu0 0
        %1287 = vmatpush.bf16.xpose.msra.mxu0 %v1278
        %1288 = vmatmul.bf16.gmra.mxu0 %v1275
        %v1289 = vpop.f32.mrf.mxu0
        %v1290 = vadd.f32 %v898, %v1289
        %v1291 = vpop.f32.mrf.mxu0
        %1292 = vdwg.mxu0
        %v1294 = vsel %vm1197, %v1138, 0
        %v1297 = vsel %vm1197, %v1166, 0
        %1299 = vmatpush.bf16.xpose.msra.mxu0 0
        %1300 = vmatpush.bf16.xpose.msra.mxu0 0
        %1301 = vmatpush.bf16.xpose.msra.mxu0 0
        %1302 = vmatpush.bf16.xpose.msra.mxu0 0
        %1303 = vmatpush.bf16.xpose.msra.mxu0 0
        %1304 = vmatpush.bf16.xpose.msra.mxu0 0
        %1305 = vmatpush.bf16.xpose.msra.mxu0 0
        %1306 = vmatpush.bf16.xpose.msra.mxu0 %v1297
        %1307 = vmatmul.bf16.gmra.mxu0 %v1294
        %v1308 = vpop.f32.mrf.mxu0
        %v1309 = vadd.f32 %v899, %v1308
        %v1310 = vpop.f32.mrf.mxu0
        %1311 = vdwg.mxu0
        %v1313 = vsel %vm1197, %v1139, 0
        %v1316 = vsel %vm1197, %v1167, 0
        %1318 = vmatpush.bf16.xpose.msra.mxu0 0
        %1319 = vmatpush.bf16.xpose.msra.mxu0 0
        %1320 = vmatpush.bf16.xpose.msra.mxu0 0
        %1321 = vmatpush.bf16.xpose.msra.mxu0 0
        %1322 = vmatpush.bf16.xpose.msra.mxu0 0
        %1323 = vmatpush.bf16.xpose.msra.mxu0 0
        %1324 = vmatpush.bf16.xpose.msra.mxu0 0
        %1325 = vmatpush.bf16.xpose.msra.mxu0 %v1316
        %1326 = vmatmul.bf16.gmra.mxu0 %v1313
        %v1327 = vpop.f32.mrf.mxu0
        %v1328 = vadd.f32 %v898, %v1327
        %v1329 = vpop.f32.mrf.mxu0
        %1330 = vdwg.mxu0
        %v1332 = vsel %vm1197, %v1140, 0
        %v1335 = vsel %vm1197, %v1168, 0
        %1337 = vmatpush.bf16.xpose.msra.mxu0 0
        %1338 = vmatpush.bf16.xpose.msra.mxu0 0
        %1339 = vmatpush.bf16.xpose.msra.mxu0 0
        %1340 = vmatpush.bf16.xpose.msra.mxu0 0
        %1341 = vmatpush.bf16.xpose.msra.mxu0 0
        %1342 = vmatpush.bf16.xpose.msra.mxu0 0
        %1343 = vmatpush.bf16.xpose.msra.mxu0 0
        %1344 = vmatpush.bf16.xpose.msra.mxu0 %v1335
        %1345 = vmatmul.bf16.gmra.mxu0 %v1332
        %v1346 = vpop.f32.mrf.mxu0
        %v1347 = vadd.f32 %v899, %v1346
        %v1348 = vpop.f32.mrf.mxu0
        %1349 = vdwg.mxu0
        %vm1350 = vcmask 64512
        %v1351 = vsel %vm1350, %v1214, -inf
        %1352 = vmax.xlane.f32.xlu0 %v1351
        %v1353 = vpop.xlane.xlu0 %1352
        %v1354 = vsel %vm1350, %v1233, -inf
        %1355 = vmax.xlane.f32.xlu0 %v1354
        %v1356 = vpop.xlane.xlu0 %1355
        %v1357 = vsel %vm1350, %v1252, -inf
        %1358 = vmax.xlane.f32.xlu0 %v1357
        %v1359 = vpop.xlane.xlu0 %1358
        %v1360 = vsel %vm1350, %v1271, -inf
        %1361 = vmax.xlane.f32.xlu0 %v1360
        %v1362 = vpop.xlane.xlu0 %1361
        %v1363 = vsel %vm1350, %v1290, -inf
        %1364 = vmax.xlane.f32.xlu0 %v1363
        %v1365 = vpop.xlane.xlu0 %1364
        %v1366 = vsel %vm1350, %v1309, -inf
        %1367 = vmax.xlane.f32.xlu0 %v1366
        %v1368 = vpop.xlane.xlu0 %1367
        %v1369 = vsel %vm1350, %v1328, -inf
        %1370 = vmax.xlane.f32.xlu0 %v1369
        %v1371 = vpop.xlane.xlu0 %1370
        %v1372 = vsel %vm1350, %v1347, -inf
        %1373 = vmax.xlane.f32.xlu0 %v1372
        %v1374 = vpop.xlane.xlu0 %1373
        %v1375 = vsub.f32 %v1214, %v1353
        %v1376 = vsub.f32 %v1233, %v1356
        %v1377 = vsub.f32 %v1252, %v1359
        %v1378 = vsub.f32 %v1271, %v1362
        %v1379 = vsub.f32 %v1290, %v1365
        %v1380 = vsub.f32 %v1309, %v1368
        %v1381 = vsub.f32 %v1328, %v1371
        %v1382 = vsub.f32 %v1347, %v1374
        %v1383 = vmul.f32 %v1375, 1.442695
        %v1384 = vpow.pop %v1383
        %v1385 = vmul.f32 %v1376, 1.442695
        %v1386 = vpow.pop %v1385
        %v1387 = vmul.f32 %v1377, 1.442695
        %v1388 = vpow.pop %v1387
        %v1389 = vmul.f32 %v1378, 1.442695
        %v1390 = vpow.pop %v1389
        %v1391 = vmul.f32 %v1379, 1.442695
        %v1392 = vpow.pop %v1391
        %v1393 = vmul.f32 %v1380, 1.442695
        %v1394 = vpow.pop %v1393
        %v1395 = vmul.f32 %v1381, 1.442695
        %v1396 = vpow.pop %v1395
        %v1397 = vmul.f32 %v1382, 1.442695
        %v1398 = vpow.pop %v1397
        %v1399 = vsel %vm1350, %v1384, 0.0
        %1400 = vadd.xlane.f32.xlu0 %v1399
        %v1401 = vpop.xlane.xlu0 %1400
        %v1402 = vsel %vm1350, %v1386, 0.0
        %1403 = vadd.xlane.f32.xlu0 %v1402
        %v1404 = vpop.xlane.xlu0 %1403
        %v1405 = vsel %vm1350, %v1388, 0.0
        %1406 = vadd.xlane.f32.xlu0 %v1405
        %v1407 = vpop.xlane.xlu0 %1406
        %v1408 = vsel %vm1350, %v1390, 0.0
        %1409 = vadd.xlane.f32.xlu0 %v1408
        %v1410 = vpop.xlane.xlu0 %1409
        %v1411 = vsel %vm1350, %v1392, 0.0
        %1412 = vadd.xlane.f32.xlu0 %v1411
        %v1413 = vpop.xlane.xlu0 %1412
        %v1414 = vsel %vm1350, %v1394, 0.0
        %1415 = vadd.xlane.f32.xlu0 %v1414
        %v1416 = vpop.xlane.xlu0 %1415
        %v1417 = vsel %vm1350, %v1396, 0.0
        %1418 = vadd.xlane.f32.xlu0 %v1417
        %v1419 = vpop.xlane.xlu0 %1418
        %v1420 = vsel %vm1350, %v1398, 0.0
        %1421 = vadd.xlane.f32.xlu0 %v1420
        %v1422 = vpop.xlane.xlu0 %1421
        %v1423 = vrcp.pop %v1401
        %v1424 = vrcp.pop %v1404
        %v1425 = vrcp.pop %v1407
        %v1426 = vrcp.pop %v1410
        %v1427 = vrcp.pop %v1413
        %v1428 = vrcp.pop %v1416
        %v1429 = vrcp.pop %v1419
        %v1430 = vrcp.pop %v1422
        %v1431 = vmul.f32 %v1384, %v1423
        %v1432 = vmul.f32 %v1386, %v1424
        %v1433 = vmul.f32 %v1388, %v1425
        %v1434 = vmul.f32 %v1390, %v1426
        %v1435 = vmul.f32 %v1392, %v1427
        %v1436 = vmul.f32 %v1394, %v1428
        %v1437 = vmul.f32 %v1396, %v1429
        %v1438 = vmul.f32 %v1398, %v1430
        %v1439 = vpack.c.bf16 %v1431, %v1431
        %v1440 = vpack.c.bf16 %v1432, %v1432
        %v1441 = vpack.c.bf16 %v1433, %v1433
        %v1442 = vpack.c.bf16 %v1434, %v1434
        %v1443 = vpack.c.bf16 %v1435, %v1435
        %v1444 = vpack.c.bf16 %v1436, %v1436
        %v1445 = vpack.c.bf16 %v1437, %v1437
        %v1446 = vpack.c.bf16 %v1438, %v1438
        %v1448 = vsel %vm1350, %v1439, 0
        %vm1450 = vcmask 1043456
        %v1452 = vsel %vm1450, %v1189, 0
        %1454 = vmatpush.bf16.msra.mxu0 0
        %1455 = vmatpush.bf16.msra.mxu0 0
        %1456 = vmatpush.bf16.msra.mxu0 0
        %1457 = vmatpush.bf16.msra.mxu0 0
        %1458 = vmatpush.bf16.msra.mxu0 0
        %1459 = vmatpush.bf16.msra.mxu0 0
        %1460 = vmatpush.bf16.msra.mxu0 0
        %1461 = vmatpush.bf16.msra.mxu0 %v1452
        %1462 = vmatmul.bf16.gmra.mxu0 %v1448
        %v1463 = vpop.f32.mrf.mxu0
        %v1464 = vadd.f32 0.0, %v1463
        %v1465 = vpop.f32.mrf.mxu0
        %1466 = vdwg.mxu0
        %v1468 = vsel %vm1350, %v1440, 0
        %v1471 = vsel %vm1450, %v1190, 0
        %1473 = vmatpush.bf16.msra.mxu0 0
        %1474 = vmatpush.bf16.msra.mxu0 0
        %1475 = vmatpush.bf16.msra.mxu0 0
        %1476 = vmatpush.bf16.msra.mxu0 0
        %1477 = vmatpush.bf16.msra.mxu0 0
        %1478 = vmatpush.bf16.msra.mxu0 0
        %1479 = vmatpush.bf16.msra.mxu0 0
        %1480 = vmatpush.bf16.msra.mxu0 %v1471
        %1481 = vmatmul.bf16.gmra.mxu0 %v1468
        %v1482 = vpop.f32.mrf.mxu0
        %v1483 = vadd.f32 0.0, %v1482
        %v1484 = vpop.f32.mrf.mxu0
        %1485 = vdwg.mxu0
        %v1487 = vsel %vm1350, %v1441, 0
        %v1490 = vsel %vm1450, %v1191, 0
        %1492 = vmatpush.bf16.msra.mxu0 0
        %1493 = vmatpush.bf16.msra.mxu0 0
        %1494 = vmatpush.bf16.msra.mxu0 0
        %1495 = vmatpush.bf16.msra.mxu0 0
        %1496 = vmatpush.bf16.msra.mxu0 0
        %1497 = vmatpush.bf16.msra.mxu0 0
        %1498 = vmatpush.bf16.msra.mxu0 0
        %1499 = vmatpush.bf16.msra.mxu0 %v1490
        %1500 = vmatmul.bf16.gmra.mxu0 %v1487
        %v1501 = vpop.f32.mrf.mxu0
        %v1502 = vadd.f32 0.0, %v1501
        %v1503 = vpop.f32.mrf.mxu0
        %1504 = vdwg.mxu0
        %v1506 = vsel %vm1350, %v1442, 0
        %v1509 = vsel %vm1450, %v1192, 0
        %1511 = vmatpush.bf16.msra.mxu0 0
        %1512 = vmatpush.bf16.msra.mxu0 0
        %1513 = vmatpush.bf16.msra.mxu0 0
        %1514 = vmatpush.bf16.msra.mxu0 0
        %1515 = vmatpush.bf16.msra.mxu0 0
        %1516 = vmatpush.bf16.msra.mxu0 0
        %1517 = vmatpush.bf16.msra.mxu0 0
        %1518 = vmatpush.bf16.msra.mxu0 %v1509
        %1519 = vmatmul.bf16.gmra.mxu0 %v1506
        %v1520 = vpop.f32.mrf.mxu0
        %v1521 = vadd.f32 0.0, %v1520
        %v1522 = vpop.f32.mrf.mxu0
        %1523 = vdwg.mxu0
        %v1525 = vsel %vm1350, %v1443, 0
        %v1528 = vsel %vm1450, %v1193, 0
        %1530 = vmatpush.bf16.msra.mxu0 0
        %1531 = vmatpush.bf16.msra.mxu0 0
        %1532 = vmatpush.bf16.msra.mxu0 0
        %1533 = vmatpush.bf16.msra.mxu0 0
        %1534 = vmatpush.bf16.msra.mxu0 0
        %1535 = vmatpush.bf16.msra.mxu0 0
        %1536 = vmatpush.bf16.msra.mxu0 0
        %1537 = vmatpush.bf16.msra.mxu0 %v1528
        %1538 = vmatmul.bf16.gmra.mxu0 %v1525
        %v1539 = vpop.f32.mrf.mxu0
        %v1540 = vadd.f32 0.0, %v1539
        %v1541 = vpop.f32.mrf.mxu0
        %1542 = vdwg.mxu0
        %v1544 = vsel %vm1350, %v1444, 0
        %v1547 = vsel %vm1450, %v1194, 0
        %1549 = vmatpush.bf16.msra.mxu0 0
        %1550 = vmatpush.bf16.msra.mxu0 0
        %1551 = vmatpush.bf16.msra.mxu0 0
        %1552 = vmatpush.bf16.msra.mxu0 0
        %1553 = vmatpush.bf16.msra.mxu0 0
        %1554 = vmatpush.bf16.msra.mxu0 0
        %1555 = vmatpush.bf16.msra.mxu0 0
        %1556 = vmatpush.bf16.msra.mxu0 %v1547
        %1557 = vmatmul.bf16.gmra.mxu0 %v1544
        %v1558 = vpop.f32.mrf.mxu0
        %v1559 = vadd.f32 0.0, %v1558
        %v1560 = vpop.f32.mrf.mxu0
        %1561 = vdwg.mxu0
        %v1563 = vsel %vm1350, %v1445, 0
        %v1566 = vsel %vm1450, %v1195, 0
        %1568 = vmatpush.bf16.msra.mxu0 0
        %1569 = vmatpush.bf16.msra.mxu0 0
        %1570 = vmatpush.bf16.msra.mxu0 0
        %1571 = vmatpush.bf16.msra.mxu0 0
        %1572 = vmatpush.bf16.msra.mxu0 0
        %1573 = vmatpush.bf16.msra.mxu0 0
        %1574 = vmatpush.bf16.msra.mxu0 0
        %1575 = vmatpush.bf16.msra.mxu0 %v1566
        %1576 = vmatmul.bf16.gmra.mxu0 %v1563
        %v1577 = vpop.f32.mrf.mxu0
        %v1578 = vadd.f32 0.0, %v1577
        %v1579 = vpop.f32.mrf.mxu0
        %1580 = vdwg.mxu0
        %v1582 = vsel %vm1350, %v1446, 0
        %v1585 = vsel %vm1450, %v1196, 0
        %1587 = vmatpush.bf16.msra.mxu0 0
        %1588 = vmatpush.bf16.msra.mxu0 0
        %1589 = vmatpush.bf16.msra.mxu0 0
        %1590 = vmatpush.bf16.msra.mxu0 0
        %1591 = vmatpush.bf16.msra.mxu0 0
        %1592 = vmatpush.bf16.msra.mxu0 0
        %1593 = vmatpush.bf16.msra.mxu0 0
        %1594 = vmatpush.bf16.msra.mxu0 %v1585
        %1595 = vmatmul.bf16.gmra.mxu0 %v1582
        %v1596 = vpop.f32.mrf.mxu0
        %v1597 = vadd.f32 0.0, %v1596
        %v1598 = vpop.f32.mrf.mxu0
        %1599 = vdwg.mxu0
        %1602 = vrot.lane.b32.xlu0 %v1502, 32
        %v1603 = vpop.permute.xlu0 %1602
        %1604 = vrot.lane.b32.xlu0 %v1521, 32
        %v1605 = vpop.permute.xlu0 %1604
        %1610 = vrot.lane.b32.xlu0 %v1540, 64
        %v1611 = vpop.permute.xlu0 %1610
        %1612 = vrot.lane.b32.xlu0 %v1559, 64
        %v1613 = vpop.permute.xlu0 %1612
        %1618 = vrot.lane.b32.xlu0 %v1578, 96
        %v1619 = vpop.permute.xlu0 %1618
        %1620 = vrot.lane.b32.xlu0 %v1597, 96
        %v1621 = vpop.permute.xlu0 %1620
        %v1624 = vsel %vm1197, %v1464, %v1603
        %v1625 = vsel %vm1197, %v1483, %v1605
        %vm1626 = vcmask 523264
        %v1627 = vsel %vm1626, %v1624, %v1611
        %v1628 = vsel %vm1626, %v1625, %v1613
        %vm1629 = vcmask 785408
        %v1630 = vsel %vm1629, %v1627, %v1619
        %v1631 = vsel %vm1629, %v1628, %v1621
        %v1632 = vpack.c.bf16 %v1631, %v1630
        %v1633 = vld [vmem:[#allocation2] sm:$0xf]
        %v1634 = vld [vmem:[#allocation2 + $0x4] sm:$0xf]
        %v1635 = vld [vmem:[#allocation2 + $0x8] sm:$0xf]
        %v1636 = vld [vmem:[#allocation2 + $0xc] sm:$0xf]
        %v1637 = vld [vmem:[#allocation2 + $0x10] sm:$0xf]
        %v1638 = vld [vmem:[#allocation2 + $0x14] sm:$0xf]
        %v1639 = vld [vmem:[#allocation2 + $0x18] sm:$0xf]
        %v1640 = vld [vmem:[#allocation2 + $0x1c] sm:$0xf]
        %v1641 = vld [vmem:[#allocation2 + $0x20] sm:$0xf]
        %v1642 = vld [vmem:[#allocation2 + $0x24] sm:$0xf]
        %v1643 = vld [vmem:[#allocation2 + $0x28] sm:$0xf]
        %v1644 = vld [vmem:[#allocation2 + $0x2c] sm:$0xf]
        %v1645 = vld [vmem:[#allocation2 + $0x30] sm:$0xf]
        %v1646 = vld [vmem:[#allocation2 + $0x34] sm:$0xf]
        %v1647 = vld [vmem:[#allocation2 + $0x38] sm:$0xf]
        %v1648 = vld [vmem:[#allocation2 + $0x3c] sm:$0xf]
        %v1649 = vld [vmem:[%s7] sm:$0x1]
        %v1651 = vperm.slane %v1649, 0
        %v1669 = vunpack.c.l.b16 %v1633
        %v1670 = vunpack.c.l.b16 %v1634
        %v1671 = vunpack.c.l.b16 %v1635
        %v1672 = vunpack.c.l.b16 %v1636
        %v1673 = vunpack.c.l.b16 %v1637
        %v1674 = vunpack.c.l.b16 %v1638
        %v1675 = vunpack.c.l.b16 %v1639
        %v1676 = vunpack.c.l.b16 %v1640
        %v1677 = vunpack.c.l.b16 %v1641
        %v1678 = vunpack.c.l.b16 %v1642
        %v1679 = vunpack.c.l.b16 %v1643
        %v1680 = vunpack.c.l.b16 %v1644
        %v1681 = vunpack.c.l.b16 %v1645
        %v1682 = vunpack.c.l.b16 %v1646
        %v1683 = vunpack.c.l.b16 %v1647
        %v1684 = vunpack.c.l.b16 %v1648
        %v1685 = vpack.c.b16 %v1670, %v1669
        %v1686 = vpack.c.b16 %v1672, %v1671
        %v1687 = vpack.c.b16 %v1674, %v1673
        %v1688 = vpack.c.b16 %v1676, %v1675
        %v1689 = vpack.c.b16 %v1678, %v1677
        %v1690 = vpack.c.b16 %v1680, %v1679
        %v1691 = vpack.c.b16 %v1682, %v1681
        %v1692 = vpack.c.b16 %v1684, %v1683
        %1701 = vmatpush.bf16.msra.mxu0 %v1692
        %1702 = vmatpush.bf16.msra.mxu0 %v1691
        %1703 = vmatpush.bf16.msra.mxu0 %v1690
        %1704 = vmatpush.bf16.msra.mxu0 %v1689
        %1705 = vmatpush.bf16.msra.mxu0 %v1688
        %1706 = vmatpush.bf16.msra.mxu0 %v1687
        %1707 = vmatpush.bf16.msra.mxu0 %v1686
        %1708 = vmatpush.bf16.msra.mxu0 %v1685
        %1709 = vmatmul.bf16.gmra.mxu0 %v1632
        %v1710 = vpop.f32.mrf.mxu0
        %v1711 = vadd.f32 %v1651, %v1710
        %v1712 = vpop.f32.mrf.mxu0
        %v1713 = vadd.f32 %v1651, %v1712
        %1714 = vdwg.mxu0
        %v1715 = vadd.f32 %v892, %v1711
        %v1716 = vadd.f32 %v893, %v1713
        %v1717 = vld [vmem:[%s8] sm:$0x1]
        %v1718 = vld [vmem:[%s9] sm:$0x1]
        %1719 = vadd.xlane.f32.xlu0 %v1715
        %v1720 = vpop.xlane.xlu0 %1719
        %1721 = vadd.xlane.f32.xlu0 %v1716
        %v1722 = vpop.xlane.xlu0 %1721
        %v1723 = vmul.f32 %v1720, %v847
        %v1724 = vmul.f32 %v1722, %v847
        %v1725 = vsub.f32 %v1715, %v1723
        %v1726 = vsub.f32 %v1716, %v1724
        %v1727 = vmul.f32 %v1725, %v1725
        %v1728 = vmul.f32 %v1726, %v1726
        %1729 = vadd.xlane.f32.xlu0 %v1727
        %v1730 = vpop.xlane.xlu0 %1729
        %1731 = vadd.xlane.f32.xlu0 %v1728
        %v1732 = vpop.xlane.xlu0 %1731
        %v1733 = vmul.f32 %v1730, %v847
        %v1734 = vmul.f32 %v1732, %v847
        %v1735 = vadd.f32 %v1733, 1e-12
        %v1736 = vadd.f32 %v1734, 1e-12
        %v1737 = vrsqrt.pop %v1735
        %v1738 = vmul.f32 %v1737, %v1735
        %v1739 = vmul.f32 %v1738, %v1737
        %v1740 = vmul.f32 0.5, %v1739
        %v1741 = vsub.f32 1.5, %v1740
        %v1742 = vmul.f32 %v1737, %v1741
        %vm1743 = vweird.f32 %v1735
        %vm1744 = vweird.f32 %v1737
        %vm1745 = vmor %vm1743, %vm1744
        %v1746 = vsel %vm1745, %v1737, %v1742
        %v1747 = vrsqrt.pop %v1736
        %v1748 = vmul.f32 %v1747, %v1736
        %v1749 = vmul.f32 %v1748, %v1747
        %v1750 = vmul.f32 0.5, %v1749
        %v1751 = vsub.f32 1.5, %v1750
        %v1752 = vmul.f32 %v1747, %v1751
        %vm1753 = vweird.f32 %v1736
        %vm1754 = vweird.f32 %v1747
        %vm1755 = vmor %vm1753, %vm1754
        %v1756 = vsel %vm1755, %v1747, %v1752
        %v1757 = vmul.f32 %v1725, %v1746
        %v1758 = vmul.f32 %v1726, %v1756
        %v1760 = vperm.slane %v1717, 0
        %v1762 = vmul.f32 %v1757, %v1760
        %v1763 = vmul.f32 %v1758, %v1760
        %v1765 = vperm.slane %v1718, 0
        %v1767 = vadd.f32 %v1762, %v1765
        %v1768 = vadd.f32 %v1763, %v1765
        %v1769 = vpack.c.bf16 %v1768, %v1767
        %v1770 = vld [vmem:[#allocation4] sm:$0xff]
        %v1771 = vld [vmem:[#allocation4 + $0x8] sm:$0xff]
        %v1772 = vld [vmem:[#allocation4 + $0x10] sm:$0xff]
        %v1773 = vld [vmem:[#allocation4 + $0x18] sm:$0xff]
        %v1774 = vld [vmem:[#allocation4 + $0x20] sm:$0xff]
        %v1775 = vld [vmem:[#allocation4 + $0x28] sm:$0xff]
        %v1776 = vld [vmem:[#allocation4 + $0x30] sm:$0xff]
        %v1777 = vld [vmem:[#allocation4 + $0x38] sm:$0xff]
        %v1778 = vld [vmem:[#allocation4 + $0x40] sm:$0xff]
        %v1779 = vld [vmem:[#allocation4 + $0x48] sm:$0xff]
        %v1780 = vld [vmem:[#allocation4 + $0x50] sm:$0xff]
        %v1781 = vld [vmem:[#allocation4 + $0x58] sm:$0xff]
        %v1782 = vld [vmem:[#allocation4 + $0x60] sm:$0xff]
        %v1783 = vld [vmem:[#allocation4 + $0x68] sm:$0xff]
        %v1784 = vld [vmem:[#allocation4 + $0x70] sm:$0xff]
        %v1785 = vld [vmem:[#allocation4 + $0x78] sm:$0xff]
        %v1786 = vld [vmem:[%s11] sm:$0x3]
        %v1788 = vperm.slane %v1786, 0
        %v1789 = vperm.slane %v1786, 1
        %v1808 = vunpack.c.l.b16 %v1770
        %v1809 = vunpack.c.h.b16 %v1770
        %v1810 = vunpack.c.l.b16 %v1771
        %v1811 = vunpack.c.h.b16 %v1771
        %v1812 = vunpack.c.l.b16 %v1772
        %v1813 = vunpack.c.h.b16 %v1772
        %v1814 = vunpack.c.l.b16 %v1773
        %v1815 = vunpack.c.h.b16 %v1773
        %v1816 = vunpack.c.l.b16 %v1774
        %v1817 = vunpack.c.h.b16 %v1774
        %v1818 = vunpack.c.l.b16 %v1775
        %v1819 = vunpack.c.h.b16 %v1775
        %v1820 = vunpack.c.l.b16 %v1776
        %v1821 = vunpack.c.h.b16 %v1776
        %v1822 = vunpack.c.l.b16 %v1777
        %v1823 = vunpack.c.h.b16 %v1777
        %v1824 = vunpack.c.l.b16 %v1778
        %v1825 = vunpack.c.h.b16 %v1778
        %v1826 = vunpack.c.l.b16 %v1779
        %v1827 = vunpack.c.h.b16 %v1779
        %v1828 = vunpack.c.l.b16 %v1780
        %v1829 = vunpack.c.h.b16 %v1780
        %v1830 = vunpack.c.l.b16 %v1781
        %v1831 = vunpack.c.h.b16 %v1781
        %v1832 = vunpack.c.l.b16 %v1782
        %v1833 = vunpack.c.h.b16 %v1782
        %v1834 = vunpack.c.l.b16 %v1783
        %v1835 = vunpack.c.h.b16 %v1783
        %v1836 = vunpack.c.l.b16 %v1784
        %v1837 = vunpack.c.h.b16 %v1784
        %v1838 = vunpack.c.l.b16 %v1785
        %v1839 = vunpack.c.h.b16 %v1785
        %v1840 = vpack.c.b16 %v1810, %v1808
        %v1841 = vpack.c.b16 %v1811, %v1809
        %v1842 = vpack.c.b16 %v1814, %v1812
        %v1843 = vpack.c.b16 %v1815, %v1813
        %v1844 = vpack.c.b16 %v1818, %v1816
        %v1845 = vpack.c.b16 %v1819, %v1817
        %v1846 = vpack.c.b16 %v1822, %v1820
        %v1847 = vpack.c.b16 %v1823, %v1821
        %v1848 = vpack.c.b16 %v1826, %v1824
        %v1849 = vpack.c.b16 %v1827, %v1825
        %v1850 = vpack.c.b16 %v1830, %v1828
        %v1851 = vpack.c.b16 %v1831, %v1829
        %v1852 = vpack.c.b16 %v1834, %v1832
        %v1853 = vpack.c.b16 %v1835, %v1833
        %v1854 = vpack.c.b16 %v1838, %v1836
        %v1855 = vpack.c.b16 %v1839, %v1837
        %1872 = vmatpush.bf16.msra.mxu0 %v1854
        %1873 = vmatpush.bf16.msra.mxu0 %v1852
        %1874 = vmatpush.bf16.msra.mxu0 %v1850
        %1875 = vmatpush.bf16.msra.mxu0 %v1848
        %1876 = vmatpush.bf16.msra.mxu0 %v1846
        %1877 = vmatpush.bf16.msra.mxu0 %v1844
        %1878 = vmatpush.bf16.msra.mxu0 %v1842
        %1879 = vmatpush.bf16.msra.mxu0 %v1840
        %1880 = vmatmul.bf16.gmra.mxu0 %v1769
        %v1881 = vpop.f32.mrf.mxu0
        %v1882 = vadd.f32 %v1788, %v1881
        %v1883 = vpop.f32.mrf.mxu0
        %v1884 = vadd.f32 %v1788, %v1883
        %1885 = vdwg.mxu0
        %1886 = vmatpush.bf16.msra.mxu0 %v1855
        %1887 = vmatpush.bf16.msra.mxu0 %v1853
        %1888 = vmatpush.bf16.msra.mxu0 %v1851
        %1889 = vmatpush.bf16.msra.mxu0 %v1849
        %1890 = vmatpush.bf16.msra.mxu0 %v1847
        %1891 = vmatpush.bf16.msra.mxu0 %v1845
        %1892 = vmatpush.bf16.msra.mxu0 %v1843
        %1893 = vmatpush.bf16.msra.mxu0 %v1841
        %1894 = vmatmul.bf16.gmra.mxu0 %v1769
        %v1895 = vpop.f32.mrf.mxu0
        %v1896 = vadd.f32 %v1789, %v1895
        %v1897 = vpop.f32.mrf.mxu0
        %v1898 = vadd.f32 %v1789, %v1897
        %1899 = vdwg.mxu0
        %v1900 = vmul.f32 %v1882, %v1882
        %v1901 = vmul.f32 %v1896, %v1896
        %v1902 = vmul.f32 %v1884, %v1884
        %v1903 = vmul.f32 %v1898, %v1898
        %v1904 = vmul.f32 %v1882, %v1900
        %v1905 = vmul.f32 %v1896, %v1901
        %v1906 = vmul.f32 %v1884, %v1902
        %v1907 = vmul.f32 %v1898, %v1903
        %v1908 = vmul.f32 %v1904, 0.044715
        %v1909 = vmul.f32 %v1905, 0.044715
        %v1910 = vmul.f32 %v1906, 0.044715
        %v1911 = vmul.f32 %v1907, 0.044715
        %v1912 = vadd.f32 %v1882, %v1908
        %v1913 = vadd.f32 %v1896, %v1909
        %v1914 = vadd.f32 %v1884, %v1910
        %v1915 = vadd.f32 %v1898, %v1911
        %v1916 = vmul.f32 %v1912, 0.7978846
        %v1917 = vmul.f32 %v1913, 0.7978846
        %v1918 = vmul.f32 %v1914, 0.7978846
        %v1919 = vmul.f32 %v1915, 0.7978846
        %v1920 = vtanh.pop %v1916
        %v1921 = vtanh.pop %v1917
        %v1922 = vtanh.pop %v1918
        %v1923 = vtanh.pop %v1919
        %v1924 = vadd.f32 %v1920, 1.0
        %v1925 = vadd.f32 %v1921, 1.0
        %v1926 = vadd.f32 %v1922, 1.0
        %v1927 = vadd.f32 %v1923, 1.0
        %v1928 = vmul.f32 %v1924, 0.5
        %v1929 = vmul.f32 %v1925, 0.5
        %v1930 = vmul.f32 %v1926, 0.5
        %v1931 = vmul.f32 %v1927, 0.5
        %v1932 = vmul.f32 %v1882, %v1928
        %v1933 = vmul.f32 %v1896, %v1929
        %v1934 = vmul.f32 %v1884, %v1930
        %v1935 = vmul.f32 %v1898, %v1931
        %v1936 = vpack.c.bf16 %v1934, %v1932
        %v1937 = vpack.c.bf16 %v1935, %v1933
        %v1938 = vld [vmem:[#allocation6] sm:$0xf]
        %v1939 = vld [vmem:[#allocation6 + $0x4] sm:$0xf]
        %v1940 = vld [vmem:[#allocation6 + $0x8] sm:$0xf]
        %v1941 = vld [vmem:[#allocation6 + $0xc] sm:$0xf]
        %v1942 = vld [vmem:[#allocation6 + $0x10] sm:$0xf]
        %v1943 = vld [vmem:[#allocation6 + $0x14] sm:$0xf]
        %v1944 = vld [vmem:[#allocation6 + $0x18] sm:$0xf]
        %v1945 = vld [vmem:[#allocation6 + $0x1c] sm:$0xf]
        %v1946 = vld [vmem:[#allocation6 + $0x20] sm:$0xf]
        %v1947 = vld [vmem:[#allocation6 + $0x24] sm:$0xf]
        %v1948 = vld [vmem:[#allocation6 + $0x28] sm:$0xf]
        %v1949 = vld [vmem:[#allocation6 + $0x2c] sm:$0xf]
        %v1950 = vld [vmem:[#allocation6 + $0x30] sm:$0xf]
        %v1951 = vld [vmem:[#allocation6 + $0x34] sm:$0xf]
        %v1952 = vld [vmem:[#allocation6 + $0x38] sm:$0xf]
        %v1953 = vld [vmem:[#allocation6 + $0x3c] sm:$0xf]
        %v1954 = vld [vmem:[#allocation6 + $0x40] sm:$0xf]
        %v1955 = vld [vmem:[#allocation6 + $0x44] sm:$0xf]
        %v1956 = vld [vmem:[#allocation6 + $0x48] sm:$0xf]
        %v1957 = vld [vmem:[#allocation6 + $0x4c] sm:$0xf]
        %v1958 = vld [vmem:[#allocation6 + $0x50] sm:$0xf]
        %v1959 = vld [vmem:[#allocation6 + $0x54] sm:$0xf]
        %v1960 = vld [vmem:[#allocation6 + $0x58] sm:$0xf]
        %v1961 = vld [vmem:[#allocation6 + $0x5c] sm:$0xf]
        %v1962 = vld [vmem:[#allocation6 + $0x60] sm:$0xf]
        %v1963 = vld [vmem:[#allocation6 + $0x64] sm:$0xf]
        %v1964 = vld [vmem:[#allocation6 + $0x68] sm:$0xf]
        %v1965 = vld [vmem:[#allocation6 + $0x6c] sm:$0xf]
        %v1966 = vld [vmem:[#allocation6 + $0x70] sm:$0xf]
        %v1967 = vld [vmem:[#allocation6 + $0x74] sm:$0xf]
        %v1968 = vld [vmem:[#allocation6 + $0x78] sm:$0xf]
        %v1969 = vld [vmem:[#allocation6 + $0x7c] sm:$0xf]
        %v1970 = vld [vmem:[%s13] sm:$0x1]
        %v1972 = vperm.slane %v1970, 0
        %v2006 = vunpack.c.l.b16 %v1938
        %v2007 = vunpack.c.l.b16 %v1939
        %v2008 = vunpack.c.l.b16 %v1940
        %v2009 = vunpack.c.l.b16 %v1941
        %v2010 = vunpack.c.l.b16 %v1942
        %v2011 = vunpack.c.l.b16 %v1943
        %v2012 = vunpack.c.l.b16 %v1944
        %v2013 = vunpack.c.l.b16 %v1945
        %v2014 = vunpack.c.l.b16 %v1946
        %v2015 = vunpack.c.l.b16 %v1947
        %v2016 = vunpack.c.l.b16 %v1948
        %v2017 = vunpack.c.l.b16 %v1949
        %v2018 = vunpack.c.l.b16 %v1950
        %v2019 = vunpack.c.l.b16 %v1951
        %v2020 = vunpack.c.l.b16 %v1952
        %v2021 = vunpack.c.l.b16 %v1953
        %v2022 = vunpack.c.l.b16 %v1954
        %v2023 = vunpack.c.l.b16 %v1955
        %v2024 = vunpack.c.l.b16 %v1956
        %v2025 = vunpack.c.l.b16 %v1957
        %v2026 = vunpack.c.l.b16 %v1958
        %v2027 = vunpack.c.l.b16 %v1959
        %v2028 = vunpack.c.l.b16 %v1960
        %v2029 = vunpack.c.l.b16 %v1961
        %v2030 = vunpack.c.l.b16 %v1962
        %v2031 = vunpack.c.l.b16 %v1963
        %v2032 = vunpack.c.l.b16 %v1964
        %v2033 = vunpack.c.l.b16 %v1965
        %v2034 = vunpack.c.l.b16 %v1966
        %v2035 = vunpack.c.l.b16 %v1967
        %v2036 = vunpack.c.l.b16 %v1968
        %v2037 = vunpack.c.l.b16 %v1969
        %v2038 = vpack.c.b16 %v2007, %v2006
        %v2039 = vpack.c.b16 %v2009, %v2008
        %v2040 = vpack.c.b16 %v2011, %v2010
        %v2041 = vpack.c.b16 %v2013, %v2012
        %v2042 = vpack.c.b16 %v2015, %v2014
        %v2043 = vpack.c.b16 %v2017, %v2016
        %v2044 = vpack.c.b16 %v2019, %v2018
        %v2045 = vpack.c.b16 %v2021, %v2020
        %v2046 = vpack.c.b16 %v2023, %v2022
        %v2047 = vpack.c.b16 %v2025, %v2024
        %v2048 = vpack.c.b16 %v2027, %v2026
        %v2049 = vpack.c.b16 %v2029, %v2028
        %v2050 = vpack.c.b16 %v2031, %v2030
        %v2051 = vpack.c.b16 %v2033, %v2032
        %v2052 = vpack.c.b16 %v2035, %v2034
        %v2053 = vpack.c.b16 %v2037, %v2036
        %2070 = vmatpush.bf16.msra.mxu0 %v2045
        %2071 = vmatpush.bf16.msra.mxu0 %v2044
        %2072 = vmatpush.bf16.msra.mxu0 %v2043
        %2073 = vmatpush.bf16.msra.mxu0 %v2042
        %2074 = vmatpush.bf16.msra.mxu0 %v2041
        %2075 = vmatpush.bf16.msra.mxu0 %v2040
        %2076 = vmatpush.bf16.msra.mxu0 %v2039
        %2077 = vmatpush.bf16.msra.mxu0 %v2038
        %2078 = vmatmul.bf16.gmra.mxu0 %v1936
        %v2079 = vpop.f32.mrf.mxu0
        %v2080 = vadd.f32 %v1972, %v2079
        %v2081 = vpop.f32.mrf.mxu0
        %v2082 = vadd.f32 %v1972, %v2081
        %2083 = vdwg.mxu0
        %2084 = vmatpush.bf16.msra.mxu0 %v2053
        %2085 = vmatpush.bf16.msra.mxu0 %v2052
        %2086 = vmatpush.bf16.msra.mxu0 %v2051
        %2087 = vmatpush.bf16.msra.mxu0 %v2050
        %2088 = vmatpush.bf16.msra.mxu0 %v2049
        %2089 = vmatpush.bf16.msra.mxu0 %v2048
        %2090 = vmatpush.bf16.msra.mxu0 %v2047
        %2091 = vmatpush.bf16.msra.mxu0 %v2046
        %2092 = vmatmul.bf16.gmra.mxu0 %v1937
        %v2093 = vpop.f32.mrf.mxu0
        %v2094 = vadd.f32 %v2080, %v2093
        %v2095 = vpop.f32.mrf.mxu0
        %v2096 = vadd.f32 %v2082, %v2095
        %2097 = vdwg.mxu0
        %v2098 = vadd.f32 %v1767, %v2094
        %v2099 = vadd.f32 %v1768, %v2096
        %v2100 = vld [vmem:[%s14] sm:$0x1]
        %v2101 = vld [vmem:[#allocation7] sm:$0x1]
        %2102 = vadd.xlane.f32.xlu0 %v2098
        %v2103 = vpop.xlane.xlu0 %2102
        %2104 = vadd.xlane.f32.xlu0 %v2099
        %v2105 = vpop.xlane.xlu0 %2104
        %v2106 = vmul.f32 %v2103, %v847
        %v2107 = vmul.f32 %v2105, %v847
        %v2108 = vsub.f32 %v2098, %v2106
        %v2109 = vsub.f32 %v2099, %v2107
        %v2110 = vmul.f32 %v2108, %v2108
        %v2111 = vmul.f32 %v2109, %v2109
        %2112 = vadd.xlane.f32.xlu0 %v2110
        %v2113 = vpop.xlane.xlu0 %2112
        %2114 = vadd.xlane.f32.xlu0 %v2111
        %v2115 = vpop.xlane.xlu0 %2114
        %v2116 = vmul.f32 %v2113, %v847
        %v2117 = vmul.f32 %v2115, %v847
        %v2118 = vadd.f32 %v2116, 1e-12
        %v2119 = vadd.f32 %v2117, 1e-12
        %v2120 = vrsqrt.pop %v2118
        %v2121 = vmul.f32 %v2120, %v2118
        %v2122 = vmul.f32 %v2121, %v2120
        %v2123 = vmul.f32 0.5, %v2122
        %v2124 = vsub.f32 1.5, %v2123
        %v2125 = vmul.f32 %v2120, %v2124
        %vm2126 = vweird.f32 %v2118
        %vm2127 = vweird.f32 %v2120
        %vm2128 = vmor %vm2126, %vm2127
        %v2129 = vsel %vm2128, %v2120, %v2125
        %v2130 = vrsqrt.pop %v2119
        %v2131 = vmul.f32 %v2130, %v2119
        %v2132 = vmul.f32 %v2131, %v2130
        %v2133 = vmul.f32 0.5, %v2132
        %v2134 = vsub.f32 1.5, %v2133
        %v2135 = vmul.f32 %v2130, %v2134
        %vm2136 = vweird.f32 %v2119
        %vm2137 = vweird.f32 %v2130
        %vm2138 = vmor %vm2136, %vm2137
        %v2139 = vsel %vm2138, %v2130, %v2135
        %v2140 = vmul.f32 %v2108, %v2129
        %v2141 = vmul.f32 %v2109, %v2139
        %v2143 = vperm.slane %v2100, 0
        %v2145 = vmul.f32 %v2140, %v2143
        %v2146 = vmul.f32 %v2141, %v2143
        %v2148 = vperm.slane %v2101, 0
        %v2150 = vadd.f32 %v2145, %v2148
        %v2151 = vadd.f32 %v2146, %v2148
        %v2152 = vpack.c.bf16 %v2151, %v2150
        %s2153 = scalar_lea.vmem %s4, 192
        %v2154 = vld [vmem:[%s2153] sm:$0xff]
        %v2155 = vld [vmem:[%s2153 + $0x8] sm:$0xf]
        %v2156 = vld [vmem:[%s2153 + $0xc] sm:$0xff]
        %v2157 = vld [vmem:[%s2153 + $0x14] sm:$0xf]
        %v2158 = vld [vmem:[%s2153 + $0x18] sm:$0xff]
        %v2159 = vld [vmem:[%s2153 + $0x20] sm:$0xf]
        %v2160 = vld [vmem:[%s2153 + $0x24] sm:$0xff]
        %v2161 = vld [vmem:[%s2153 + $0x2c] sm:$0xf]
        %v2162 = vld [vmem:[%s2153 + $0x30] sm:$0xff]
        %v2163 = vld [vmem:[%s2153 + $0x38] sm:$0xf]
        %v2164 = vld [vmem:[%s2153 + $0x3c] sm:$0xff]
        %v2165 = vld [vmem:[%s2153 + $0x44] sm:$0xf]
        %v2166 = vld [vmem:[%s2153 + $0x48] sm:$0xff]
        %v2167 = vld [vmem:[%s2153 + $0x50] sm:$0xf]
        %v2168 = vld [vmem:[%s2153 + $0x54] sm:$0xff]
        %v2169 = vld [vmem:[%s2153 + $0x5c] sm:$0xf]
        %v2170 = vld [vmem:[%s2153 + $0x60] sm:$0xff]
        %v2171 = vld [vmem:[%s2153 + $0x68] sm:$0xf]
        %v2172 = vld [vmem:[%s2153 + $0x6c] sm:$0xff]
        %v2173 = vld [vmem:[%s2153 + $0x74] sm:$0xf]
        %v2174 = vld [vmem:[%s2153 + $0x78] sm:$0xff]
        %v2175 = vld [vmem:[%s2153 + $0x80] sm:$0xf]
        %v2176 = vld [vmem:[%s2153 + $0x84] sm:$0xff]
        %v2177 = vld [vmem:[%s2153 + $0x8c] sm:$0xf]
        %v2178 = vld [vmem:[%s2153 + $0x90] sm:$0xff]
        %v2179 = vld [vmem:[%s2153 + $0x98] sm:$0xf]
        %v2180 = vld [vmem:[%s2153 + $0x9c] sm:$0xff]
        %v2181 = vld [vmem:[%s2153 + $0xa4] sm:$0xf]
        %v2182 = vld [vmem:[%s2153 + $0xa8] sm:$0xff]
        %v2183 = vld [vmem:[%s2153 + $0xb0] sm:$0xf]
        %v2184 = vld [vmem:[%s2153 + $0xb4] sm:$0xff]
        %v2185 = vld [vmem:[%s2153 + $0xbc] sm:$0xf]
        %s2186 = scalar_lea.vmem %s5, 3
        %v2187 = vld [vmem:[%s2186] sm:$0x7]
        %v2189 = vperm.slane %v2187, 0
        %v2190 = vperm.slane %v2187, 1
        %v2191 = vperm.slane %v2187, 2
        %v2227 = vunpack.c.l.b16 %v2154
        %v2228 = vunpack.c.h.b16 %v2154
        %v2229 = vunpack.c.l.b16 %v2155
        %v2230 = vunpack.c.l.b16 %v2156
        %v2231 = vunpack.c.h.b16 %v2156
        %v2232 = vunpack.c.l.b16 %v2157
        %v2233 = vunpack.c.l.b16 %v2158
        %v2234 = vunpack.c.h.b16 %v2158
        %v2235 = vunpack.c.l.b16 %v2159
        %v2236 = vunpack.c.l.b16 %v2160
        %v2237 = vunpack.c.h.b16 %v2160
        %v2238 = vunpack.c.l.b16 %v2161
        %v2239 = vunpack.c.l.b16 %v2162
        %v2240 = vunpack.c.h.b16 %v2162
        %v2241 = vunpack.c.l.b16 %v2163
        %v2242 = vunpack.c.l.b16 %v2164
        %v2243 = vunpack.c.h.b16 %v2164
        %v2244 = vunpack.c.l.b16 %v2165
        %v2245 = vunpack.c.l.b16 %v2166
        %v2246 = vunpack.c.h.b16 %v2166
        %v2247 = vunpack.c.l.b16 %v2167
        %v2248 = vunpack.c.l.b16 %v2168
        %v2249 = vunpack.c.h.b16 %v2168
        %v2250 = vunpack.c.l.b16 %v2169
        %v2251 = vunpack.c.l.b16 %v2170
        %v2252 = vunpack.c.h.b16 %v2170
        %v2253 = vunpack.c.l.b16 %v2171
        %v2254 = vunpack.c.l.b16 %v2172
        %v2255 = vunpack.c.h.b16 %v2172
        %v2256 = vunpack.c.l.b16 %v2173
        %v2257 = vunpack.c.l.b16 %v2174
        %v2258 = vunpack.c.h.b16 %v2174
        %v2259 = vunpack.c.l.b16 %v2175
        %v2260 = vunpack.c.l.b16 %v2176
        %v2261 = vunpack.c.h.b16 %v2176
        %v2262 = vunpack.c.l.b16 %v2177
        %v2263 = vunpack.c.l.b16 %v2178
        %v2264 = vunpack.c.h.b16 %v2178
        %v2265 = vunpack.c.l.b16 %v2179
        %v2266 = vunpack.c.l.b16 %v2180
        %v2267 = vunpack.c.h.b16 %v2180
        %v2268 = vunpack.c.l.b16 %v2181
        %v2269 = vunpack.c.l.b16 %v2182
        %v2270 = vunpack.c.h.b16 %v2182
        %v2271 = vunpack.c.l.b16 %v2183
        %v2272 = vunpack.c.l.b16 %v2184
        %v2273 = vunpack.c.h.b16 %v2184
        %v2274 = vunpack.c.l.b16 %v2185
        %v2275 = vpack.c.b16 %v2230, %v2227
        %v2276 = vpack.c.b16 %v2231, %v2228
        %v2277 = vpack.c.b16 %v2232, %v2229
        %v2278 = vpack.c.b16 %v2236, %v2233
        %v2279 = vpack.c.b16 %v2237, %v2234
        %v2280 = vpack.c.b16 %v2238, %v2235
        %v2281 = vpack.c.b16 %v2242, %v2239
        %v2282 = vpack.c.b16 %v2243, %v2240
        %v2283 = vpack.c.b16 %v2244, %v2241
        %v2284 = vpack.c.b16 %v2248, %v2245
        %v2285 = vpack.c.b16 %v2249, %v2246
        %v2286 = vpack.c.b16 %v2250, %v2247
        %v2287 = vpack.c.b16 %v2254, %v2251
        %v2288 = vpack.c.b16 %v2255, %v2252
        %v2289 = vpack.c.b16 %v2256, %v2253
        %v2290 = vpack.c.b16 %v2260, %v2257
        %v2291 = vpack.c.b16 %v2261, %v2258
        %v2292 = vpack.c.b16 %v2262, %v2259
        %v2293 = vpack.c.b16 %v2266, %v2263
        %v2294 = vpack.c.b16 %v2267, %v2264
        %v2295 = vpack.c.b16 %v2268, %v2265
        %v2296 = vpack.c.b16 %v2272, %v2269
        %v2297 = vpack.c.b16 %v2273, %v2270
        %v2298 = vpack.c.b16 %v2274, %v2271
        %2323 = vmatpush.bf16.msra.mxu0 %v2296
        %2324 = vmatpush.bf16.msra.mxu0 %v2293
        %2325 = vmatpush.bf16.msra.mxu0 %v2290
        %2326 = vmatpush.bf16.msra.mxu0 %v2287
        %2327 = vmatpush.bf16.msra.mxu0 %v2284
        %2328 = vmatpush.bf16.msra.mxu0 %v2281
        %2329 = vmatpush.bf16.msra.mxu0 %v2278
        %2330 = vmatpush.bf16.msra.mxu0 %v2275
        %2331 = vmatmul.bf16.gmra.mxu0 %v2152
        %v2332 = vpop.f32.mrf.mxu0
        %v2333 = vadd.f32 %v2189, %v2332
        %v2334 = vpop.f32.mrf.mxu0
        %v2335 = vadd.f32 %v2189, %v2334
        %2336 = vdwg.mxu0
        %2337 = vmatpush.bf16.msra.mxu0 %v2297
        %2338 = vmatpush.bf16.msra.mxu0 %v2294
        %2339 = vmatpush.bf16.msra.mxu0 %v2291
        %2340 = vmatpush.bf16.msra.mxu0 %v2288
        %2341 = vmatpush.bf16.msra.mxu0 %v2285
        %2342 = vmatpush.bf16.msra.mxu0 %v2282
        %2343 = vmatpush.bf16.msra.mxu0 %v2279
        %2344 = vmatpush.bf16.msra.mxu0 %v2276
        %2345 = vmatmul.bf16.gmra.mxu0 %v2152
        %v2346 = vpop.f32.mrf.mxu0
        %v2347 = vadd.f32 %v2190, %v2346
        %v2348 = vpop.f32.mrf.mxu0
        %v2349 = vadd.f32 %v2190, %v2348
        %2350 = vdwg.mxu0
        %2351 = vmatpush.bf16.msra.mxu0 %v2298
        %2352 = vmatpush.bf16.msra.mxu0 %v2295
        %2353 = vmatpush.bf16.msra.mxu0 %v2292
        %2354 = vmatpush.bf16.msra.mxu0 %v2289
        %2355 = vmatpush.bf16.msra.mxu0 %v2286
        %2356 = vmatpush.bf16.msra.mxu0 %v2283
        %2357 = vmatpush.bf16.msra.mxu0 %v2280
        %2358 = vmatpush.bf16.msra.mxu0 %v2277
        %2359 = vmatmul.bf16.gmra.mxu0 %v2152
        %v2360 = vpop.f32.mrf.mxu0
        %v2361 = vadd.f32 %v2191, %v2360
        %v2362 = vpop.f32.mrf.mxu0
        %v2363 = vadd.f32 %v2191, %v2362
        %2364 = vdwg.mxu0
        %2367 = vrot.lane.b32.xlu0 %v2333, 96
        %v2368 = vpop.permute.xlu0 %2367
        %2369 = vrot.lane.b32.xlu0 %v2335, 96
        %v2370 = vpop.permute.xlu0 %2369
        %2373 = vrot.lane.b32.xlu0 %v2333, 64
        %v2374 = vpop.permute.xlu0 %2373
        %2375 = vrot.lane.b32.xlu0 %v2335, 64
        %v2376 = vpop.permute.xlu0 %2375
        %2379 = vrot.lane.b32.xlu0 %v2333, 32
        %v2380 = vpop.permute.xlu0 %2379
        %2381 = vrot.lane.b32.xlu0 %v2335, 32
        %v2382 = vpop.permute.xlu0 %2381
        %v2385 = vpack.c.bf16 %v2333, %v2333
        %v2386 = vpack.c.bf16 %v2335, %v2335
        %v2387 = vpack.c.bf16 %v2368, %v2368
        %v2388 = vpack.c.bf16 %v2370, %v2370
        %v2389 = vpack.c.bf16 %v2374, %v2374
        %v2390 = vpack.c.bf16 %v2376, %v2376
        %v2391 = vpack.c.bf16 %v2380, %v2380
        %v2392 = vpack.c.bf16 %v2382, %v2382
        %2395 = vrot.lane.b32.xlu0 %v2347, 96
        %v2396 = vpop.permute.xlu0 %2395
        %2397 = vrot.lane.b32.xlu0 %v2349, 96
        %v2398 = vpop.permute.xlu0 %2397
        %2401 = vrot.lane.b32.xlu0 %v2347, 64
        %v2402 = vpop.permute.xlu0 %2401
        %2403 = vrot.lane.b32.xlu0 %v2349, 64
        %v2404 = vpop.permute.xlu0 %2403
        %2407 = vrot.lane.b32.xlu0 %v2347, 32
        %v2408 = vpop.permute.xlu0 %2407
        %2409 = vrot.lane.b32.xlu0 %v2349, 32
        %v2410 = vpop.permute.xlu0 %2409
        %v2413 = vpack.c.bf16 %v2347, %v2347
        %v2414 = vpack.c.bf16 %v2349, %v2349
        %v2415 = vpack.c.bf16 %v2396, %v2396
        %v2416 = vpack.c.bf16 %v2398, %v2398
        %v2417 = vpack.c.bf16 %v2402, %v2402
        %v2418 = vpack.c.bf16 %v2404, %v2404
        %v2419 = vpack.c.bf16 %v2408, %v2408
        %v2420 = vpack.c.bf16 %v2410, %v2410
        %2423 = vrot.lane.b32.xlu0 %v2361, 96
        %v2424 = vpop.permute.xlu0 %2423
        %2425 = vrot.lane.b32.xlu0 %v2363, 96
        %v2426 = vpop.permute.xlu0 %2425
        %2429 = vrot.lane.b32.xlu0 %v2361, 64
        %v2430 = vpop.permute.xlu0 %2429
        %2431 = vrot.lane.b32.xlu0 %v2363, 64
        %v2432 = vpop.permute.xlu0 %2431
        %2435 = vrot.lane.b32.xlu0 %v2361, 32
        %v2436 = vpop.permute.xlu0 %2435
        %2437 = vrot.lane.b32.xlu0 %v2363, 32
        %v2438 = vpop.permute.xlu0 %2437
        %v2441 = vpack.c.bf16 %v2361, %v2361
        %v2442 = vpack.c.bf16 %v2363, %v2363
        %v2443 = vpack.c.bf16 %v2424, %v2424
        %v2444 = vpack.c.bf16 %v2426, %v2426
        %v2445 = vpack.c.bf16 %v2430, %v2430
        %v2446 = vpack.c.bf16 %v2432, %v2432
        %v2447 = vpack.c.bf16 %v2436, %v2436
        %v2448 = vpack.c.bf16 %v2438, %v2438
        %v2450 = vsel %vm1197, %v2385, 0
        %v2453 = vsel %vm1197, %v2413, 0
        %2455 = vmatpush.bf16.xpose.msra.mxu0 0
        %2456 = vmatpush.bf16.xpose.msra.mxu0 0
        %2457 = vmatpush.bf16.xpose.msra.mxu0 0
        %2458 = vmatpush.bf16.xpose.msra.mxu0 0
        %2459 = vmatpush.bf16.xpose.msra.mxu0 0
        %2460 = vmatpush.bf16.xpose.msra.mxu0 0
        %2461 = vmatpush.bf16.xpose.msra.mxu0 0
        %2462 = vmatpush.bf16.xpose.msra.mxu0 %v2453
        %2463 = vmatmul.bf16.gmra.mxu0 %v2450
        %v2464 = vpop.f32.mrf.mxu0
        %v2465 = vadd.f32 %v898, %v2464
        %v2466 = vpop.f32.mrf.mxu0
        %2467 = vdwg.mxu0
        %v2469 = vsel %vm1197, %v2386, 0
        %v2472 = vsel %vm1197, %v2414, 0
        %2474 = vmatpush.bf16.xpose.msra.mxu0 0
        %2475 = vmatpush.bf16.xpose.msra.mxu0 0
        %2476 = vmatpush.bf16.xpose.msra.mxu0 0
        %2477 = vmatpush.bf16.xpose.msra.mxu0 0
        %2478 = vmatpush.bf16.xpose.msra.mxu0 0
        %2479 = vmatpush.bf16.xpose.msra.mxu0 0
        %2480 = vmatpush.bf16.xpose.msra.mxu0 0
        %2481 = vmatpush.bf16.xpose.msra.mxu0 %v2472
        %2482 = vmatmul.bf16.gmra.mxu0 %v2469
        %v2483 = vpop.f32.mrf.mxu0
        %v2484 = vadd.f32 %v899, %v2483
        %v2485 = vpop.f32.mrf.mxu0
        %2486 = vdwg.mxu0
        %v2488 = vsel %vm1197, %v2387, 0
        %v2491 = vsel %vm1197, %v2415, 0
        %2493 = vmatpush.bf16.xpose.msra.mxu0 0
        %2494 = vmatpush.bf16.xpose.msra.mxu0 0
        %2495 = vmatpush.bf16.xpose.msra.mxu0 0
        %2496 = vmatpush.bf16.xpose.msra.mxu0 0
        %2497 = vmatpush.bf16.xpose.msra.mxu0 0
        %2498 = vmatpush.bf16.xpose.msra.mxu0 0
        %2499 = vmatpush.bf16.xpose.msra.mxu0 0
        %2500 = vmatpush.bf16.xpose.msra.mxu0 %v2491
        %2501 = vmatmul.bf16.gmra.mxu0 %v2488
        %v2502 = vpop.f32.mrf.mxu0
        %v2503 = vadd.f32 %v898, %v2502
        %v2504 = vpop.f32.mrf.mxu0
        %2505 = vdwg.mxu0
        %v2507 = vsel %vm1197, %v2388, 0
        %v2510 = vsel %vm1197, %v2416, 0
        %2512 = vmatpush.bf16.xpose.msra.mxu0 0
        %2513 = vmatpush.bf16.xpose.msra.mxu0 0
        %2514 = vmatpush.bf16.xpose.msra.mxu0 0
        %2515 = vmatpush.bf16.xpose.msra.mxu0 0
        %2516 = vmatpush.bf16.xpose.msra.mxu0 0
        %2517 = vmatpush.bf16.xpose.msra.mxu0 0
        %2518 = vmatpush.bf16.xpose.msra.mxu0 0
        %2519 = vmatpush.bf16.xpose.msra.mxu0 %v2510
        %2520 = vmatmul.bf16.gmra.mxu0 %v2507
        %v2521 = vpop.f32.mrf.mxu0
        %v2522 = vadd.f32 %v899, %v2521
        %v2523 = vpop.f32.mrf.mxu0
        %2524 = vdwg.mxu0
        %v2526 = vsel %vm1197, %v2389, 0
        %v2529 = vsel %vm1197, %v2417, 0
        %2531 = vmatpush.bf16.xpose.msra.mxu0 0
        %2532 = vmatpush.bf16.xpose.msra.mxu0 0
        %2533 = vmatpush.bf16.xpose.msra.mxu0 0
        %2534 = vmatpush.bf16.xpose.msra.mxu0 0
        %2535 = vmatpush.bf16.xpose.msra.mxu0 0
        %2536 = vmatpush.bf16.xpose.msra.mxu0 0
        %2537 = vmatpush.bf16.xpose.msra.mxu0 0
        %2538 = vmatpush.bf16.xpose.msra.mxu0 %v2529
        %2539 = vmatmul.bf16.gmra.mxu0 %v2526
        %v2540 = vpop.f32.mrf.mxu0
        %v2541 = vadd.f32 %v898, %v2540
        %v2542 = vpop.f32.mrf.mxu0
        %2543 = vdwg.mxu0
        %v2545 = vsel %vm1197, %v2390, 0
        %v2548 = vsel %vm1197, %v2418, 0
        %2550 = vmatpush.bf16.xpose.msra.mxu0 0
        %2551 = vmatpush.bf16.xpose.msra.mxu0 0
        %2552 = vmatpush.bf16.xpose.msra.mxu0 0
        %2553 = vmatpush.bf16.xpose.msra.mxu0 0
        %2554 = vmatpush.bf16.xpose.msra.mxu0 0
        %2555 = vmatpush.bf16.xpose.msra.mxu0 0
        %2556 = vmatpush.bf16.xpose.msra.mxu0 0
        %2557 = vmatpush.bf16.xpose.msra.mxu0 %v2548
        %2558 = vmatmul.bf16.gmra.mxu0 %v2545
        %v2559 = vpop.f32.mrf.mxu0
        %v2560 = vadd.f32 %v899, %v2559
        %v2561 = vpop.f32.mrf.mxu0
        %2562 = vdwg.mxu0
        %v2564 = vsel %vm1197, %v2391, 0
        %v2567 = vsel %vm1197, %v2419, 0
        %2569 = vmatpush.bf16.xpose.msra.mxu0 0
        %2570 = vmatpush.bf16.xpose.msra.mxu0 0
        %2571 = vmatpush.bf16.xpose.msra.mxu0 0
        %2572 = vmatpush.bf16.xpose.msra.mxu0 0
        %2573 = vmatpush.bf16.xpose.msra.mxu0 0
        %2574 = vmatpush.bf16.xpose.msra.mxu0 0
        %2575 = vmatpush.bf16.xpose.msra.mxu0 0
        %2576 = vmatpush.bf16.xpose.msra.mxu0 %v2567
        %2577 = vmatmul.bf16.gmra.mxu0 %v2564
        %v2578 = vpop.f32.mrf.mxu0
        %v2579 = vadd.f32 %v898, %v2578
        %v2580 = vpop.f32.mrf.mxu0
        %2581 = vdwg.mxu0
        %v2583 = vsel %vm1197, %v2392, 0
        %v2586 = vsel %vm1197, %v2420, 0
        %2588 = vmatpush.bf16.xpose.msra.mxu0 0
        %2589 = vmatpush.bf16.xpose.msra.mxu0 0
        %2590 = vmatpush.bf16.xpose.msra.mxu0 0
        %2591 = vmatpush.bf16.xpose.msra.mxu0 0
        %2592 = vmatpush.bf16.xpose.msra.mxu0 0
        %2593 = vmatpush.bf16.xpose.msra.mxu0 0
        %2594 = vmatpush.bf16.xpose.msra.mxu0 0
        %2595 = vmatpush.bf16.xpose.msra.mxu0 %v2586
        %2596 = vmatmul.bf16.gmra.mxu0 %v2583
        %v2597 = vpop.f32.mrf.mxu0
        %v2598 = vadd.f32 %v899, %v2597
        %v2599 = vpop.f32.mrf.mxu0
        %2600 = vdwg.mxu0
        %v2601 = vsel %vm1350, %v2465, -inf
        %2602 = vmax.xlane.f32.xlu0 %v2601
        %v2603 = vpop.xlane.xlu0 %2602
        %v2604 = vsel %vm1350, %v2484, -inf
        %2605 = vmax.xlane.f32.xlu0 %v2604
        %v2606 = vpop.xlane.xlu0 %2605
        %v2607 = vsel %vm1350, %v2503, -inf
        %2608 = vmax.xlane.f32.xlu0 %v2607
        %v2609 = vpop.xlane.xlu0 %2608
        %v2610 = vsel %vm1350, %v2522, -inf
        %2611 = vmax.xlane.f32.xlu0 %v2610
        %v2612 = vpop.xlane.xlu0 %2611
        %v2613 = vsel %vm1350, %v2541, -inf
        %2614 = vmax.xlane.f32.xlu0 %v2613
        %v2615 = vpop.xlane.xlu0 %2614
        %v2616 = vsel %vm1350, %v2560, -inf
        %2617 = vmax.xlane.f32.xlu0 %v2616
        %v2618 = vpop.xlane.xlu0 %2617
        %v2619 = vsel %vm1350, %v2579, -inf
        %2620 = vmax.xlane.f32.xlu0 %v2619
        %v2621 = vpop.xlane.xlu0 %2620
        %v2622 = vsel %vm1350, %v2598, -inf
        %2623 = vmax.xlane.f32.xlu0 %v2622
        %v2624 = vpop.xlane.xlu0 %2623
        %v2625 = vsub.f32 %v2465, %v2603
        %v2626 = vsub.f32 %v2484, %v2606
        %v2627 = vsub.f32 %v2503, %v2609
        %v2628 = vsub.f32 %v2522, %v2612
        %v2629 = vsub.f32 %v2541, %v2615
        %v2630 = vsub.f32 %v2560, %v2618
        %v2631 = vsub.f32 %v2579, %v2621
        %v2632 = vsub.f32 %v2598, %v2624
        %v2633 = vmul.f32 %v2625, 1.442695
        %v2634 = vpow.pop %v2633
        %v2635 = vmul.f32 %v2626, 1.442695
        %v2636 = vpow.pop %v2635
        %v2637 = vmul.f32 %v2627, 1.442695
        %v2638 = vpow.pop %v2637
        %v2639 = vmul.f32 %v2628, 1.442695
        %v2640 = vpow.pop %v2639
        %v2641 = vmul.f32 %v2629, 1.442695
        %v2642 = vpow.pop %v2641
        %v2643 = vmul.f32 %v2630, 1.442695
        %v2644 = vpow.pop %v2643
        %v2645 = vmul.f32 %v2631, 1.442695
        %v2646 = vpow.pop %v2645
        %v2647 = vmul.f32 %v2632, 1.442695
        %v2648 = vpow.pop %v2647
        %v2649 = vsel %vm1350, %v2634, 0.0
        %2650 = vadd.xlane.f32.xlu0 %v2649
        %v2651 = vpop.xlane.xlu0 %2650
        %v2652 = vsel %vm1350, %v2636, 0.0
        %2653 = vadd.xlane.f32.xlu0 %v2652
        %v2654 = vpop.xlane.xlu0 %2653
        %v2655 = vsel %vm1350, %v2638, 0.0
        %2656 = vadd.xlane.f32.xlu0 %v2655
        %v2657 = vpop.xlane.xlu0 %2656
        %v2658 = vsel %vm1350, %v2640, 0.0
        %2659 = vadd.xlane.f32.xlu0 %v2658
        %v2660 = vpop.xlane.xlu0 %2659
        %v2661 = vsel %vm1350, %v2642, 0.0
        %2662 = vadd.xlane.f32.xlu0 %v2661
        %v2663 = vpop.xlane.xlu0 %2662
        %v2664 = vsel %vm1350, %v2644, 0.0
        %2665 = vadd.xlane.f32.xlu0 %v2664
        %v2666 = vpop.xlane.xlu0 %2665
        %v2667 = vsel %vm1350, %v2646, 0.0
        %2668 = vadd.xlane.f32.xlu0 %v2667
        %v2669 = vpop.xlane.xlu0 %2668
        %v2670 = vsel %vm1350, %v2648, 0.0
        %2671 = vadd.xlane.f32.xlu0 %v2670
        %v2672 = vpop.xlane.xlu0 %2671
        %v2673 = vrcp.pop %v2651
        %v2674 = vrcp.pop %v2654
        %v2675 = vrcp.pop %v2657
        %v2676 = vrcp.pop %v2660
        %v2677 = vrcp.pop %v2663
        %v2678 = vrcp.pop %v2666
        %v2679 = vrcp.pop %v2669
        %v2680 = vrcp.pop %v2672
        %v2681 = vmul.f32 %v2634, %v2673
        %v2682 = vmul.f32 %v2636, %v2674
        %v2683 = vmul.f32 %v2638, %v2675
        %v2684 = vmul.f32 %v2640, %v2676
        %v2685 = vmul.f32 %v2642, %v2677
        %v2686 = vmul.f32 %v2644, %v2678
        %v2687 = vmul.f32 %v2646, %v2679
        %v2688 = vmul.f32 %v2648, %v2680
        %v2689 = vpack.c.bf16 %v2681, %v2681
        %v2690 = vpack.c.bf16 %v2682, %v2682
        %v2691 = vpack.c.bf16 %v2683, %v2683
        %v2692 = vpack.c.bf16 %v2684, %v2684
        %v2693 = vpack.c.bf16 %v2685, %v2685
        %v2694 = vpack.c.bf16 %v2686, %v2686
        %v2695 = vpack.c.bf16 %v2687, %v2687
        %v2696 = vpack.c.bf16 %v2688, %v2688
        %v2698 = vsel %vm1350, %v2689, 0
        %v2701 = vsel %vm1450, %v2441, 0
        %2703 = vmatpush.bf16.msra.mxu0 0
        %2704 = vmatpush.bf16.msra.mxu0 0
        %2705 = vmatpush.bf16.msra.mxu0 0
        %2706 = vmatpush.bf16.msra.mxu0 0
        %2707 = vmatpush.bf16.msra.mxu0 0
        %2708 = vmatpush.bf16.msra.mxu0 0
        %2709 = vmatpush.bf16.msra.mxu0 0
        %2710 = vmatpush.bf16.msra.mxu0 %v2701
        %2711 = vmatmul.bf16.gmra.mxu0 %v2698
        %v2712 = vpop.f32.mrf.mxu0
        %v2713 = vadd.f32 0.0, %v2712
        %v2714 = vpop.f32.mrf.mxu0
        %2715 = vdwg.mxu0
        %v2717 = vsel %vm1350, %v2690, 0
        %v2720 = vsel %vm1450, %v2442, 0
        %2722 = vmatpush.bf16.msra.mxu0 0
        %2723 = vmatpush.bf16.msra.mxu0 0
        %2724 = vmatpush.bf16.msra.mxu0 0
        %2725 = vmatpush.bf16.msra.mxu0 0
        %2726 = vmatpush.bf16.msra.mxu0 0
        %2727 = vmatpush.bf16.msra.mxu0 0
        %2728 = vmatpush.bf16.msra.mxu0 0
        %2729 = vmatpush.bf16.msra.mxu0 %v2720
        %2730 = vmatmul.bf16.gmra.mxu0 %v2717
        %v2731 = vpop.f32.mrf.mxu0
        %v2732 = vadd.f32 0.0, %v2731
        %v2733 = vpop.f32.mrf.mxu0
        %2734 = vdwg.mxu0
        %v2736 = vsel %vm1350, %v2691, 0
        %v2739 = vsel %vm1450, %v2443, 0
        %2741 = vmatpush.bf16.msra.mxu0 0
        %2742 = vmatpush.bf16.msra.mxu0 0
        %2743 = vmatpush.bf16.msra.mxu0 0
        %2744 = vmatpush.bf16.msra.mxu0 0
        %2745 = vmatpush.bf16.msra.mxu0 0
        %2746 = vmatpush.bf16.msra.mxu0 0
        %2747 = vmatpush.bf16.msra.mxu0 0
        %2748 = vmatpush.bf16.msra.mxu0 %v2739
        %2749 = vmatmul.bf16.gmra.mxu0 %v2736
        %v2750 = vpop.f32.mrf.mxu0
        %v2751 = vadd.f32 0.0, %v2750
        %v2752 = vpop.f32.mrf.mxu0
        %2753 = vdwg.mxu0
        %v2755 = vsel %vm1350, %v2692, 0
        %v2758 = vsel %vm1450, %v2444, 0
        %2760 = vmatpush.bf16.msra.mxu0 0
        %2761 = vmatpush.bf16.msra.mxu0 0
        %2762 = vmatpush.bf16.msra.mxu0 0
        %2763 = vmatpush.bf16.msra.mxu0 0
        %2764 = vmatpush.bf16.msra.mxu0 0
        %2765 = vmatpush.bf16.msra.mxu0 0
        %2766 = vmatpush.bf16.msra.mxu0 0
        %2767 = vmatpush.bf16.msra.mxu0 %v2758
        %2768 = vmatmul.bf16.gmra.mxu0 %v2755
        %v2769 = vpop.f32.mrf.mxu0
        %v2770 = vadd.f32 0.0, %v2769
        %v2771 = vpop.f32.mrf.mxu0
        %2772 = vdwg.mxu0
        %v2774 = vsel %vm1350, %v2693, 0
        %v2777 = vsel %vm1450, %v2445, 0
        %2779 = vmatpush.bf16.msra.mxu0 0
        %2780 = vmatpush.bf16.msra.mxu0 0
        %2781 = vmatpush.bf16.msra.mxu0 0
        %2782 = vmatpush.bf16.msra.mxu0 0
        %2783 = vmatpush.bf16.msra.mxu0 0
        %2784 = vmatpush.bf16.msra.mxu0 0
        %2785 = vmatpush.bf16.msra.mxu0 0
        %2786 = vmatpush.bf16.msra.mxu0 %v2777
        %2787 = vmatmul.bf16.gmra.mxu0 %v2774
        %v2788 = vpop.f32.mrf.mxu0
        %v2789 = vadd.f32 0.0, %v2788
        %v2790 = vpop.f32.mrf.mxu0
        %2791 = vdwg.mxu0
        %v2793 = vsel %vm1350, %v2694, 0
        %v2796 = vsel %vm1450, %v2446, 0
        %2798 = vmatpush.bf16.msra.mxu0 0
        %2799 = vmatpush.bf16.msra.mxu0 0
        %2800 = vmatpush.bf16.msra.mxu0 0
        %2801 = vmatpush.bf16.msra.mxu0 0
        %2802 = vmatpush.bf16.msra.mxu0 0
        %2803 = vmatpush.bf16.msra.mxu0 0
        %2804 = vmatpush.bf16.msra.mxu0 0
        %2805 = vmatpush.bf16.msra.mxu0 %v2796
        %2806 = vmatmul.bf16.gmra.mxu0 %v2793
        %v2807 = vpop.f32.mrf.mxu0
        %v2808 = vadd.f32 0.0, %v2807
        %v2809 = vpop.f32.mrf.mxu0
        %2810 = vdwg.mxu0
        %v2812 = vsel %vm1350, %v2695, 0
        %v2815 = vsel %vm1450, %v2447, 0
        %2817 = vmatpush.bf16.msra.mxu0 0
        %2818 = vmatpush.bf16.msra.mxu0 0
        %2819 = vmatpush.bf16.msra.mxu0 0
        %2820 = vmatpush.bf16.msra.mxu0 0
        %2821 = vmatpush.bf16.msra.mxu0 0
        %2822 = vmatpush.bf16.msra.mxu0 0
        %2823 = vmatpush.bf16.msra.mxu0 0
        %2824 = vmatpush.bf16.msra.mxu0 %v2815
        %2825 = vmatmul.bf16.gmra.mxu0 %v2812
        %v2826 = vpop.f32.mrf.mxu0
        %v2827 = vadd.f32 0.0, %v2826
        %v2828 = vpop.f32.mrf.mxu0
        %2829 = vdwg.mxu0
        %v2831 = vsel %vm1350, %v2696, 0
        %v2834 = vsel %vm1450, %v2448, 0
        %2836 = vmatpush.bf16.msra.mxu0 0
        %2837 = vmatpush.bf16.msra.mxu0 0
        %2838 = vmatpush.bf16.msra.mxu0 0
        %2839 = vmatpush.bf16.msra.mxu0 0
        %2840 = vmatpush.bf16.msra.mxu0 0
        %2841 = vmatpush.bf16.msra.mxu0 0
        %2842 = vmatpush.bf16.msra.mxu0 0
        %2843 = vmatpush.bf16.msra.mxu0 %v2834
        %2844 = vmatmul.bf16.gmra.mxu0 %v2831
        %v2845 = vpop.f32.mrf.mxu0
        %v2846 = vadd.f32 0.0, %v2845
        %v2847 = vpop.f32.mrf.mxu0
        %2848 = vdwg.mxu0
        %2851 = vrot.lane.b32.xlu0 %v2751, 32
        %v2852 = vpop.permute.xlu0 %2851
        %2853 = vrot.lane.b32.xlu0 %v2770, 32
        %v2854 = vpop.permute.xlu0 %2853
        %2859 = vrot.lane.b32.xlu0 %v2789, 64
        %v2860 = vpop.permute.xlu0 %2859
        %2861 = vrot.lane.b32.xlu0 %v2808, 64
        %v2862 = vpop.permute.xlu0 %2861
        %2867 = vrot.lane.b32.xlu0 %v2827, 96
        %v2868 = vpop.permute.xlu0 %2867
        %2869 = vrot.lane.b32.xlu0 %v2846, 96
        %v2870 = vpop.permute.xlu0 %2869
        %v2873 = vsel %vm1197, %v2713, %v2852
        %v2874 = vsel %vm1197, %v2732, %v2854
        %v2875 = vsel %vm1626, %v2873, %v2860
        %v2876 = vsel %vm1626, %v2874, %v2862
        %v2877 = vsel %vm1629, %v2875, %v2868
        %v2878 = vsel %vm1629, %v2876, %v2870
        %v2879 = vpack.c.bf16 %v2878, %v2877
        %s2880 = scalar_lea.vmem [#allocation2], 64
        %v2881 = vld [vmem:[%s2880] sm:$0xf]
        %v2882 = vld [vmem:[%s2880 + $0x4] sm:$0xf]
        %v2883 = vld [vmem:[%s2880 + $0x8] sm:$0xf]
        %v2884 = vld [vmem:[%s2880 + $0xc] sm:$0xf]
        %v2885 = vld [vmem:[%s2880 + $0x10] sm:$0xf]
        %v2886 = vld [vmem:[%s2880 + $0x14] sm:$0xf]
        %v2887 = vld [vmem:[%s2880 + $0x18] sm:$0xf]
        %v2888 = vld [vmem:[%s2880 + $0x1c] sm:$0xf]
        %v2889 = vld [vmem:[%s2880 + $0x20] sm:$0xf]
        %v2890 = vld [vmem:[%s2880 + $0x24] sm:$0xf]
        %v2891 = vld [vmem:[%s2880 + $0x28] sm:$0xf]
        %v2892 = vld [vmem:[%s2880 + $0x2c] sm:$0xf]
        %v2893 = vld [vmem:[%s2880 + $0x30] sm:$0xf]
        %v2894 = vld [vmem:[%s2880 + $0x34] sm:$0xf]
        %v2895 = vld [vmem:[%s2880 + $0x38] sm:$0xf]
        %v2896 = vld [vmem:[%s2880 + $0x3c] sm:$0xf]
        %s2897 = scalar_lea.vmem %s7, 1
        %v2898 = vld [vmem:[%s2897] sm:$0x1]
        %v2900 = vperm.slane %v2898, 0
        %v2918 = vunpack.c.l.b16 %v2881
        %v2919 = vunpack.c.l.b16 %v2882
        %v2920 = vunpack.c.l.b16 %v2883
        %v2921 = vunpack.c.l.b16 %v2884
        %v2922 = vunpack.c.l.b16 %v2885
        %v2923 = vunpack.c.l.b16 %v2886
        %v2924 = vunpack.c.l.b16 %v2887
        %v2925 = vunpack.c.l.b16 %v2888
        %v2926 = vunpack.c.l.b16 %v2889
        %v2927 = vunpack.c.l.b16 %v2890
        %v2928 = vunpack.c.l.b16 %v2891
        %v2929 = vunpack.c.l.b16 %v2892
        %v2930 = vunpack.c.l.b16 %v2893
        %v2931 = vunpack.c.l.b16 %v2894
        %v2932 = vunpack.c.l.b16 %v2895
        %v2933 = vunpack.c.l.b16 %v2896
        %v2934 = vpack.c.b16 %v2919, %v2918
        %v2935 = vpack.c.b16 %v2921, %v2920
        %v2936 = vpack.c.b16 %v2923, %v2922
        %v2937 = vpack.c.b16 %v2925, %v2924
        %v2938 = vpack.c.b16 %v2927, %v2926
        %v2939 = vpack.c.b16 %v2929, %v2928
        %v2940 = vpack.c.b16 %v2931, %v2930
        %v2941 = vpack.c.b16 %v2933, %v2932
        %2950 = vmatpush.bf16.msra.mxu0 %v2941
        %2951 = vmatpush.bf16.msra.mxu0 %v2940
        %2952 = vmatpush.bf16.msra.mxu0 %v2939
        %2953 = vmatpush.bf16.msra.mxu0 %v2938
        %2954 = vmatpush.bf16.msra.mxu0 %v2937
        %2955 = vmatpush.bf16.msra.mxu0 %v2936
        %2956 = vmatpush.bf16.msra.mxu0 %v2935
        %2957 = vmatpush.bf16.msra.mxu0 %v2934
        %2958 = vmatmul.bf16.gmra.mxu0 %v2879
        %v2959 = vpop.f32.mrf.mxu0
        %v2960 = vadd.f32 %v2900, %v2959
        %v2961 = vpop.f32.mrf.mxu0
        %v2962 = vadd.f32 %v2900, %v2961
        %2963 = vdwg.mxu0
        %v2964 = vadd.f32 %v2150, %v2960
        %v2965 = vadd.f32 %v2151, %v2962
        %s2966 = scalar_lea.vmem %s8, 1
        %v2967 = vld [vmem:[%s2966] sm:$0x1]
        %s2968 = scalar_lea.vmem %s9, 1
        %v2969 = vld [vmem:[%s2968] sm:$0x1]
        %2970 = vadd.xlane.f32.xlu0 %v2964
        %v2971 = vpop.xlane.xlu0 %2970
        %2972 = vadd.xlane.f32.xlu0 %v2965
        %v2973 = vpop.xlane.xlu0 %2972
        %v2974 = vmul.f32 %v2971, %v847
        %v2975 = vmul.f32 %v2973, %v847
        %v2976 = vsub.f32 %v2964, %v2974
        %v2977 = vsub.f32 %v2965, %v2975
        %v2978 = vmul.f32 %v2976, %v2976
        %v2979 = vmul.f32 %v2977, %v2977
        %2980 = vadd.xlane.f32.xlu0 %v2978
        %v2981 = vpop.xlane.xlu0 %2980
        %2982 = vadd.xlane.f32.xlu0 %v2979
        %v2983 = vpop.xlane.xlu0 %2982
        %v2984 = vmul.f32 %v2981, %v847
        %v2985 = vmul.f32 %v2983, %v847
        %v2986 = vadd.f32 %v2984, 1e-12
        %v2987 = vadd.f32 %v2985, 1e-12
        %v2988 = vrsqrt.pop %v2986
        %v2989 = vmul.f32 %v2988, %v2986
        %v2990 = vmul.f32 %v2989, %v2988
        %v2991 = vmul.f32 0.5, %v2990
        %v2992 = vsub.f32 1.5, %v2991
        %v2993 = vmul.f32 %v2988, %v2992
        %vm2994 = vweird.f32 %v2986
        %vm2995 = vweird.f32 %v2988
        %vm2996 = vmor %vm2994, %vm2995
        %v2997 = vsel %vm2996, %v2988, %v2993
        %v2998 = vrsqrt.pop %v2987
        %v2999 = vmul.f32 %v2998, %v2987
        %v3000 = vmul.f32 %v2999, %v2998
        %v3001 = vmul.f32 0.5, %v3000
        %v3002 = vsub.f32 1.5, %v3001
        %v3003 = vmul.f32 %v2998, %v3002
        %vm3004 = vweird.f32 %v2987
        %vm3005 = vweird.f32 %v2998
        %vm3006 = vmor %vm3004, %vm3005
        %v3007 = vsel %vm3006, %v2998, %v3003
        %v3008 = vmul.f32 %v2976, %v2997
        %v3009 = vmul.f32 %v2977, %v3007
        %v3011 = vperm.slane %v2967, 0
        %v3013 = vmul.f32 %v3008, %v3011
        %v3014 = vmul.f32 %v3009, %v3011
        %v3016 = vperm.slane %v2969, 0
        %v3018 = vadd.f32 %v3013, %v3016
        %v3019 = vadd.f32 %v3014, %v3016
        %v3020 = vpack.c.bf16 %v3019, %v3018
        %s3021 = scalar_lea.vmem [#allocation4], 128
        %v3022 = vld [vmem:[%s3021] sm:$0xff]
        %v3023 = vld [vmem:[%s3021 + $0x8] sm:$0xff]
        %v3024 = vld [vmem:[%s3021 + $0x10] sm:$0xff]
        %v3025 = vld [vmem:[%s3021 + $0x18] sm:$0xff]
        %v3026 = vld [vmem:[%s3021 + $0x20] sm:$0xff]
        %v3027 = vld [vmem:[%s3021 + $0x28] sm:$0xff]
        %v3028 = vld [vmem:[%s3021 + $0x30] sm:$0xff]
        %v3029 = vld [vmem:[%s3021 + $0x38] sm:$0xff]
        %v3030 = vld [vmem:[%s3021 + $0x40] sm:$0xff]
        %v3031 = vld [vmem:[%s3021 + $0x48] sm:$0xff]
        %v3032 = vld [vmem:[%s3021 + $0x50] sm:$0xff]
        %v3033 = vld [vmem:[%s3021 + $0x58] sm:$0xff]
        %v3034 = vld [vmem:[%s3021 + $0x60] sm:$0xff]
        %v3035 = vld [vmem:[%s3021 + $0x68] sm:$0xff]
        %v3036 = vld [vmem:[%s3021 + $0x70] sm:$0xff]
        %v3037 = vld [vmem:[%s3021 + $0x78] sm:$0xff]
        %s3038 = scalar_lea.vmem %s11, 2
        %v3039 = vld [vmem:[%s3038] sm:$0x3]
        %v3041 = vperm.slane %v3039, 0
        %v3042 = vperm.slane %v3039, 1
        %v3061 = vunpack.c.l.b16 %v3022
        %v3062 = vunpack.c.h.b16 %v3022
        %v3063 = vunpack.c.l.b16 %v3023
        %v3064 = vunpack.c.h.b16 %v3023
        %v3065 = vunpack.c.l.b16 %v3024
        %v3066 = vunpack.c.h.b16 %v3024
        %v3067 = vunpack.c.l.b16 %v3025
        %v3068 = vunpack.c.h.b16 %v3025
        %v3069 = vunpack.c.l.b16 %v3026
        %v3070 = vunpack.c.h.b16 %v3026
        %v3071 = vunpack.c.l.b16 %v3027
        %v3072 = vunpack.c.h.b16 %v3027
        %v3073 = vunpack.c.l.b16 %v3028
        %v3074 = vunpack.c.h.b16 %v3028
        %v3075 = vunpack.c.l.b16 %v3029
        %v3076 = vunpack.c.h.b16 %v3029
        %v3077 = vunpack.c.l.b16 %v3030
        %v3078 = vunpack.c.h.b16 %v3030
        %v3079 = vunpack.c.l.b16 %v3031
        %v3080 = vunpack.c.h.b16 %v3031
        %v3081 = vunpack.c.l.b16 %v3032
        %v3082 = vunpack.c.h.b16 %v3032
        %v3083 = vunpack.c.l.b16 %v3033
        %v3084 = vunpack.c.h.b16 %v3033
        %v3085 = vunpack.c.l.b16 %v3034
        %v3086 = vunpack.c.h.b16 %v3034
        %v3087 = vunpack.c.l.b16 %v3035
        %v3088 = vunpack.c.h.b16 %v3035
        %v3089 = vunpack.c.l.b16 %v3036
        %v3090 = vunpack.c.h.b16 %v3036
        %v3091 = vunpack.c.l.b16 %v3037
        %v3092 = vunpack.c.h.b16 %v3037
        %v3093 = vpack.c.b16 %v3063, %v3061
        %v3094 = vpack.c.b16 %v3064, %v3062
        %v3095 = vpack.c.b16 %v3067, %v3065
        %v3096 = vpack.c.b16 %v3068, %v3066
        %v3097 = vpack.c.b16 %v3071, %v3069
        %v3098 = vpack.c.b16 %v3072, %v3070
        %v3099 = vpack.c.b16 %v3075, %v3073
        %v3100 = vpack.c.b16 %v3076, %v3074
        %v3101 = vpack.c.b16 %v3079, %v3077
        %v3102 = vpack.c.b16 %v3080, %v3078
        %v3103 = vpack.c.b16 %v3083, %v3081
        %v3104 = vpack.c.b16 %v3084, %v3082
        %v3105 = vpack.c.b16 %v3087, %v3085
        %v3106 = vpack.c.b16 %v3088, %v3086
        %v3107 = vpack.c.b16 %v3091, %v3089
        %v3108 = vpack.c.b16 %v3092, %v3090
        %3125 = vmatpush.bf16.msra.mxu0 %v3107
        %3126 = vmatpush.bf16.msra.mxu0 %v3105
        %3127 = vmatpush.bf16.msra.mxu0 %v3103
        %3128 = vmatpush.bf16.msra.mxu0 %v3101
        %3129 = vmatpush.bf16.msra.mxu0 %v3099
        %3130 = vmatpush.bf16.msra.mxu0 %v3097
        %3131 = vmatpush.bf16.msra.mxu0 %v3095
        %3132 = vmatpush.bf16.msra.mxu0 %v3093
        %3133 = vmatmul.bf16.gmra.mxu0 %v3020
        %v3134 = vpop.f32.mrf.mxu0
        %v3135 = vadd.f32 %v3041, %v3134
        %v3136 = vpop.f32.mrf.mxu0
        %v3137 = vadd.f32 %v3041, %v3136
        %3138 = vdwg.mxu0
        %3139 = vmatpush.bf16.msra.mxu0 %v3108
        %3140 = vmatpush.bf16.msra.mxu0 %v3106
        %3141 = vmatpush.bf16.msra.mxu0 %v3104
        %3142 = vmatpush.bf16.msra.mxu0 %v3102
        %3143 = vmatpush.bf16.msra.mxu0 %v3100
        %3144 = vmatpush.bf16.msra.mxu0 %v3098
        %3145 = vmatpush.bf16.msra.mxu0 %v3096
        %3146 = vmatpush.bf16.msra.mxu0 %v3094
        %3147 = vmatmul.bf16.gmra.mxu0 %v3020
        %v3148 = vpop.f32.mrf.mxu0
        %v3149 = vadd.f32 %v3042, %v3148
        %v3150 = vpop.f32.mrf.mxu0
        %v3151 = vadd.f32 %v3042, %v3150
        %3152 = vdwg.mxu0
        %v3153 = vmul.f32 %v3135, %v3135
        %v3154 = vmul.f32 %v3149, %v3149
        %v3155 = vmul.f32 %v3137, %v3137
        %v3156 = vmul.f32 %v3151, %v3151
        %v3157 = vmul.f32 %v3135, %v3153
        %v3158 = vmul.f32 %v3149, %v3154
        %v3159 = vmul.f32 %v3137, %v3155
        %v3160 = vmul.f32 %v3151, %v3156
        %v3161 = vmul.f32 %v3157, 0.044715
        %v3162 = vmul.f32 %v3158, 0.044715
        %v3163 = vmul.f32 %v3159, 0.044715
        %v3164 = vmul.f32 %v3160, 0.044715
        %v3165 = vadd.f32 %v3135, %v3161
        %v3166 = vadd.f32 %v3149, %v3162
        %v3167 = vadd.f32 %v3137, %v3163
        %v3168 = vadd.f32 %v3151, %v3164
        %v3169 = vmul.f32 %v3165, 0.7978846
        %v3170 = vmul.f32 %v3166, 0.7978846
        %v3171 = vmul.f32 %v3167, 0.7978846
        %v3172 = vmul.f32 %v3168, 0.7978846
        %v3173 = vtanh.pop %v3169
        %v3174 = vtanh.pop %v3170
        %v3175 = vtanh.pop %v3171
        %v3176 = vtanh.pop %v3172
        %v3177 = vadd.f32 %v3173, 1.0
        %v3178 = vadd.f32 %v3174, 1.0
        %v3179 = vadd.f32 %v3175, 1.0
        %v3180 = vadd.f32 %v3176, 1.0
        %v3181 = vmul.f32 %v3177, 0.5
        %v3182 = vmul.f32 %v3178, 0.5
        %v3183 = vmul.f32 %v3179, 0.5
        %v3184 = vmul.f32 %v3180, 0.5
        %v3185 = vmul.f32 %v3135, %v3181
        %v3186 = vmul.f32 %v3149, %v3182
        %v3187 = vmul.f32 %v3137, %v3183
        %v3188 = vmul.f32 %v3151, %v3184
        %v3189 = vpack.c.bf16 %v3187, %v3185
        %v3190 = vpack.c.bf16 %v3188, %v3186
        %s3191 = scalar_lea.vmem [#allocation6], 128
        %v3192 = vld [vmem:[%s3191] sm:$0xf]
        %v3193 = vld [vmem:[%s3191 + $0x4] sm:$0xf]
        %v3194 = vld [vmem:[%s3191 + $0x8] sm:$0xf]
        %v3195 = vld [vmem:[%s3191 + $0xc] sm:$0xf]
        %v3196 = vld [vmem:[%s3191 + $0x10] sm:$0xf]
        %v3197 = vld [vmem:[%s3191 + $0x14] sm:$0xf]
        %v3198 = vld [vmem:[%s3191 + $0x18] sm:$0xf]
        %v3199 = vld [vmem:[%s3191 + $0x1c] sm:$0xf]
        %v3200 = vld [vmem:[%s3191 + $0x20] sm:$0xf]
        %v3201 = vld [vmem:[%s3191 + $0x24] sm:$0xf]
        %v3202 = vld [vmem:[%s3191 + $0x28] sm:$0xf]
        %v3203 = vld [vmem:[%s3191 + $0x2c] sm:$0xf]
        %v3204 = vld [vmem:[%s3191 + $0x30] sm:$0xf]
        %v3205 = vld [vmem:[%s3191 + $0x34] sm:$0xf]
        %v3206 = vld [vmem:[%s3191 + $0x38] sm:$0xf]
        %v3207 = vld [vmem:[%s3191 + $0x3c] sm:$0xf]
        %v3208 = vld [vmem:[%s3191 + $0x40] sm:$0xf]
        %v3209 = vld [vmem:[%s3191 + $0x44] sm:$0xf]
        %v3210 = vld [vmem:[%s3191 + $0x48] sm:$0xf]
        %v3211 = vld [vmem:[%s3191 + $0x4c] sm:$0xf]
        %v3212 = vld [vmem:[%s3191 + $0x50] sm:$0xf]
        %v3213 = vld [vmem:[%s3191 + $0x54] sm:$0xf]
        %v3214 = vld [vmem:[%s3191 + $0x58] sm:$0xf]
        %v3215 = vld [vmem:[%s3191 + $0x5c] sm:$0xf]
        %v3216 = vld [vmem:[%s3191 + $0x60] sm:$0xf]
        %v3217 = vld [vmem:[%s3191 + $0x64] sm:$0xf]
        %v3218 = vld [vmem:[%s3191 + $0x68] sm:$0xf]
        %v3219 = vld [vmem:[%s3191 + $0x6c] sm:$0xf]
        %v3220 = vld [vmem:[%s3191 + $0x70] sm:$0xf]
        %v3221 = vld [vmem:[%s3191 + $0x74] sm:$0xf]
        %v3222 = vld [vmem:[%s3191 + $0x78] sm:$0xf]
        %v3223 = vld [vmem:[%s3191 + $0x7c] sm:$0xf]
        %s3224 = scalar_lea.vmem %s13, 1
        %v3225 = vld [vmem:[%s3224] sm:$0x1]
        %v3227 = vperm.slane %v3225, 0
        %v3261 = vunpack.c.l.b16 %v3192
        %v3262 = vunpack.c.l.b16 %v3193
        %v3263 = vunpack.c.l.b16 %v3194
        %v3264 = vunpack.c.l.b16 %v3195
        %v3265 = vunpack.c.l.b16 %v3196
        %v3266 = vunpack.c.l.b16 %v3197
        %v3267 = vunpack.c.l.b16 %v3198
        %v3268 = vunpack.c.l.b16 %v3199
        %v3269 = vunpack.c.l.b16 %v3200
        %v3270 = vunpack.c.l.b16 %v3201
        %v3271 = vunpack.c.l.b16 %v3202
        %v3272 = vunpack.c.l.b16 %v3203
        %v3273 = vunpack.c.l.b16 %v3204
        %v3274 = vunpack.c.l.b16 %v3205
        %v3275 = vunpack.c.l.b16 %v3206
        %v3276 = vunpack.c.l.b16 %v3207
        %v3277 = vunpack.c.l.b16 %v3208
        %v3278 = vunpack.c.l.b16 %v3209
        %v3279 = vunpack.c.l.b16 %v3210
        %v3280 = vunpack.c.l.b16 %v3211
        %v3281 = vunpack.c.l.b16 %v3212
        %v3282 = vunpack.c.l.b16 %v3213
        %v3283 = vunpack.c.l.b16 %v3214
        %v3284 = vunpack.c.l.b16 %v3215
        %v3285 = vunpack.c.l.b16 %v3216
        %v3286 = vunpack.c.l.b16 %v3217
        %v3287 = vunpack.c.l.b16 %v3218
        %v3288 = vunpack.c.l.b16 %v3219
        %v3289 = vunpack.c.l.b16 %v3220
        %v3290 = vunpack.c.l.b16 %v3221
        %v3291 = vunpack.c.l.b16 %v3222
        %v3292 = vunpack.c.l.b16 %v3223
        %v3293 = vpack.c.b16 %v3262, %v3261
        %v3294 = vpack.c.b16 %v3264, %v3263
        %v3295 = vpack.c.b16 %v3266, %v3265
        %v3296 = vpack.c.b16 %v3268, %v3267
        %v3297 = vpack.c.b16 %v3270, %v3269
        %v3298 = vpack.c.b16 %v3272, %v3271
        %v3299 = vpack.c.b16 %v3274, %v3273
        %v3300 = vpack.c.b16 %v3276, %v3275
        %v3301 = vpack.c.b16 %v3278, %v3277
        %v3302 = vpack.c.b16 %v3280, %v3279
        %v3303 = vpack.c.b16 %v3282, %v3281
        %v3304 = vpack.c.b16 %v3284, %v3283
        %v3305 = vpack.c.b16 %v3286, %v3285
        %v3306 = vpack.c.b16 %v3288, %v3287
        %v3307 = vpack.c.b16 %v3290, %v3289
        %v3308 = vpack.c.b16 %v3292, %v3291
        %3325 = vmatpush.bf16.msra.mxu0 %v3300
        %3326 = vmatpush.bf16.msra.mxu0 %v3299
        %3327 = vmatpush.bf16.msra.mxu0 %v3298
        %3328 = vmatpush.bf16.msra.mxu0 %v3297
        %3329 = vmatpush.bf16.msra.mxu0 %v3296
        %3330 = vmatpush.bf16.msra.mxu0 %v3295
        %3331 = vmatpush.bf16.msra.mxu0 %v3294
        %3332 = vmatpush.bf16.msra.mxu0 %v3293
        %3333 = vmatmul.bf16.gmra.mxu0 %v3189
        %v3334 = vpop.f32.mrf.mxu0
        %v3335 = vadd.f32 %v3227, %v3334
        %v3336 = vpop.f32.mrf.mxu0
        %v3337 = vadd.f32 %v3227, %v3336
        %3338 = vdwg.mxu0
        %3339 = vmatpush.bf16.msra.mxu0 %v3308
        %3340 = vmatpush.bf16.msra.mxu0 %v3307
        %3341 = vmatpush.bf16.msra.mxu0 %v3306
        %3342 = vmatpush.bf16.msra.mxu0 %v3305
        %3343 = vmatpush.bf16.msra.mxu0 %v3304
        %3344 = vmatpush.bf16.msra.mxu0 %v3303
        %3345 = vmatpush.bf16.msra.mxu0 %v3302
        %3346 = vmatpush.bf16.msra.mxu0 %v3301
        %3347 = vmatmul.bf16.gmra.mxu0 %v3190
        %v3348 = vpop.f32.mrf.mxu0
        %v3349 = vadd.f32 %v3335, %v3348
        %v3350 = vpop.f32.mrf.mxu0
        %v3351 = vadd.f32 %v3337, %v3350
        %3352 = vdwg.mxu0
        %v3353 = vadd.f32 %v3018, %v3349
        %v3354 = vadd.f32 %v3019, %v3351
        %s3355 = scalar_lea.vmem %s14, 1
        %v3356 = vld [vmem:[%s3355] sm:$0x1]
        %s3357 = scalar_lea.vmem [#allocation7], 1
        %v3358 = vld [vmem:[%s3357] sm:$0x1]
        %3359 = vadd.xlane.f32.xlu0 %v3353
        %v3360 = vpop.xlane.xlu0 %3359
        %3361 = vadd.xlane.f32.xlu0 %v3354
        %v3362 = vpop.xlane.xlu0 %3361
        %v3363 = vmul.f32 %v3360, %v847
        %v3364 = vmul.f32 %v3362, %v847
        %v3365 = vsub.f32 %v3353, %v3363
        %v3366 = vsub.f32 %v3354, %v3364
        %v3367 = vmul.f32 %v3365, %v3365
        %v3368 = vmul.f32 %v3366, %v3366
        %3369 = vadd.xlane.f32.xlu0 %v3367
        %v3370 = vpop.xlane.xlu0 %3369
        %3371 = vadd.xlane.f32.xlu0 %v3368
        %v3372 = vpop.xlane.xlu0 %3371
        %v3373 = vmul.f32 %v3370, %v847
        %v3374 = vmul.f32 %v3372, %v847
        %v3375 = vadd.f32 %v3373, 1e-12
        %v3376 = vadd.f32 %v3374, 1e-12
        %v3377 = vrsqrt.pop %v3375
        %v3378 = vmul.f32 %v3377, %v3375
        %v3379 = vmul.f32 %v3378, %v3377
        %v3380 = vmul.f32 0.5, %v3379
        %v3381 = vsub.f32 1.5, %v3380
        %v3382 = vmul.f32 %v3377, %v3381
        %vm3383 = vweird.f32 %v3375
        %vm3384 = vweird.f32 %v3377
        %vm3385 = vmor %vm3383, %vm3384
        %v3386 = vsel %vm3385, %v3377, %v3382
        %v3387 = vrsqrt.pop %v3376
        %v3388 = vmul.f32 %v3387, %v3376
        %v3389 = vmul.f32 %v3388, %v3387
        %v3390 = vmul.f32 0.5, %v3389
        %v3391 = vsub.f32 1.5, %v3390
        %v3392 = vmul.f32 %v3387, %v3391
        %vm3393 = vweird.f32 %v3376
        %vm3394 = vweird.f32 %v3387
        %vm3395 = vmor %vm3393, %vm3394
        %v3396 = vsel %vm3395, %v3387, %v3392
        %v3397 = vmul.f32 %v3365, %v3386
        %v3398 = vmul.f32 %v3366, %v3396
        %v3400 = vperm.slane %v3356, 0
        %v3402 = vmul.f32 %v3397, %v3400
        %v3403 = vmul.f32 %v3398, %v3400
        %v3405 = vperm.slane %v3358, 0
        %v3407 = vadd.f32 %v3402, %v3405
        %v3408 = vadd.f32 %v3403, %v3405
        %v3409 = vsub.f32 %v3407, %v3408
        %v3410 = vand.u32 2147483647, %v3409
        %v3411 = vpack.c.bf16 %v3407, %v3407
        %v3412 = vpack.c.bf16 %v3408, %v3408
        %v3413 = vpack.c.bf16 %v3410, %v3410
        %v3414 = vld [vmem:[#allocation12] sm:$0xff]
        %v3415 = vld [vmem:[#allocation12 + $0x8] sm:$0xf]
        %v3416 = vld [vmem:[#allocation12 + $0xc] sm:$0xff]
        %v3417 = vld [vmem:[#allocation12 + $0x14] sm:$0xf]
        %v3418 = vld [vmem:[#allocation12 + $0x18] sm:$0xff]
        %v3419 = vld [vmem:[#allocation12 + $0x20] sm:$0xf]
        %v3420 = vld [vmem:[#allocation12 + $0x24] sm:$0xff]
        %v3421 = vld [vmem:[#allocation12 + $0x2c] sm:$0xf]
        %v3422 = vld [vmem:[#allocation12 + $0x30] sm:$0xff]
        %v3423 = vld [vmem:[#allocation12 + $0x38] sm:$0xf]
        %v3424 = vld [vmem:[#allocation12 + $0x3c] sm:$0xff]
        %v3425 = vld [vmem:[#allocation12 + $0x44] sm:$0xf]
        %v3426 = vld [vmem:[#allocation12 + $0x48] sm:$0xff]
        %v3427 = vld [vmem:[#allocation12 + $0x50] sm:$0xf]
        %v3428 = vld [vmem:[#allocation12 + $0x54] sm:$0xff]
        %v3429 = vld [vmem:[#allocation12 + $0x5c] sm:$0xf]
        %v3430 = vld [vmem:[#allocation12 + $0x60] sm:$0xff]
        %v3431 = vld [vmem:[#allocation12 + $0x68] sm:$0xf]
        %v3432 = vld [vmem:[#allocation12 + $0x6c] sm:$0xff]
        %v3433 = vld [vmem:[#allocation12 + $0x74] sm:$0xf]
        %v3434 = vld [vmem:[#allocation12 + $0x78] sm:$0xff]
        %v3435 = vld [vmem:[#allocation12 + $0x80] sm:$0xf]
        %v3436 = vld [vmem:[#allocation12 + $0x84] sm:$0xff]
        %v3437 = vld [vmem:[#allocation12 + $0x8c] sm:$0xf]
        %v3438 = vld [vmem:[#allocation12 + $0x90] sm:$0xff]
        %v3439 = vld [vmem:[#allocation12 + $0x98] sm:$0xf]
        %v3440 = vld [vmem:[#allocation12 + $0x9c] sm:$0xff]
        %v3441 = vld [vmem:[#allocation12 + $0xa4] sm:$0xf]
        %v3442 = vld [vmem:[#allocation12 + $0xa8] sm:$0xff]
        %v3443 = vld [vmem:[#allocation12 + $0xb0] sm:$0xf]
        %v3444 = vld [vmem:[#allocation12 + $0xb4] sm:$0xff]
        %v3445 = vld [vmem:[#allocation12 + $0xbc] sm:$0xf]
        %v3446 = vld [vmem:[#allocation12 + $0xc0] sm:$0xff]
        %v3447 = vld [vmem:[#allocation12 + $0xc8] sm:$0xf]
        %v3448 = vld [vmem:[#allocation12 + $0xcc] sm:$0xff]
        %v3449 = vld [vmem:[#allocation12 + $0xd4] sm:$0xf]
        %v3450 = vld [vmem:[#allocation12 + $0xd8] sm:$0xff]
        %v3451 = vld [vmem:[#allocation12 + $0xe0] sm:$0xf]
        %v3452 = vld [vmem:[#allocation12 + $0xe4] sm:$0xff]
        %v3453 = vld [vmem:[#allocation12 + $0xec] sm:$0xf]
        %v3454 = vld [vmem:[#allocation12 + $0xf0] sm:$0xff]
        %v3455 = vld [vmem:[#allocation12 + $0xf8] sm:$0xf]
        %v3456 = vld [vmem:[#allocation12 + $0xfc] sm:$0xff]
        %v3457 = vld [vmem:[#allocation12 + $0x104] sm:$0xf]
        %v3458 = vld [vmem:[#allocation12 + $0x108] sm:$0xff]
        %v3459 = vld [vmem:[#allocation12 + $0x110] sm:$0xf]
        %v3460 = vld [vmem:[#allocation12 + $0x114] sm:$0xff]
        %v3461 = vld [vmem:[#allocation12 + $0x11c] sm:$0xf]
        %v3462 = vld [vmem:[#allocation12 + $0x120] sm:$0xff]
        %v3463 = vld [vmem:[#allocation12 + $0x128] sm:$0xf]
        %v3464 = vld [vmem:[#allocation12 + $0x12c] sm:$0xff]
        %v3465 = vld [vmem:[#allocation12 + $0x134] sm:$0xf]
        %v3466 = vld [vmem:[#allocation12 + $0x138] sm:$0xff]
        %v3467 = vld [vmem:[#allocation12 + $0x140] sm:$0xf]
        %v3468 = vld [vmem:[#allocation12 + $0x144] sm:$0xff]
        %v3469 = vld [vmem:[#allocation12 + $0x14c] sm:$0xf]
        %v3470 = vld [vmem:[#allocation12 + $0x150] sm:$0xff]
        %v3471 = vld [vmem:[#allocation12 + $0x158] sm:$0xf]
        %v3472 = vld [vmem:[#allocation12 + $0x15c] sm:$0xff]
        %v3473 = vld [vmem:[#allocation12 + $0x164] sm:$0xf]
        %v3474 = vld [vmem:[#allocation12 + $0x168] sm:$0xff]
        %v3475 = vld [vmem:[#allocation12 + $0x170] sm:$0xf]
        %v3476 = vld [vmem:[#allocation12 + $0x174] sm:$0xff]
        %v3477 = vld [vmem:[#allocation12 + $0x17c] sm:$0xf]
        %v3478 = vld [vmem:[#allocation12 + $0x180] sm:$0xff]
        %v3479 = vld [vmem:[#allocation12 + $0x188] sm:$0xf]
        %v3480 = vld [vmem:[#allocation12 + $0x18c] sm:$0xff]
        %v3481 = vld [vmem:[#allocation12 + $0x194] sm:$0xf]
        %v3482 = vld [vmem:[#allocation12 + $0x198] sm:$0xff]
        %v3483 = vld [vmem:[#allocation12 + $0x1a0] sm:$0xf]
        %v3484 = vld [vmem:[#allocation12 + $0x1a4] sm:$0xff]
        %v3485 = vld [vmem:[#allocation12 + $0x1ac] sm:$0xf]
        %v3486 = vld [vmem:[#allocation12 + $0x1b0] sm:$0xff]
        %v3487 = vld [vmem:[#allocation12 + $0x1b8] sm:$0xf]
        %v3488 = vld [vmem:[#allocation12 + $0x1bc] sm:$0xff]
        %v3489 = vld [vmem:[#allocation12 + $0x1c4] sm:$0xf]
        %v3490 = vld [vmem:[#allocation12 + $0x1c8] sm:$0xff]
        %v3491 = vld [vmem:[#allocation12 + $0x1d0] sm:$0xf]
        %v3492 = vld [vmem:[#allocation12 + $0x1d4] sm:$0xff]
        %v3493 = vld [vmem:[#allocation12 + $0x1dc] sm:$0xf]
        %v3494 = vld [vmem:[#allocation12 + $0x1e0] sm:$0xff]
        %v3495 = vld [vmem:[#allocation12 + $0x1e8] sm:$0xf]
        %v3496 = vld [vmem:[#allocation12 + $0x1ec] sm:$0xff]
        %v3497 = vld [vmem:[#allocation12 + $0x1f4] sm:$0xf]
        %v3498 = vld [vmem:[#allocation12 + $0x1f8] sm:$0xff]
        %v3499 = vld [vmem:[#allocation12 + $0x200] sm:$0xf]
        %v3500 = vld [vmem:[#allocation12 + $0x204] sm:$0xff]
        %v3501 = vld [vmem:[#allocation12 + $0x20c] sm:$0xf]
        %v3502 = vld [vmem:[#allocation12 + $0x210] sm:$0xff]
        %v3503 = vld [vmem:[#allocation12 + $0x218] sm:$0xf]
        %v3504 = vld [vmem:[#allocation12 + $0x21c] sm:$0xff]
        %v3505 = vld [vmem:[#allocation12 + $0x224] sm:$0xf]
        %v3506 = vld [vmem:[#allocation12 + $0x228] sm:$0xff]
        %v3507 = vld [vmem:[#allocation12 + $0x230] sm:$0xf]
        %v3508 = vld [vmem:[#allocation12 + $0x234] sm:$0xff]
        %v3509 = vld [vmem:[#allocation12 + $0x23c] sm:$0xf]
        %v3510 = vld [vmem:[%s19] sm:$0x7]
        %v3607 = vunpack.c.l.b16 %v3414
        %v3608 = vunpack.c.h.b16 %v3414
        %v3609 = vunpack.c.l.b16 %v3415
        %v3610 = vunpack.c.l.b16 %v3416
        %v3611 = vunpack.c.h.b16 %v3416
        %v3612 = vunpack.c.l.b16 %v3417
        %v3613 = vunpack.c.l.b16 %v3418
        %v3614 = vunpack.c.h.b16 %v3418
        %v3615 = vunpack.c.l.b16 %v3419
        %v3616 = vunpack.c.l.b16 %v3420
        %v3617 = vunpack.c.h.b16 %v3420
        %v3618 = vunpack.c.l.b16 %v3421
        %v3619 = vunpack.c.l.b16 %v3422
        %v3620 = vunpack.c.h.b16 %v3422
        %v3621 = vunpack.c.l.b16 %v3423
        %v3622 = vunpack.c.l.b16 %v3424
        %v3623 = vunpack.c.h.b16 %v3424
        %v3624 = vunpack.c.l.b16 %v3425
        %v3625 = vunpack.c.l.b16 %v3426
        %v3626 = vunpack.c.h.b16 %v3426
        %v3627 = vunpack.c.l.b16 %v3427
        %v3628 = vunpack.c.l.b16 %v3428
        %v3629 = vunpack.c.h.b16 %v3428
        %v3630 = vunpack.c.l.b16 %v3429
        %v3631 = vunpack.c.l.b16 %v3430
        %v3632 = vunpack.c.h.b16 %v3430
        %v3633 = vunpack.c.l.b16 %v3431
        %v3634 = vunpack.c.l.b16 %v3432
        %v3635 = vunpack.c.h.b16 %v3432
        %v3636 = vunpack.c.l.b16 %v3433
        %v3637 = vunpack.c.l.b16 %v3434
        %v3638 = vunpack.c.h.b16 %v3434
        %v3639 = vunpack.c.l.b16 %v3435
        %v3640 = vunpack.c.l.b16 %v3436
        %v3641 = vunpack.c.h.b16 %v3436
        %v3642 = vunpack.c.l.b16 %v3437
        %v3643 = vunpack.c.l.b16 %v3438
        %v3644 = vunpack.c.h.b16 %v3438
        %v3645 = vunpack.c.l.b16 %v3439
        %v3646 = vunpack.c.l.b16 %v3440
        %v3647 = vunpack.c.h.b16 %v3440
        %v3648 = vunpack.c.l.b16 %v3441
        %v3649 = vunpack.c.l.b16 %v3442
        %v3650 = vunpack.c.h.b16 %v3442
        %v3651 = vunpack.c.l.b16 %v3443
        %v3652 = vunpack.c.l.b16 %v3444
        %v3653 = vunpack.c.h.b16 %v3444
        %v3654 = vunpack.c.l.b16 %v3445
        %v3655 = vunpack.c.l.b16 %v3446
        %v3656 = vunpack.c.h.b16 %v3446
        %v3657 = vunpack.c.l.b16 %v3447
        %v3658 = vunpack.c.l.b16 %v3448
        %v3659 = vunpack.c.h.b16 %v3448
        %v3660 = vunpack.c.l.b16 %v3449
        %v3661 = vunpack.c.l.b16 %v3450
        %v3662 = vunpack.c.h.b16 %v3450
        %v3663 = vunpack.c.l.b16 %v3451
        %v3664 = vunpack.c.l.b16 %v3452
        %v3665 = vunpack.c.h.b16 %v3452
        %v3666 = vunpack.c.l.b16 %v3453
        %v3667 = vunpack.c.l.b16 %v3454
        %v3668 = vunpack.c.h.b16 %v3454
        %v3669 = vunpack.c.l.b16 %v3455
        %v3670 = vunpack.c.l.b16 %v3456
        %v3671 = vunpack.c.h.b16 %v3456
        %v3672 = vunpack.c.l.b16 %v3457
        %v3673 = vunpack.c.l.b16 %v3458
        %v3674 = vunpack.c.h.b16 %v3458
        %v3675 = vunpack.c.l.b16 %v3459
        %v3676 = vunpack.c.l.b16 %v3460
        %v3677 = vunpack.c.h.b16 %v3460
        %v3678 = vunpack.c.l.b16 %v3461
        %v3679 = vunpack.c.l.b16 %v3462
        %v3680 = vunpack.c.h.b16 %v3462
        %v3681 = vunpack.c.l.b16 %v3463
        %v3682 = vunpack.c.l.b16 %v3464
        %v3683 = vunpack.c.h.b16 %v3464
        %v3684 = vunpack.c.l.b16 %v3465
        %v3685 = vunpack.c.l.b16 %v3466
        %v3686 = vunpack.c.h.b16 %v3466
        %v3687 = vunpack.c.l.b16 %v3467
        %v3688 = vunpack.c.l.b16 %v3468
        %v3689 = vunpack.c.h.b16 %v3468
        %v3690 = vunpack.c.l.b16 %v3469
        %v3691 = vunpack.c.l.b16 %v3470
        %v3692 = vunpack.c.h.b16 %v3470
        %v3693 = vunpack.c.l.b16 %v3471
        %v3694 = vunpack.c.l.b16 %v3472
        %v3695 = vunpack.c.h.b16 %v3472
        %v3696 = vunpack.c.l.b16 %v3473
        %v3697 = vunpack.c.l.b16 %v3474
        %v3698 = vunpack.c.h.b16 %v3474
        %v3699 = vunpack.c.l.b16 %v3475
        %v3700 = vunpack.c.l.b16 %v3476
        %v3701 = vunpack.c.h.b16 %v3476
        %v3702 = vunpack.c.l.b16 %v3477
        %v3703 = vunpack.c.l.b16 %v3478
        %v3704 = vunpack.c.h.b16 %v3478
        %v3705 = vunpack.c.l.b16 %v3479
        %v3706 = vunpack.c.l.b16 %v3480
        %v3707 = vunpack.c.h.b16 %v3480
        %v3708 = vunpack.c.l.b16 %v3481
        %v3709 = vunpack.c.l.b16 %v3482
        %v3710 = vunpack.c.h.b16 %v3482
        %v3711 = vunpack.c.l.b16 %v3483
        %v3712 = vunpack.c.l.b16 %v3484
        %v3713 = vunpack.c.h.b16 %v3484
        %v3714 = vunpack.c.l.b16 %v3485
        %v3715 = vunpack.c.l.b16 %v3486
        %v3716 = vunpack.c.h.b16 %v3486
        %v3717 = vunpack.c.l.b16 %v3487
        %v3718 = vunpack.c.l.b16 %v3488
        %v3719 = vunpack.c.h.b16 %v3488
        %v3720 = vunpack.c.l.b16 %v3489
        %v3721 = vunpack.c.l.b16 %v3490
        %v3722 = vunpack.c.h.b16 %v3490
        %v3723 = vunpack.c.l.b16 %v3491
        %v3724 = vunpack.c.l.b16 %v3492
        %v3725 = vunpack.c.h.b16 %v3492
        %v3726 = vunpack.c.l.b16 %v3493
        %v3727 = vunpack.c.l.b16 %v3494
        %v3728 = vunpack.c.h.b16 %v3494
        %v3729 = vunpack.c.l.b16 %v3495
        %v3730 = vunpack.c.l.b16 %v3496
        %v3731 = vunpack.c.h.b16 %v3496
        %v3732 = vunpack.c.l.b16 %v3497
        %v3733 = vunpack.c.l.b16 %v3498
        %v3734 = vunpack.c.h.b16 %v3498
        %v3735 = vunpack.c.l.b16 %v3499
        %v3736 = vunpack.c.l.b16 %v3500
        %v3737 = vunpack.c.h.b16 %v3500
        %v3738 = vunpack.c.l.b16 %v3501
        %v3739 = vunpack.c.l.b16 %v3502
        %v3740 = vunpack.c.h.b16 %v3502
        %v3741 = vunpack.c.l.b16 %v3503
        %v3742 = vunpack.c.l.b16 %v3504
        %v3743 = vunpack.c.h.b16 %v3504
        %v3744 = vunpack.c.l.b16 %v3505
        %v3745 = vunpack.c.l.b16 %v3506
        %v3746 = vunpack.c.h.b16 %v3506
        %v3747 = vunpack.c.l.b16 %v3507
        %v3748 = vunpack.c.l.b16 %v3508
        %v3749 = vunpack.c.h.b16 %v3508
        %v3750 = vunpack.c.l.b16 %v3509
        %v3751 = vpack.c.b16 %v3610, %v3607
        %v3752 = vpack.c.b16 %v3611, %v3608
        %v3753 = vpack.c.b16 %v3612, %v3609
        %v3754 = vpack.c.b16 %v3616, %v3613
        %v3755 = vpack.c.b16 %v3617, %v3614
        %v3756 = vpack.c.b16 %v3618, %v3615
        %v3757 = vpack.c.b16 %v3622, %v3619
        %v3758 = vpack.c.b16 %v3623, %v3620
        %v3759 = vpack.c.b16 %v3624, %v3621
        %v3760 = vpack.c.b16 %v3628, %v3625
        %v3761 = vpack.c.b16 %v3629, %v3626
        %v3762 = vpack.c.b16 %v3630, %v3627
        %v3763 = vpack.c.b16 %v3634, %v3631
        %v3764 = vpack.c.b16 %v3635, %v3632
        %v3765 = vpack.c.b16 %v3636, %v3633
        %v3766 = vpack.c.b16 %v3640, %v3637
        %v3767 = vpack.c.b16 %v3641, %v3638
        %v3768 = vpack.c.b16 %v3642, %v3639
        %v3769 = vpack.c.b16 %v3646, %v3643
        %v3770 = vpack.c.b16 %v3647, %v3644
        %v3771 = vpack.c.b16 %v3648, %v3645
        %v3772 = vpack.c.b16 %v3652, %v3649
        %v3773 = vpack.c.b16 %v3653, %v3650
        %v3774 = vpack.c.b16 %v3654, %v3651
        %v3775 = vpack.c.b16 %v3658, %v3655
        %v3776 = vpack.c.b16 %v3659, %v3656
        %v3777 = vpack.c.b16 %v3660, %v3657
        %v3778 = vpack.c.b16 %v3664, %v3661
        %v3779 = vpack.c.b16 %v3665, %v3662
        %v3780 = vpack.c.b16 %v3666, %v3663
        %v3781 = vpack.c.b16 %v3670, %v3667
        %v3782 = vpack.c.b16 %v3671, %v3668
        %v3783 = vpack.c.b16 %v3672, %v3669
        %v3784 = vpack.c.b16 %v3676, %v3673
        %v3785 = vpack.c.b16 %v3677, %v3674
        %v3786 = vpack.c.b16 %v3678, %v3675
        %v3787 = vpack.c.b16 %v3682, %v3679
        %v3788 = vpack.c.b16 %v3683, %v3680
        %v3789 = vpack.c.b16 %v3684, %v3681
        %v3790 = vpack.c.b16 %v3688, %v3685
        %v3791 = vpack.c.b16 %v3689, %v3686
        %v3792 = vpack.c.b16 %v3690, %v3687
        %v3793 = vpack.c.b16 %v3694, %v3691
        %v3794 = vpack.c.b16 %v3695, %v3692
        %v3795 = vpack.c.b16 %v3696, %v3693
        %v3796 = vpack.c.b16 %v3700, %v3697
        %v3797 = vpack.c.b16 %v3701, %v3698
        %v3798 = vpack.c.b16 %v3702, %v3699
        %v3799 = vpack.c.b16 %v3706, %v3703
        %v3800 = vpack.c.b16 %v3707, %v3704
        %v3801 = vpack.c.b16 %v3708, %v3705
        %v3802 = vpack.c.b16 %v3712, %v3709
        %v3803 = vpack.c.b16 %v3713, %v3710
        %v3804 = vpack.c.b16 %v3714, %v3711
        %v3805 = vpack.c.b16 %v3718, %v3715
        %v3806 = vpack.c.b16 %v3719, %v3716
        %v3807 = vpack.c.b16 %v3720, %v3717
        %v3808 = vpack.c.b16 %v3724, %v3721
        %v3809 = vpack.c.b16 %v3725, %v3722
        %v3810 = vpack.c.b16 %v3726, %v3723
        %v3811 = vpack.c.b16 %v3730, %v3727
        %v3812 = vpack.c.b16 %v3731, %v3728
        %v3813 = vpack.c.b16 %v3732, %v3729
        %v3814 = vpack.c.b16 %v3736, %v3733
        %v3815 = vpack.c.b16 %v3737, %v3734
        %v3816 = vpack.c.b16 %v3738, %v3735
        %v3817 = vpack.c.b16 %v3742, %v3739
        %v3818 = vpack.c.b16 %v3743, %v3740
        %v3819 = vpack.c.b16 %v3744, %v3741
        %v3820 = vpack.c.b16 %v3748, %v3745
        %v3821 = vpack.c.b16 %v3749, %v3746
        %v3822 = vpack.c.b16 %v3750, %v3747
        %v3896 = vperm.slane %v3510, 0
        %v3897 = vperm.slane %v3510, 1
        %v3898 = vperm.slane %v3510, 2
        %3902 = vmatpush.bf16.msra.mxu0 %v3772
        %3903 = vmatpush.bf16.msra.mxu0 %v3769
        %3904 = vmatpush.bf16.msra.mxu0 %v3766
        %3905 = vmatpush.bf16.msra.mxu0 %v3763
        %3906 = vmatpush.bf16.msra.mxu0 %v3760
        %3907 = vmatpush.bf16.msra.mxu0 %v3757
        %3908 = vmatpush.bf16.msra.mxu0 %v3754
        %3909 = vmatpush.bf16.msra.mxu0 %v3751
        %3910 = vmatmul.bf16.gmra.mxu0 %v3411
        %v3911 = vpop.f32.mrf.mxu0
        %v3912 = vadd.f32 %v3896, %v3911
        %v3913 = vpop.f32.mrf.mxu0
        %3914 = vdwg.mxu0
        %3915 = vmatpush.bf16.msra.mxu0 %v3796
        %3916 = vmatpush.bf16.msra.mxu0 %v3793
        %3917 = vmatpush.bf16.msra.mxu0 %v3790
        %3918 = vmatpush.bf16.msra.mxu0 %v3787
        %3919 = vmatpush.bf16.msra.mxu0 %v3784
        %3920 = vmatpush.bf16.msra.mxu0 %v3781
        %3921 = vmatpush.bf16.msra.mxu0 %v3778
        %3922 = vmatpush.bf16.msra.mxu0 %v3775
        %3923 = vmatmul.bf16.gmra.mxu0 %v3412
        %v3924 = vpop.f32.mrf.mxu0
        %v3925 = vadd.f32 %v3912, %v3924
        %v3926 = vpop.f32.mrf.mxu0
        %3927 = vdwg.mxu0
        %3928 = vmatpush.bf16.msra.mxu0 %v3820
        %3929 = vmatpush.bf16.msra.mxu0 %v3817
        %3930 = vmatpush.bf16.msra.mxu0 %v3814
        %3931 = vmatpush.bf16.msra.mxu0 %v3811
        %3932 = vmatpush.bf16.msra.mxu0 %v3808
        %3933 = vmatpush.bf16.msra.mxu0 %v3805
        %3934 = vmatpush.bf16.msra.mxu0 %v3802
        %3935 = vmatpush.bf16.msra.mxu0 %v3799
        %3936 = vmatmul.bf16.gmra.mxu0 %v3413
        %v3937 = vpop.f32.mrf.mxu0
        %v3938 = vadd.f32 %v3925, %v3937
        %v3939 = vpop.f32.mrf.mxu0
        %3940 = vdwg.mxu0
        %3941 = vmatpush.bf16.msra.mxu0 %v3773
        %3942 = vmatpush.bf16.msra.mxu0 %v3770
        %3943 = vmatpush.bf16.msra.mxu0 %v3767
        %3944 = vmatpush.bf16.msra.mxu0 %v3764
        %3945 = vmatpush.bf16.msra.mxu0 %v3761
        %3946 = vmatpush.bf16.msra.mxu0 %v3758
        %3947 = vmatpush.bf16.msra.mxu0 %v3755
        %3948 = vmatpush.bf16.msra.mxu0 %v3752
        %3949 = vmatmul.bf16.gmra.mxu0 %v3411
        %v3950 = vpop.f32.mrf.mxu0
        %v3951 = vadd.f32 %v3897, %v3950
        %v3952 = vpop.f32.mrf.mxu0
        %3953 = vdwg.mxu0
        %3954 = vmatpush.bf16.msra.mxu0 %v3797
        %3955 = vmatpush.bf16.msra.mxu0 %v3794
        %3956 = vmatpush.bf16.msra.mxu0 %v3791
        %3957 = vmatpush.bf16.msra.mxu0 %v3788
        %3958 = vmatpush.bf16.msra.mxu0 %v3785
        %3959 = vmatpush.bf16.msra.mxu0 %v3782
        %3960 = vmatpush.bf16.msra.mxu0 %v3779
        %3961 = vmatpush.bf16.msra.mxu0 %v3776
        %3962 = vmatmul.bf16.gmra.mxu0 %v3412
        %v3963 = vpop.f32.mrf.mxu0
        %v3964 = vadd.f32 %v3951, %v3963
        %v3965 = vpop.f32.mrf.mxu0
        %3966 = vdwg.mxu0
        %3967 = vmatpush.bf16.msra.mxu0 %v3821
        %3968 = vmatpush.bf16.msra.mxu0 %v3818
        %3969 = vmatpush.bf16.msra.mxu0 %v3815
        %3970 = vmatpush.bf16.msra.mxu0 %v3812
        %3971 = vmatpush.bf16.msra.mxu0 %v3809
        %3972 = vmatpush.bf16.msra.mxu0 %v3806
        %3973 = vmatpush.bf16.msra.mxu0 %v3803
        %3974 = vmatpush.bf16.msra.mxu0 %v3800
        %3975 = vmatmul.bf16.gmra.mxu0 %v3413
        %v3976 = vpop.f32.mrf.mxu0
        %v3977 = vadd.f32 %v3964, %v3976
        %v3978 = vpop.f32.mrf.mxu0
        %3979 = vdwg.mxu0
        %3980 = vmatpush.bf16.msra.mxu0 %v3774
        %3981 = vmatpush.bf16.msra.mxu0 %v3771
        %3982 = vmatpush.bf16.msra.mxu0 %v3768
        %3983 = vmatpush.bf16.msra.mxu0 %v3765
        %3984 = vmatpush.bf16.msra.mxu0 %v3762
        %3985 = vmatpush.bf16.msra.mxu0 %v3759
        %3986 = vmatpush.bf16.msra.mxu0 %v3756
        %3987 = vmatpush.bf16.msra.mxu0 %v3753
        %3988 = vmatmul.bf16.gmra.mxu0 %v3411
        %v3989 = vpop.f32.mrf.mxu0
        %v3990 = vadd.f32 %v3898, %v3989
        %v3991 = vpop.f32.mrf.mxu0
        %3992 = vdwg.mxu0
        %3993 = vmatpush.bf16.msra.mxu0 %v3798
        %3994 = vmatpush.bf16.msra.mxu0 %v3795
        %3995 = vmatpush.bf16.msra.mxu0 %v3792
        %3996 = vmatpush.bf16.msra.mxu0 %v3789
        %3997 = vmatpush.bf16.msra.mxu0 %v3786
        %3998 = vmatpush.bf16.msra.mxu0 %v3783
        %3999 = vmatpush.bf16.msra.mxu0 %v3780
        %4000 = vmatpush.bf16.msra.mxu0 %v3777
        %4001 = vmatmul.bf16.gmra.mxu0 %v3412
        %v4002 = vpop.f32.mrf.mxu0
        %v4003 = vadd.f32 %v3990, %v4002
        %v4004 = vpop.f32.mrf.mxu0
        %4005 = vdwg.mxu0
        %4006 = vmatpush.bf16.msra.mxu0 %v3822
        %4007 = vmatpush.bf16.msra.mxu0 %v3819
        %4008 = vmatpush.bf16.msra.mxu0 %v3816
        %4009 = vmatpush.bf16.msra.mxu0 %v3813
        %4010 = vmatpush.bf16.msra.mxu0 %v3810
        %4011 = vmatpush.bf16.msra.mxu0 %v3807
        %4012 = vmatpush.bf16.msra.mxu0 %v3804
        %4013 = vmatpush.bf16.msra.mxu0 %v3801
        %4014 = vmatmul.bf16.gmra.mxu0 %v3413
        %v4015 = vpop.f32.mrf.mxu0
        %v4016 = vadd.f32 %v4003, %v4015
        %v4017 = vpop.f32.mrf.mxu0
        %4018 = vdwg.mxu0
        %v4019 = vtanh.pop %v3938
        %v4020 = vtanh.pop %v3977
        %v4021 = vtanh.pop %v4016
        %v4022 = vpack.c.bf16 %v4019, %v4019
        %v4023 = vpack.c.bf16 %v4020, %v4020
        %v4024 = vpack.c.bf16 %v4021, %v4021
        %v4025 = vld [vmem:[#allocation13] sm:$0xf]
        %v4026 = vld [vmem:[#allocation13 + $0x4] sm:$0xf]
        %v4027 = vld [vmem:[#allocation13 + $0x8] sm:$0xf]
        %v4028 = vld [vmem:[#allocation13 + $0xc] sm:$0xf]
        %v4029 = vld [vmem:[#allocation13 + $0x10] sm:$0xf]
        %v4030 = vld [vmem:[#allocation13 + $0x14] sm:$0xf]
        %v4031 = vld [vmem:[#allocation13 + $0x18] sm:$0xf]
        %v4032 = vld [vmem:[#allocation13 + $0x1c] sm:$0xf]
        %v4033 = vld [vmem:[#allocation13 + $0x20] sm:$0xf]
        %v4034 = vld [vmem:[#allocation13 + $0x24] sm:$0xf]
        %v4035 = vld [vmem:[#allocation13 + $0x28] sm:$0xf]
        %v4036 = vld [vmem:[#allocation13 + $0x2c] sm:$0xf]
        %v4037 = vld [vmem:[#allocation13 + $0x30] sm:$0xf]
        %v4038 = vld [vmem:[#allocation13 + $0x34] sm:$0xf]
        %v4039 = vld [vmem:[#allocation13 + $0x38] sm:$0xf]
        %v4040 = vld [vmem:[#allocation13 + $0x3c] sm:$0xf]
        %v4041 = vld [vmem:[#allocation13 + $0x40] sm:$0xf]
        %v4042 = vld [vmem:[#allocation13 + $0x44] sm:$0xf]
        %v4043 = vld [vmem:[#allocation13 + $0x48] sm:$0xf]
        %v4044 = vld [vmem:[#allocation13 + $0x4c] sm:$0xf]
        %v4045 = vld [vmem:[#allocation13 + $0x50] sm:$0xf]
        %v4046 = vld [vmem:[#allocation13 + $0x54] sm:$0xf]
        %v4047 = vld [vmem:[#allocation13 + $0x58] sm:$0xf]
        %v4048 = vld [vmem:[#allocation13 + $0x5c] sm:$0xf]
        %v4049 = vld [vmem:[#allocation13 + $0x60] sm:$0xf]
        %v4050 = vld [vmem:[#allocation13 + $0x64] sm:$0xf]
        %v4051 = vld [vmem:[#allocation13 + $0x68] sm:$0xf]
        %v4052 = vld [vmem:[#allocation13 + $0x6c] sm:$0xf]
        %v4053 = vld [vmem:[#allocation13 + $0x70] sm:$0xf]
        %v4054 = vld [vmem:[#allocation13 + $0x74] sm:$0xf]
        %v4055 = vld [vmem:[#allocation13 + $0x78] sm:$0xf]
        %v4056 = vld [vmem:[#allocation13 + $0x7c] sm:$0xf]
        %v4057 = vld [vmem:[#allocation13 + $0x80] sm:$0xf]
        %v4058 = vld [vmem:[#allocation13 + $0x84] sm:$0xf]
        %v4059 = vld [vmem:[#allocation13 + $0x88] sm:$0xf]
        %v4060 = vld [vmem:[#allocation13 + $0x8c] sm:$0xf]
        %v4061 = vld [vmem:[#allocation13 + $0x90] sm:$0xf]
        %v4062 = vld [vmem:[#allocation13 + $0x94] sm:$0xf]
        %v4063 = vld [vmem:[#allocation13 + $0x98] sm:$0xf]
        %v4064 = vld [vmem:[#allocation13 + $0x9c] sm:$0xf]
        %v4065 = vld [vmem:[#allocation13 + $0xa0] sm:$0xf]
        %v4066 = vld [vmem:[#allocation13 + $0xa4] sm:$0xf]
        %v4067 = vld [vmem:[#allocation13 + $0xa8] sm:$0xf]
        %v4068 = vld [vmem:[#allocation13 + $0xac] sm:$0xf]
        %v4069 = vld [vmem:[#allocation13 + $0xb0] sm:$0xf]
        %v4070 = vld [vmem:[#allocation13 + $0xb4] sm:$0xf]
        %v4071 = vld [vmem:[#allocation13 + $0xb8] sm:$0xf]
        %v4072 = vld [vmem:[#allocation13 + $0xbc] sm:$0xf]
        %v4073 = vld [vmem:[%s21] sm:$0x1]
        %v4122 = vunpack.c.l.b16 %v4025
        %v4123 = vunpack.c.l.b16 %v4026
        %v4124 = vunpack.c.l.b16 %v4027
        %v4125 = vunpack.c.l.b16 %v4028
        %v4126 = vunpack.c.l.b16 %v4029
        %v4127 = vunpack.c.l.b16 %v4030
        %v4128 = vunpack.c.l.b16 %v4031
        %v4129 = vunpack.c.l.b16 %v4032
        %v4130 = vunpack.c.l.b16 %v4033
        %v4131 = vunpack.c.l.b16 %v4034
        %v4132 = vunpack.c.l.b16 %v4035
        %v4133 = vunpack.c.l.b16 %v4036
        %v4134 = vunpack.c.l.b16 %v4037
        %v4135 = vunpack.c.l.b16 %v4038
        %v4136 = vunpack.c.l.b16 %v4039
        %v4137 = vunpack.c.l.b16 %v4040
        %v4138 = vunpack.c.l.b16 %v4041
        %v4139 = vunpack.c.l.b16 %v4042
        %v4140 = vunpack.c.l.b16 %v4043
        %v4141 = vunpack.c.l.b16 %v4044
        %v4142 = vunpack.c.l.b16 %v4045
        %v4143 = vunpack.c.l.b16 %v4046
        %v4144 = vunpack.c.l.b16 %v4047
        %v4145 = vunpack.c.l.b16 %v4048
        %v4146 = vunpack.c.l.b16 %v4049
        %v4147 = vunpack.c.l.b16 %v4050
        %v4148 = vunpack.c.l.b16 %v4051
        %v4149 = vunpack.c.l.b16 %v4052
        %v4150 = vunpack.c.l.b16 %v4053
        %v4151 = vunpack.c.l.b16 %v4054
        %v4152 = vunpack.c.l.b16 %v4055
        %v4153 = vunpack.c.l.b16 %v4056
        %v4154 = vunpack.c.l.b16 %v4057
        %v4155 = vunpack.c.l.b16 %v4058
        %v4156 = vunpack.c.l.b16 %v4059
        %v4157 = vunpack.c.l.b16 %v4060
        %v4158 = vunpack.c.l.b16 %v4061
        %v4159 = vunpack.c.l.b16 %v4062
        %v4160 = vunpack.c.l.b16 %v4063
        %v4161 = vunpack.c.l.b16 %v4064
        %v4162 = vunpack.c.l.b16 %v4065
        %v4163 = vunpack.c.l.b16 %v4066
        %v4164 = vunpack.c.l.b16 %v4067
        %v4165 = vunpack.c.l.b16 %v4068
        %v4166 = vunpack.c.l.b16 %v4069
        %v4167 = vunpack.c.l.b16 %v4070
        %v4168 = vunpack.c.l.b16 %v4071
        %v4169 = vunpack.c.l.b16 %v4072
        %v4170 = vpack.c.b16 %v4123, %v4122
        %v4171 = vpack.c.b16 %v4125, %v4124
        %v4172 = vpack.c.b16 %v4127, %v4126
        %v4173 = vpack.c.b16 %v4129, %v4128
        %v4174 = vpack.c.b16 %v4131, %v4130
        %v4175 = vpack.c.b16 %v4133, %v4132
        %v4176 = vpack.c.b16 %v4135, %v4134
        %v4177 = vpack.c.b16 %v4137, %v4136
        %v4178 = vpack.c.b16 %v4139, %v4138
        %v4179 = vpack.c.b16 %v4141, %v4140
        %v4180 = vpack.c.b16 %v4143, %v4142
        %v4181 = vpack.c.b16 %v4145, %v4144
        %v4182 = vpack.c.b16 %v4147, %v4146
        %v4183 = vpack.c.b16 %v4149, %v4148
        %v4184 = vpack.c.b16 %v4151, %v4150
        %v4185 = vpack.c.b16 %v4153, %v4152
        %v4186 = vpack.c.b16 %v4155, %v4154
        %v4187 = vpack.c.b16 %v4157, %v4156
        %v4188 = vpack.c.b16 %v4159, %v4158
        %v4189 = vpack.c.b16 %v4161, %v4160
        %v4190 = vpack.c.b16 %v4163, %v4162
        %v4191 = vpack.c.b16 %v4165, %v4164
        %v4192 = vpack.c.b16 %v4167, %v4166
        %v4193 = vpack.c.b16 %v4169, %v4168
        %4218 = vmatpush.bf16.msra.mxu0 %v4177
        %4219 = vmatpush.bf16.msra.mxu0 %v4176
        %4220 = vmatpush.bf16.msra.mxu0 %v4175
        %4221 = vmatpush.bf16.msra.mxu0 %v4174
        %4222 = vmatpush.bf16.msra.mxu0 %v4173
        %4223 = vmatpush.bf16.msra.mxu0 %v4172
        %4224 = vmatpush.bf16.msra.mxu0 %v4171
        %4225 = vmatpush.bf16.msra.mxu0 %v4170
        %4226 = vmatmul.bf16.gmra.mxu0 %v4022
        %v4227 = vpop.f32.mrf.mxu0
        %v4228 = vadd.f32 %v4073, %v4227
        %v4229 = vpop.f32.mrf.mxu0
        %4230 = vdwg.mxu0
        %4231 = vmatpush.bf16.msra.mxu0 %v4185
        %4232 = vmatpush.bf16.msra.mxu0 %v4184
        %4233 = vmatpush.bf16.msra.mxu0 %v4183
        %4234 = vmatpush.bf16.msra.mxu0 %v4182
        %4235 = vmatpush.bf16.msra.mxu0 %v4181
        %4236 = vmatpush.bf16.msra.mxu0 %v4180
        %4237 = vmatpush.bf16.msra.mxu0 %v4179
        %4238 = vmatpush.bf16.msra.mxu0 %v4178
        %4239 = vmatmul.bf16.gmra.mxu0 %v4023
        %v4240 = vpop.f32.mrf.mxu0
        %v4241 = vadd.f32 %v4228, %v4240
        %v4242 = vpop.f32.mrf.mxu0
        %4243 = vdwg.mxu0
        %4244 = vmatpush.bf16.msra.mxu0 %v4193
        %4245 = vmatpush.bf16.msra.mxu0 %v4192
        %4246 = vmatpush.bf16.msra.mxu0 %v4191
        %4247 = vmatpush.bf16.msra.mxu0 %v4190
        %4248 = vmatpush.bf16.msra.mxu0 %v4189
        %4249 = vmatpush.bf16.msra.mxu0 %v4188
        %4250 = vmatpush.bf16.msra.mxu0 %v4187
        %4251 = vmatpush.bf16.msra.mxu0 %v4186
        %4252 = vmatmul.bf16.gmra.mxu0 %v4024
        %v4253 = vpop.f32.mrf.mxu0
        %v4254 = vadd.f32 %v4241, %v4253
        %v4255 = vpop.f32.mrf.mxu0
        %4256 = vdwg.mxu0
        %4257 = vst [vmem:[%s831] sm:$0x1] %v4254
        %p4258 = scmp.lt.s32.totalorder %s38, 1
        %s4259 = scalar_select %p4258, %s38, 1
        %s4260 = scalar_lea.vmem %s22, %s4259
        // Predicated region
        $region141: #{cl_for_classification_forward.1} parent=107 // pred_check
          %p4261 = pneg %p528
        $region142: #{cl_for_classification_forward.1} parent=107 // pred_check_branch
          %4263 = sbr.rel (%p4261) target = $region144
        $region143: #{cl_for_classification_forward.1} parent=107 // pred_region
          _
        $region144: #{cl_for_classification_forward.1} parent=107 // pred_fallthru
          _
      $region108: #{cl_for_classification_forward.1} parent=5 // pred_fallthru
        _
      %p4264 = scmp.le.s32.totalorder 2, %s33
      // Predicated region
      $region145: #{cl_for_classification_forward.1} parent=5 // pred_check
        %p4265 = pneg %p4264
      $region146: #{cl_for_classification_forward.1} parent=5 // pred_check_branch
        %4267 = sbr.rel (%p4265) target = $region148
      $region147: #{cl_for_classification_forward.1} parent=5 // pred_region
        %s4268 = ssub.s32 %s33, 2
        // Predicated region
        $region149: #{cl_for_classification_forward.1} parent=147 // pred_check
          %p4269 = pneg %p534
        $region150: #{cl_for_classification_forward.1} parent=147 // pred_check_branch
          %4271 = sbr.rel (%p4269) target = $region152
        $region151: #{cl_for_classification_forward.1} parent=147 // pred_region
          %p4272 = scmp.lt.s32.totalorder %s39, 1
          %s4273 = scalar_select %p4272, %s39, 1
          %s4274 = scalar_lea.vmem %s22, %s4273
        $region152: #{cl_for_classification_forward.1} parent=147 // pred_fallthru
          _
      $region148: #{cl_for_classification_forward.1} parent=5 // pred_fallthru
        _
    $region6: #{cl_for_classification_forward.1} parent=1 // loop_footer
      %s37 = sadd.s32 1, %s33
    $region7: #{cl_for_classification_forward.1} parent=1 // loop_footer_branch
      %32 = sbr.rel target = $region3
    $region8: #{cl_for_classification_forward.1} parent=1 // loop_exit
      _
    %4275 = vsyncpa [#allocation3], 1
    %s4276 = scalar_lea.sflag [#allocation3], 1
    %4277 = vsyncpa %s4276, 1
    %4278 = vsyncpa [#allocation5], 1
    %4279 = vsyncpa [#allocation8], 1
    %4280 = vsyncpa [#allocation11], 1
    %4281 = vsyncpa [#allocation14], 1

</llo_original>
